<compile_context>
chip_gen: v7x
topology: tpu7x:2x2x1
jax: 0.10.0
libtpu: 0.0.40
codegen_flags: <defaults>
</compile_context>

<pallas_src>
import functools
import numpy as np

import jax
import jax.numpy as jnp
from jax.experimental import pallas as pl
from jax.experimental.pallas import tpu as pltpu


# ----------------------------- Pallas kernels ------------------------------

def _fused_matmul_kernel(*refs, activation, epilogue, eps):
    """Tiled matmul with optional fused epilogues.

    Grid = (M//tm, K//tk); N is a single full-extent block.
    epilogue in {"none", "add_ln", "softmax"}.
    """
    if epilogue == "add_ln":
        x_ref, w_ref, b_ref, res_ref, g_ref, beta_ref, o_ref, acc_ref = refs
    else:
        x_ref, w_ref, b_ref, o_ref, acc_ref = refs

    k = pl.program_id(1)
    nk = pl.num_programs(1)

    @pl.when(k == 0)
    def _():
        acc_ref[...] = jnp.zeros_like(acc_ref)

    # TODO(synk): on v6e/v7x, casting operands to bf16 here (keeping f32 accumulation)
    # would double MXU rate; kept f32 for exact fidelity to the PyTorch module.
    acc_ref[...] += jnp.dot(x_ref[...], w_ref[...],
                            preferred_element_type=jnp.float32)

    @pl.when(k == nk - 1)
    def _():
        y = acc_ref[...] + b_ref[...].astype(jnp.float32)
        if activation == "relu":
            y = jnp.maximum(y, 0.0)
        if epilogue == "add_ln":
            y = y + res_ref[...].astype(jnp.float32)
            mean = jnp.mean(y, axis=-1, keepdims=True)
            var = jnp.mean((y - mean) ** 2, axis=-1, keepdims=True)
            y = (y - mean) * jax.lax.rsqrt(var + eps)
            y = y * g_ref[...].astype(jnp.float32) + beta_ref[...].astype(jnp.float32)
        elif epilogue == "softmax":
            m = jnp.max(y, axis=-1, keepdims=True)
            e = jnp.exp(y - m)
            # exact divide here so output rows sum to 1 within tight tolerance
            y = e / jnp.sum(e, axis=-1, keepdims=True)
        o_ref[...] = y.astype(o_ref.dtype)


def fused_matmul(x, w, b, *, activation=None, residual=None, ln_params=None,
                 softmax=False, eps=1e-12):
    """y = act(x @ w + b); optionally LayerNorm(y + residual) or row softmax(y).

    x: (M, K), w: (K, N), b: (N,) -> (M, N).
    """
    M, K = x.shape
    N = w.shape[1]

    tm = M if M <= 256 else 256
    tk = K if K <= 512 else 512
    assert M % tm == 0 and K % tk == 0, "M/K must divide the chosen tile sizes"

    if ln_params is not None:
        epilogue = "add_ln"
    elif softmax:
        epilogue = "softmax"
    else:
        epilogue = "none"

    inputs = [x, w, b.reshape(1, N)]
    in_specs = [
        pl.BlockSpec((tm, tk), lambda i, kk: (i, kk)),
        pl.BlockSpec((tk, N), lambda i, kk: (kk, 0)),
        pl.BlockSpec((1, N), lambda i, kk: (0, 0)),
    ]
    if epilogue == "add_ln":
        gamma, beta = ln_params
        inputs += [residual, gamma.reshape(1, N), beta.reshape(1, N)]
        in_specs += [
            pl.BlockSpec((tm, N), lambda i, kk: (i, 0)),
            pl.BlockSpec((1, N), lambda i, kk: (0, 0)),
            pl.BlockSpec((1, N), lambda i, kk: (0, 0)),
        ]

    kern = functools.partial(_fused_matmul_kernel, activation=activation,
                             epilogue=epilogue, eps=eps)
    cost = pl.CostEstimate(
        flops=2 * M * N * K,
        transcendentals=(M * N if epilogue == "softmax" else 0),
        bytes_accessed=4 * (M * K + K * N + 2 * M * N),
    )
    return pl.pallas_call(
        kern,
        out_shape=jax.ShapeDtypeStruct((M, N), x.dtype),
        grid=(M // tm, K // tk),
        in_specs=in_specs,
        out_specs=pl.BlockSpec((tm, N), lambda i, kk: (i, 0)),
        scratch_shapes=[pltpu.VMEM((tm, N), jnp.float32)],
        compiler_params=pltpu.CompilerParams(
            dimension_semantics=("parallel", "arbitrary")),
        cost_estimate=cost,
    )(*inputs)


def _mha_kernel(q_ref, kv_ref, o_ref, *, n_head, causal, scale):
    """All heads of one batch element in a single block.

    q_ref:  (1, Sq, D)
    kv_ref: (1, Sk, 2D)   (K in columns [0, D), V in columns [D, 2D))
    o_ref:  (1, Sq, D)
    """
    q = q_ref[0]            # (Sq, D)
    kv = kv_ref[0]          # (Sk, 2D)
    Sq, D = q.shape
    Sk = kv.shape[0]
    dh = D // n_head

    mask = None
    if causal:
        qi = jax.lax.broadcasted_iota(jnp.int32, (Sq, Sk), 0)
        ki = jax.lax.broadcasted_iota(jnp.int32, (Sq, Sk), 1)
        mask = ki <= qi

    outs = []
    for h in range(n_head):          # static unrolled loop over heads
        lo, hi = h * dh, (h + 1) * dh
        qh = q[:, lo:hi]                    # (Sq, dh)
        kh = kv[:, lo:hi]                   # (Sk, dh)
        vh = kv[:, D + lo:D + hi]           # (Sk, dh)
        # QK^T without materializing a transpose: contract on dh of both operands.
        s = jax.lax.dot_general(qh, kh, (((1,), (1,)), ((), ())),
                                preferred_element_type=jnp.float32) * scale
        if causal:
            s = jnp.where(mask, s, jnp.float32(-1e30))
        m = jnp.max(s, axis=-1, keepdims=True)
        p = jnp.exp(s - m)
        p = p * pl.reciprocal(jnp.sum(p, axis=-1, keepdims=True), approx=True)
        oh = jnp.dot(p, vh, preferred_element_type=jnp.float32)
        outs.append(oh.astype(o_ref.dtype))
    # single lane-dense [Sq, D] store (avoids per-head masked partial stores)
    o_ref[0] = jnp.concatenate(outs, axis=-1)


def mha_attention(q, kv, n_head, causal=False):
    """q: (B, Sq, D), kv: (B, Sk, 2D) packed [K|V] -> (B, Sq, D)."""
    B, Sq, D = q.shape
    Sk = kv.shape[1]
    scale = 1.0 / float(np.sqrt(D // n_head))
    kern = functools.partial(_mha_kernel, n_head=n_head, causal=causal, scale=scale)
    cost = pl.CostEstimate(
        flops=4 * B * Sq * Sk * D,
        transcendentals=B * n_head * Sq * Sk,
        bytes_accessed=4 * (B * Sq * D + B * Sk * 2 * D + B * Sq * D),
    )
    return pl.pallas_call(
        kern,
        out_shape=jax.ShapeDtypeStruct((B, Sq, D), q.dtype),
        grid=(B,),
        in_specs=[
            pl.BlockSpec((1, Sq, D), lambda b: (b, 0, 0)),
            pl.BlockSpec((1, Sk, 2 * D), lambda b: (b, 0, 0)),
        ],
        out_specs=pl.BlockSpec((1, Sq, D), lambda b: (b, 0, 0)),
        compiler_params=pltpu.CompilerParams(dimension_semantics=("parallel",)),
        cost_estimate=cost,
    )(q, kv)


# ----------------------------- model glue (JAX) -----------------------------

def sinusoidal_pos_encoding(max_len, d_model):
    pos = np.arange(max_len)[:, None].astype(np.float32)
    i = np.arange(0, d_model, 2).astype(np.float32)
    angle = pos / np.power(10000.0, i / d_model)
    pe = np.zeros((max_len, d_model), dtype=np.float32)
    pe[:, 0::2] = np.sin(angle)
    pe[:, 1::2] = np.cos(angle)
    return jnp.asarray(pe)


def embed(ids, tok_table, pos_enc):
    # TODO(synk): embedding gather stays in plain JAX (glue), dropout is identity.
    S = ids.shape[1]
    return jnp.take(tok_table, ids, axis=0) + pos_enc[:S][None, :, :]


def encoder_layer(x, p, n_head):
    B, S, D = x.shape
    M = B * S
    x2d = x.reshape(M, D)
    # self-attention: packed QKV projection (one matmul), all heads in one attn kernel
    qkv = fused_matmul(x2d, p["attn"]["w_qkv"], p["attn"]["b_qkv"]).reshape(B, S, 3 * D)
    ctx = mha_attention(qkv[:, :, :D], qkv[:, :, D:], n_head, causal=False)
    # output projection fused with residual-add + LayerNorm
    x1 = fused_matmul(ctx.reshape(M, D), p["attn"]["wo"], p["attn"]["bo"],
                      residual=x2d, ln_params=(p["ln1_g"], p["ln1_b"]))
    # FFN: linear+ReLU, then linear fused with residual-add + LayerNorm
    h = fused_matmul(x1, p["ffn"]["w1"], p["ffn"]["b1"], activation="relu")
    x2 = fused_matmul(h, p["ffn"]["w2"], p["ffn"]["b2"],
                      residual=x1, ln_params=(p["ln2_g"], p["ln2_b"]))
    return x2.reshape(B, S, D)


def decoder_layer(x, enc, p, n_head):
    B, S, D = x.shape
    M = B * S
    Sk = enc.shape[1]
    x2d = x.reshape(M, D)
    # masked self-attention
    qkv = fused_matmul(x2d, p["self_attn"]["w_qkv"], p["self_attn"]["b_qkv"]).reshape(B, S, 3 * D)
    ctx = mha_attention(qkv[:, :, :D], qkv[:, :, D:], n_head, causal=True)
    x1 = fused_matmul(ctx.reshape(M, D), p["self_attn"]["wo"], p["self_attn"]["bo"],
                      residual=x2d, ln_params=(p["ln1_g"], p["ln1_b"]))
    # cross-attention: q from decoder, packed KV from encoder output
    q = fused_matmul(x1, p["cross_attn"]["wq"], p["cross_attn"]["bq"]).reshape(B, S, D)
    kv = fused_matmul(enc.reshape(B * Sk, D), p["cross_attn"]["w_kv"],
                      p["cross_attn"]["b_kv"]).reshape(B, Sk, 2 * D)
    cctx = mha_attention(q, kv, n_head, causal=False)
    x2 = fused_matmul(cctx.reshape(M, D), p["cross_attn"]["wo"], p["cross_attn"]["bo"],
                      residual=x1, ln_params=(p["ln2_g"], p["ln2_b"]))
    # FFN
    h = fused_matmul(x2, p["ffn"]["w1"], p["ffn"]["b1"], activation="relu")
    x3 = fused_matmul(h, p["ffn"]["w2"], p["ffn"]["b2"],
                      residual=x2, ln_params=(p["ln3_g"], p["ln3_b"]))
    return x3.reshape(B, S, D)


def transformer_forward(params, src, target, n_head):
    pos_enc = params["pos_enc"]
    # encoder
    x = embed(src, params["enc_tok_emb"], pos_enc)
    for lp in params["enc_layers"]:
        x = encoder_layer(x, lp, n_head)
    enc_out = x
    # decoder
    y = embed(target, params["dec_tok_emb"], pos_enc)
    for lp in params["dec_layers"]:
        y = decoder_layer(y, enc_out, lp, n_head)
    # output head: Linear -> Softmax(dim=-1), fused in one kernel
    # TODO(synk): for production-size vocabularies, tile the vocab axis and use an
    #             online softmax instead of a full-N block.
    B, St, D = y.shape
    probs = fused_matmul(y.reshape(B * St, D), params["out_w"], params["out_b"],
                         softmax=True)
    return probs.reshape(B, St, -1)


# ----------------------------- parameter init -------------------------------

def init_params(key, *, max_len, enc_voc, dec_voc, d_model, ffn_hidden, n_layers):
    keys = iter(jax.random.split(key, 512))

    def dense(k_in, k_out):
        return 0.02 * jax.random.normal(next(keys), (k_in, k_out), jnp.float32)

    def self_attn_params():
        return {
            "w_qkv": dense(d_model, 3 * d_model),
            "b_qkv": jnp.zeros((3 * d_model,), jnp.float32),
            "wo": dense(d_model, d_model), "bo": jnp.zeros((d_model,), jnp.float32),
        }

    def cross_attn_params():
        return {
            "wq": dense(d_model, d_model), "bq": jnp.zeros((d_model,), jnp.float32),
            "w_kv": dense(d_model, 2 * d_model),
            "b_kv": jnp.zeros((2 * d_model,), jnp.float32),
            "wo": dense(d_model, d_model), "bo": jnp.zeros((d_model,), jnp.float32),
        }

    def ffn_params():
        return {
            "w1": dense(d_model, ffn_hidden), "b1": jnp.zeros((ffn_hidden,), jnp.float32),
            "w2": dense(ffn_hidden, d_model), "b2": jnp.zeros((d_model,), jnp.float32),
        }

    def ln():
        return jnp.ones((d_model,), jnp.float32), jnp.zeros((d_model,), jnp.float32)

    enc_layers, dec_layers = [], []
    for _ in range(n_layers):
        g1, b1 = ln(); g2, b2 = ln()
        enc_layers.append({"attn": self_attn_params(), "ln1_g": g1, "ln1_b": b1,
                           "ffn": ffn_params(), "ln2_g": g2, "ln2_b": b2})
    for _ in range(n_layers):
        g1, b1 = ln(); g2, b2 = ln(); g3, b3 = ln()
        dec_layers.append({"self_attn": self_attn_params(), "ln1_g": g1, "ln1_b": b1,
                           "cross_attn": cross_attn_params(), "ln2_g": g2, "ln2_b": b2,
                           "ffn": ffn_params(), "ln3_g": g3, "ln3_b": b3})

    return {
        "enc_tok_emb": 0.02 * jax.random.normal(next(keys), (enc_voc, d_model), jnp.float32),
        "dec_tok_emb": 0.02 * jax.random.normal(next(keys), (dec_voc, d_model), jnp.float32),
        "pos_enc": sinusoidal_pos_encoding(max_len, d_model),
        "enc_layers": enc_layers,
        "dec_layers": dec_layers,
        "out_w": dense(d_model, dec_voc),
        "out_b": jnp.zeros((dec_voc,), jnp.float32),
    }


# --------------------------------- main --------------------------------------

if __name__ == "__main__":
    # Small, lane-friendly config (all kernel last dims multiples of 128).
    BATCH, SEQ = 2, 16
    D_MODEL, N_HEAD, FFN_HIDDEN, N_LAYERS = 128, 4, 256, 2
    MAX_LEN, ENC_VOC, DEC_VOC = 64, 256, 256

    key = jax.random.PRNGKey(0)
    k_param, k_src, k_tgt = jax.random.split(key, 3)

    params = init_params(k_param, max_len=MAX_LEN, enc_voc=ENC_VOC, dec_voc=DEC_VOC,
                         d_model=D_MODEL, ffn_hidden=FFN_HIDDEN, n_layers=N_LAYERS)

    src = jax.random.randint(k_src, (BATCH, SEQ), 0, ENC_VOC, dtype=jnp.int32)
    target = jax.random.randint(k_tgt, (BATCH, SEQ), 0, DEC_VOC, dtype=jnp.int32)

    fwd = jax.jit(functools.partial(transformer_forward, n_head=N_HEAD))
    out = fwd(params, src, target)
    out = jax.block_until_ready(out)

    assert out.shape == (BATCH, SEQ, DEC_VOC)
    # rows of the softmax output must sum to 1
    assert bool(jnp.allclose(jnp.sum(out, axis=-1), 1.0, atol=1e-4))
    print("KERNEL_OK")
</pallas_src>

<mosaic_0001>
module attributes {stable_mosaic.version = 11 : i64} {
  func.func @_fused_matmul_kernel(%arg0: i32, %arg1: i32, %arg2: memref<32x128xf32, #tpu.memory_space<vmem>>, %arg3: memref<128x128xf32, #tpu.memory_space<vmem>>, %arg4: memref<1x128xf32, #tpu.memory_space<vmem>>, %arg5: memref<32x128xf32, #tpu.memory_space<vmem>>, %arg6: memref<32x128xf32, #tpu.memory_space<vmem>>) attributes {dimension_semantics = [#tpu.dimension_semantics<parallel>, #tpu.dimension_semantics<arbitrary>], iteration_bounds = array<i64: 1, 1>, scalar_prefetch = 0 : i64, scratch_operands = 1 : i64, tpu.core_type = #tpu.core_type<tc>, window_params = [{transform_indices = @transform_0, window_bounds = array<i64: 32, 128>}, {transform_indices = @transform_1, window_bounds = array<i64: 128, 128>}, {pipeline_mode = #tpu.pipeline_mode<synchronous>, transform_indices = @transform_2, window_bounds = array<i64: 1, 128>}, {transform_indices = @transform_3, window_bounds = array<i64: 32, 128>}]} {
    %c0_i32 = arith.constant 0 : i32
    %0 = arith.cmpi eq, %arg1, %c0_i32 : i32
    %1 = arith.extui %0 : i1 to i32
    %c0_i32_0 = arith.constant 0 : i32
    %2 = arith.cmpi ne, %1, %c0_i32_0 : i32
    scf.if %2 {
      %cst_10 = arith.constant 0.000000e+00 : f32
      %12 = vector.broadcast %cst_10 : f32 to vector<32x128xf32>
      %c0_11 = arith.constant 0 : index
      %c0_12 = arith.constant 0 : index
      %13 = vector.load %arg6[%c0_11, %c0_12] : memref<32x128xf32, #tpu.memory_space<vmem>>, vector<32x128xf32>
      tpu.vector_store %arg6[%c0_11, %c0_12], %12 {strides = array<i32>} : memref<32x128xf32, #tpu.memory_space<vmem>>, vector<32x128xf32>,
    } else {
    }
    %c0 = arith.constant 0 : index
    %c0_1 = arith.constant 0 : index
    %3 = vector.load %arg6[%c0, %c0_1] : memref<32x128xf32, #tpu.memory_space<vmem>>, vector<32x128xf32>
    %c0_2 = arith.constant 0 : index
    %c0_3 = arith.constant 0 : index
    %4 = vector.load %arg2[%c0_2, %c0_3] : memref<32x128xf32, #tpu.memory_space<vmem>>, vector<32x128xf32>
    %c0_4 = arith.constant 0 : index
    %c0_5 = arith.constant 0 : index
    %5 = vector.load %arg3[%c0_4, %c0_5] : memref<128x128xf32, #tpu.memory_space<vmem>>, vector<128x128xf32>
    %cst = arith.constant dense<0.000000e+00> : vector<32x128xf32>
    %6 = tpu.matmul %4, %5, %cst {dimension_numbers = #tpu.dot_dimension_numbers<[1], [0], [0], [1], [0, 0, 1, 1], [], []>} : vector<32x128xf32>, vector<128x128xf32>, vector<32x128xf32> -> vector<32x128xf32>
    %7 = arith.addf %3, %6 : vector<32x128xf32>
    %c0_6 = arith.constant 0 : index
    %c0_7 = arith.constant 0 : index
    %8 = vector.load %arg6[%c0_6, %c0_7] : memref<32x128xf32, #tpu.memory_space<vmem>>, vector<32x128xf32>
    tpu.vector_store %arg6[%c0_6, %c0_7], %7 {strides = array<i32>} : memref<32x128xf32, #tpu.memory_space<vmem>>, vector<32x128xf32>,
    %c0_i32_8 = arith.constant 0 : i32
    %9 = arith.cmpi eq, %arg1, %c0_i32_8 : i32
    %10 = arith.extui %9 : i1 to i32
    %c0_i32_9 = arith.constant 0 : i32
    %11 = arith.cmpi ne, %10, %c0_i32_9 : i32
    scf.if %11 {
      %c0_10 = arith.constant 0 : index
      %c0_11 = arith.constant 0 : index
      %12 = vector.load %arg6[%c0_10, %c0_11] : memref<32x128xf32, #tpu.memory_space<vmem>>, vector<32x128xf32>
      %c0_12 = arith.constant 0 : index
      %c0_13 = arith.constant 0 : index
      %13 = vector.load %arg4[%c0_12, %c0_13] : memref<1x128xf32, #tpu.memory_space<vmem>>, vector<1x128xf32>
      %14 = vector.broadcast %13 : vector<1x128xf32> to vector<32x128xf32>
      %15 = arith.addf %12, %14 : vector<32x128xf32>
      %c0_14 = arith.constant 0 : index
      %c0_15 = arith.constant 0 : index
      %16 = vector.load %arg5[%c0_14, %c0_15] : memref<32x128xf32, #tpu.memory_space<vmem>>, vector<32x128xf32>
      tpu.vector_store %arg5[%c0_14, %c0_15], %15 {strides = array<i32>} : memref<32x128xf32, #tpu.memory_space<vmem>>, vector<32x128xf32>,
    } else {
    }
    return
  }
  func.func @transform_0(%arg0: i32, %arg1: i32) -> (i32, i32) {
    %c0_i32 = arith.constant 0 : i32
    return %arg0, %arg1 : i32, i32
  }
  func.func @transform_1(%arg0: i32, %arg1: i32) -> (i32, i32) {
    %c0_i32 = arith.constant 0 : i32
    %c0_i32_0 = arith.constant 0 : i32
    return %arg1, %c0_i32 : i32, i32
  }
  func.func @transform_2(%arg0: i32, %arg1: i32) -> (i32, i32) {
    %c0_i32 = arith.constant 0 : i32
    %c0_i32_0 = arith.constant 0 : i32
    %c0_i32_1 = arith.constant 0 : i32
    return %c0_i32, %c0_i32_0 : i32, i32
  }
  func.func @transform_3(%arg0: i32, %arg1: i32) -> (i32, i32) {
    %c0_i32 = arith.constant 0 : i32
    %c0_i32_0 = arith.constant 0 : i32
    return %arg0, %c0_i32 : i32, i32
  }
}

module attributes {stable_mosaic.version = 11 : i64} {
  func.func @_fused_matmul_kernel(%arg0: i32, %arg1: i32, %arg2: memref<32x128xf32, #tpu.memory_space<vmem>>, %arg3: memref<128x128xf32, #tpu.memory_space<vmem>>, %arg4: memref<1x128xf32, #tpu.memory_space<vmem>>, %arg5: memref<32x128xf32, #tpu.memory_space<vmem>>, %arg6: memref<1x128xf32, #tpu.memory_space<vmem>>, %arg7: memref<1x128xf32, #tpu.memory_space<vmem>>, %arg8: memref<32x128xf32, #tpu.memory_space<vmem>>, %arg9: memref<32x128xf32, #tpu.memory_space<vmem>>) attributes {dimension_semantics = [#tpu.dimension_semantics<parallel>, #tpu.dimension_semantics<arbitrary>], iteration_bounds = array<i64: 1, 1>, scalar_prefetch = 0 : i64, scratch_operands = 1 : i64, tpu.core_type = #tpu.core_type<tc>, window_params = [{transform_indices = @transform_0, window_bounds = array<i64: 32, 128>}, {transform_indices = @transform_1, window_bounds = array<i64: 128, 128>}, {pipeline_mode = #tpu.pipeline_mode<synchronous>, transform_indices = @transform_2, window_bounds = array<i64: 1, 128>}, {transform_indices = @transform_3, window_bounds = array<i64: 32, 128>}, {pipeline_mode = #tpu.pipeline_mode<synchronous>, transform_indices = @transform_4, window_bounds = array<i64: 1, 128>}, {pipeline_mode = #tpu.pipeline_mode<synchronous>, transform_indices = @transform_5, window_bounds = array<i64: 1, 128>}, {transform_indices = @transform_6, window_bounds = array<i64: 32, 128>}]} {
    %c0_i32 = arith.constant 0 : i32
    %0 = arith.cmpi eq, %arg1, %c0_i32 : i32
    %1 = arith.extui %0 : i1 to i32
    %c0_i32_0 = arith.constant 0 : i32
    %2 = arith.cmpi ne, %1, %c0_i32_0 : i32
    scf.if %2 {
      %cst_10 = arith.constant 0.000000e+00 : f32
      %12 = vector.broadcast %cst_10 : f32 to vector<32x128xf32>
      %c0_11 = arith.constant 0 : index
      %c0_12 = arith.constant 0 : index
      %13 = vector.load %arg9[%c0_11, %c0_12] : memref<32x128xf32, #tpu.memory_space<vmem>>, vector<32x128xf32>
      tpu.vector_store %arg9[%c0_11, %c0_12], %12 {strides = array<i32>} : memref<32x128xf32, #tpu.memory_space<vmem>>, vector<32x128xf32>,
    } else {
    }
    %c0 = arith.constant 0 : index
    %c0_1 = arith.constant 0 : index
    %3 = vector.load %arg9[%c0, %c0_1] : memref<32x128xf32, #tpu.memory_space<vmem>>, vector<32x128xf32>
    %c0_2 = arith.constant 0 : index
    %c0_3 = arith.constant 0 : index
    %4 = vector.load %arg2[%c0_2, %c0_3] : memref<32x128xf32, #tpu.memory_space<vmem>>, vector<32x128xf32>
    %c0_4 = arith.constant 0 : index
    %c0_5 = arith.constant 0 : index
    %5 = vector.load %arg3[%c0_4, %c0_5] : memref<128x128xf32, #tpu.memory_space<vmem>>, vector<128x128xf32>
    %cst = arith.constant dense<0.000000e+00> : vector<32x128xf32>
    %6 = tpu.matmul %4, %5, %cst {dimension_numbers = #tpu.dot_dimension_numbers<[1], [0], [0], [1], [0, 0, 1, 1], [], []>} : vector<32x128xf32>, vector<128x128xf32>, vector<32x128xf32> -> vector<32x128xf32>
    %7 = arith.addf %3, %6 : vector<32x128xf32>
    %c0_6 = arith.constant 0 : index
    %c0_7 = arith.constant 0 : index
    %8 = vector.load %arg9[%c0_6, %c0_7] : memref<32x128xf32, #tpu.memory_space<vmem>>, vector<32x128xf32>
    tpu.vector_store %arg9[%c0_6, %c0_7], %7 {strides = array<i32>} : memref<32x128xf32, #tpu.memory_space<vmem>>, vector<32x128xf32>,
    %c0_i32_8 = arith.constant 0 : i32
    %9 = arith.cmpi eq, %arg1, %c0_i32_8 : i32
    %10 = arith.extui %9 : i1 to i32
    %c0_i32_9 = arith.constant 0 : i32
    %11 = arith.cmpi ne, %10, %c0_i32_9 : i32
    scf.if %11 {
      %c0_10 = arith.constant 0 : index
      %c0_11 = arith.constant 0 : index
      %12 = vector.load %arg9[%c0_10, %c0_11] : memref<32x128xf32, #tpu.memory_space<vmem>>, vector<32x128xf32>
      %c0_12 = arith.constant 0 : index
      %c0_13 = arith.constant 0 : index
      %13 = vector.load %arg4[%c0_12, %c0_13] : memref<1x128xf32, #tpu.memory_space<vmem>>, vector<1x128xf32>
      %14 = vector.broadcast %13 : vector<1x128xf32> to vector<32x128xf32>
      %15 = arith.addf %12, %14 : vector<32x128xf32>
      %c0_14 = arith.constant 0 : index
      %c0_15 = arith.constant 0 : index
      %16 = vector.load %arg5[%c0_14, %c0_15] : memref<32x128xf32, #tpu.memory_space<vmem>>, vector<32x128xf32>
      %17 = arith.addf %15, %16 : vector<32x128xf32>
      %cst_16 = arith.constant dense<0.000000e+00> : vector<32xf32>
      %18 = vector.multi_reduction <add>, %17, %cst_16 [1] : vector<32x128xf32> to vector<32xf32>
      %19 = vector.shape_cast %18 : vector<32xf32> to vector<32x1xf32>
      %cst_17 = arith.constant 1.280000e+02 : f32
      %20 = vector.broadcast %cst_17 : f32 to vector<32x1xf32>
      %21 = arith.divf %19, %20 : vector<32x1xf32>
      %22 = vector.broadcast %21 : vector<32x1xf32> to vector<32x128xf32>
      %23 = arith.subf %17, %22 : vector<32x128xf32>
      %24 = arith.mulf %23, %23 : vector<32x128xf32>
      %cst_18 = arith.constant dense<0.000000e+00> : vector<32xf32>
      %25 = vector.multi_reduction <add>, %24, %cst_18 [1] : vector<32x128xf32> to vector<32xf32>
      %26 = vector.shape_cast %25 : vector<32xf32> to vector<32x1xf32>
      %cst_19 = arith.constant 1.280000e+02 : f32
      %27 = vector.broadcast %cst_19 : f32 to vector<32x1xf32>
      %28 = arith.divf %26, %27 : vector<32x1xf32>
      %29 = vector.broadcast %21 : vector<32x1xf32> to vector<32x128xf32>
      %30 = arith.subf %17, %29 : vector<32x128xf32>
      %cst_20 = arith.constant 9.99999996E-13 : f32
      %31 = vector.broadcast %cst_20 : f32 to vector<32x1xf32>
      %32 = arith.addf %28, %31 : vector<32x1xf32>
      %33 = math.rsqrt %32 : vector<32x1xf32>
      %34 = vector.broadcast %33 : vector<32x1xf32> to vector<32x128xf32>
      %35 = arith.mulf %30, %34 : vector<32x128xf32>
      %c0_21 = arith.constant 0 : index
      %c0_22 = arith.constant 0 : index
      %36 = vector.load %arg6[%c0_21, %c0_22] : memref<1x128xf32, #tpu.memory_space<vmem>>, vector<1x128xf32>
      %37 = vector.broadcast %36 : vector<1x128xf32> to vector<32x128xf32>
      %38 = arith.mulf %35, %37 : vector<32x128xf32>
      %c0_23 = arith.constant 0 : index
      %c0_24 = arith.constant 0 : index
      %39 = vector.load %arg7[%c0_23, %c0_24] : memref<1x128xf32, #tpu.memory_space<vmem>>, vector<1x128xf32>
      %40 = vector.broadcast %39 : vector<1x128xf32> to vector<32x128xf32>
      %41 = arith.addf %38, %40 : vector<32x128xf32>
      %c0_25 = arith.constant 0 : index
      %c0_26 = arith.constant 0 : index
      %42 = vector.load %arg8[%c0_25, %c0_26] : memref<32x128xf32, #tpu.memory_space<vmem>>, vector<32x128xf32>
      tpu.vector_store %arg8[%c0_25, %c0_26], %41 {strides = array<i32>} : memref<32x128xf32, #tpu.memory_space<vmem>>, vector<32x128xf32>,
    } else {
    }
    return
  }
  func.func @transform_0(%arg0: i32, %arg1: i32) -> (i32, i32) {
    %c0_i32 = arith.constant 0 : i32
    return %arg0, %arg1 : i32, i32
  }
  func.func @transform_1(%arg0: i32, %arg1: i32) -> (i32, i32) {
    %c0_i32 = arith.constant 0 : i32
    %c0_i32_0 = arith.constant 0 : i32
    return %arg1, %c0_i32 : i32, i32
  }
  func.func @transform_2(%arg0: i32, %arg1: i32) -> (i32, i32) {
    %c0_i32 = arith.constant 0 : i32
    %c0_i32_0 = arith.constant 0 : i32
    %c0_i32_1 = arith.constant 0 : i32
    return %c0_i32, %c0_i32_0 : i32, i32
  }
  func.func @transform_3(%arg0: i32, %arg1: i32) -> (i32, i32) {
    %c0_i32 = arith.constant 0 : i32
    %c0_i32_0 = arith.constant 0 : i32
    return %arg0, %c0_i32 : i32, i32
  }
  func.func @transform_4(%arg0: i32, %arg1: i32) -> (i32, i32) {
    %c0_i32 = arith.constant 0 : i32
    %c0_i32_0 = arith.constant 0 : i32
    %c0_i32_1 = arith.constant 0 : i32
    return %c0_i32, %c0_i32_0 : i32, i32
  }
  func.func @transform_5(%arg0: i32, %arg1: i32) -> (i32, i32) {
    %c0_i32 = arith.constant 0 : i32
    %c0_i32_0 = arith.constant 0 : i32
    %c0_i32_1 = arith.constant 0 : i32
    return %c0_i32, %c0_i32_0 : i32, i32
  }
  func.func @transform_6(%arg0: i32, %arg1: i32) -> (i32, i32) {
    %c0_i32 = arith.constant 0 : i32
    %c0_i32_0 = arith.constant 0 : i32
    return %arg0, %c0_i32 : i32, i32
  }
}

module attributes {stable_mosaic.version = 11 : i64} {
  func.func @_mha_kernel(%arg0: i32, %arg1: memref<1x16x128xf32, #tpu.memory_space<vmem>>, %arg2: memref<1x16x256xf32, #tpu.memory_space<vmem>>, %arg3: memref<1x16x128xf32, #tpu.memory_space<vmem>>) attributes {dimension_semantics = [#tpu.dimension_semantics<parallel>], iteration_bounds = array<i64: 2>, scalar_prefetch = 0 : i64, scratch_operands = 0 : i64, tpu.core_type = #tpu.core_type<tc>, window_params = [{transform_indices = @transform_0, window_bounds = array<i64: 1, 16, 128>}, {transform_indices = @transform_1, window_bounds = array<i64: 1, 16, 256>}, {transform_indices = @transform_2, window_bounds = array<i64: 1, 16, 128>}]} {
    %c0 = arith.constant 0 : index
    %c0_0 = arith.constant 0 : index
    %c0_1 = arith.constant 0 : index
    %0 = vector.load %arg1[%c0, %c0_0, %c0_1] : memref<1x16x128xf32, #tpu.memory_space<vmem>>, vector<1x16x128xf32>
    %1 = vector.shape_cast %0 : vector<1x16x128xf32> to vector<16x128xf32>
    %c0_2 = arith.constant 0 : index
    %c0_3 = arith.constant 0 : index
    %c0_4 = arith.constant 0 : index
    %2 = vector.load %arg2[%c0_2, %c0_3, %c0_4] : memref<1x16x256xf32, #tpu.memory_space<vmem>>, vector<1x16x256xf32>
    %3 = vector.shape_cast %2 : vector<1x16x256xf32> to vector<16x256xf32>
    %4 = tpu.iota {dimensions = array<i32: 0>} : vector<16x16xi32>
    %5 = tpu.iota {dimensions = array<i32: 1>} : vector<16x16xi32>
    %6 = arith.cmpi sle, %5, %4 : vector<16x16xi32>
    %7 = vector.extract_strided_slice %1 {offsets = [0, 0], sizes = [16, 32], strides = [1, 1]} : vector<16x128xf32> to vector<16x32xf32>
    %8 = vector.extract_strided_slice %3 {offsets = [0, 0], sizes = [16, 32], strides = [1, 1]} : vector<16x256xf32> to vector<16x32xf32>
    %9 = vector.extract_strided_slice %3 {offsets = [0, 128], sizes = [16, 32], strides = [1, 1]} : vector<16x256xf32> to vector<16x32xf32>
    %cst = arith.constant dense<0.000000e+00> : vector<16x16xf32>
    %10 = tpu.matmul %7, %8, %cst {dimension_numbers = #tpu.dot_dimension_numbers<[1], [1], [0], [0], [0, 0, 1, 0], [], []>} : vector<16x32xf32>, vector<16x32xf32>, vector<16x16xf32> -> vector<16x16xf32>
    %cst_5 = arith.constant 0.176776692 : f32
    %11 = vector.broadcast %cst_5 : f32 to vector<16x16xf32>
    %12 = arith.mulf %10, %11 : vector<16x16xf32>
    %cst_6 = arith.constant -1.000000e+30 : f32
    %13 = vector.broadcast %cst_6 : f32 to vector<16x16xf32>
    %14 = arith.select %6, %12, %13 : vector<16x16xi1>, vector<16x16xf32>
    %cst_7 = arith.constant dense<0xFF800000> : vector<16xf32>
    %15 = vector.multi_reduction <maximumf>, %14, %cst_7 [1] : vector<16x16xf32> to vector<16xf32>
    %16 = vector.shape_cast %15 : vector<16xf32> to vector<16x1xf32>
    %17 = vector.broadcast %16 : vector<16x1xf32> to vector<16x16xf32>
    %18 = arith.subf %14, %17 : vector<16x16xf32>
    %19 = math.exp %18 : vector<16x16xf32>
    %cst_8 = arith.constant dense<0.000000e+00> : vector<16xf32>
    %20 = vector.multi_reduction <add>, %19, %cst_8 [1] : vector<16x16xf32> to vector<16xf32>
    %21 = vector.shape_cast %20 : vector<16xf32> to vector<16x1xf32>
    %22 = tpu.reciprocal %21 {approx = true} : vector<16x1xf32> -> vector<16x1xf32>
    %23 = vector.broadcast %22 : vector<16x1xf32> to vector<16x16xf32>
    %24 = arith.mulf %19, %23 : vector<16x16xf32>
    %cst_9 = arith.constant dense<0.000000e+00> : vector<16x32xf32>
    %25 = tpu.matmul %24, %9, %cst_9 {dimension_numbers = #tpu.dot_dimension_numbers<[1], [0], [0], [1], [0, 0, 1, 1], [], []>} : vector<16x16xf32>, vector<16x32xf32>, vector<16x32xf32> -> vector<16x32xf32>
    %26 = vector.extract_strided_slice %1 {offsets = [0, 32], sizes = [16, 32], strides = [1, 1]} : vector<16x128xf32> to vector<16x32xf32>
    %27 = vector.extract_strided_slice %3 {offsets = [0, 32], sizes = [16, 32], strides = [1, 1]} : vector<16x256xf32> to vector<16x32xf32>
    %28 = vector.extract_strided_slice %3 {offsets = [0, 160], sizes = [16, 32], strides = [1, 1]} : vector<16x256xf32> to vector<16x32xf32>
    %cst_10 = arith.constant dense<0.000000e+00> : vector<16x16xf32>
    %29 = tpu.matmul %26, %27, %cst_10 {dimension_numbers = #tpu.dot_dimension_numbers<[1], [1], [0], [0], [0, 0, 1, 0], [], []>} : vector<16x32xf32>, vector<16x32xf32>, vector<16x16xf32> -> vector<16x16xf32>
    %cst_11 = arith.constant 0.176776692 : f32
    %30 = vector.broadcast %cst_11 : f32 to vector<16x16xf32>
    %31 = arith.mulf %29, %30 : vector<16x16xf32>
    %cst_12 = arith.constant -1.000000e+30 : f32
    %32 = vector.broadcast %cst_12 : f32 to vector<16x16xf32>
    %33 = arith.select %6, %31, %32 : vector<16x16xi1>, vector<16x16xf32>
    %cst_13 = arith.constant dense<0xFF800000> : vector<16xf32>
    %34 = vector.multi_reduction <maximumf>, %33, %cst_13 [1] : vector<16x16xf32> to vector<16xf32>
    %35 = vector.shape_cast %34 : vector<16xf32> to vector<16x1xf32>
    %36 = vector.broadcast %35 : vector<16x1xf32> to vector<16x16xf32>
    %37 = arith.subf %33, %36 : vector<16x16xf32>
    %38 = math.exp %37 : vector<16x16xf32>
    %cst_14 = arith.constant dense<0.000000e+00> : vector<16xf32>
    %39 = vector.multi_reduction <add>, %38, %cst_14 [1] : vector<16x16xf32> to vector<16xf32>
    %40 = vector.shape_cast %39 : vector<16xf32> to vector<16x1xf32>
    %41 = tpu.reciprocal %40 {approx = true} : vector<16x1xf32> -> vector<16x1xf32>
    %42 = vector.broadcast %41 : vector<16x1xf32> to vector<16x16xf32>
    %43 = arith.mulf %38, %42 : vector<16x16xf32>
    %cst_15 = arith.constant dense<0.000000e+00> : vector<16x32xf32>
    %44 = tpu.matmul %43, %28, %cst_15 {dimension_numbers = #tpu.dot_dimension_numbers<[1], [0], [0], [1], [0, 0, 1, 1], [], []>} : vector<16x16xf32>, vector<16x32xf32>, vector<16x32xf32> -> vector<16x32xf32>
    %45 = vector.extract_strided_slice %1 {offsets = [0, 64], sizes = [16, 32], strides = [1, 1]} : vector<16x128xf32> to vector<16x32xf32>
    %46 = vector.extract_strided_slice %3 {offsets = [0, 64], sizes = [16, 32], strides = [1, 1]} : vector<16x256xf32> to vector<16x32xf32>
    %47 = vector.extract_strided_slice %3 {offsets = [0, 192], sizes = [16, 32], strides = [1, 1]} : vector<16x256xf32> to vector<16x32xf32>
    %cst_16 = arith.constant dense<0.000000e+00> : vector<16x16xf32>
    %48 = tpu.matmul %45, %46, %cst_16 {dimension_numbers = #tpu.dot_dimension_numbers<[1], [1], [0], [0], [0, 0, 1, 0], [], []>} : vector<16x32xf32>, vector<16x32xf32>, vector<16x16xf32> -> vector<16x16xf32>
    %cst_17 = arith.constant 0.176776692 : f32
    %49 = vector.broadcast %cst_17 : f32 to vector<16x16xf32>
    %50 = arith.mulf %48, %49 : vector<16x16xf32>
    %cst_18 = arith.constant -1.000000e+30 : f32
    %51 = vector.broadcast %cst_18 : f32 to vector<16x16xf32>
    %52 = arith.select %6, %50, %51 : vector<16x16xi1>, vector<16x16xf32>
    %cst_19 = arith.constant dense<0xFF800000> : vector<16xf32>
    %53 = vector.multi_reduction <maximumf>, %52, %cst_19 [1] : vector<16x16xf32> to vector<16xf32>
    %54 = vector.shape_cast %53 : vector<16xf32> to vector<16x1xf32>
    %55 = vector.broadcast %54 : vector<16x1xf32> to vector<16x16xf32>
    %56 = arith.subf %52, %55 : vector<16x16xf32>
    %57 = math.exp %56 : vector<16x16xf32>
    %cst_20 = arith.constant dense<0.000000e+00> : vector<16xf32>
    %58 = vector.multi_reduction <add>, %57, %cst_20 [1] : vector<16x16xf32> to vector<16xf32>
    %59 = vector.shape_cast %58 : vector<16xf32> to vector<16x1xf32>
    %60 = tpu.reciprocal %59 {approx = true} : vector<16x1xf32> -> vector<16x1xf32>
    %61 = vector.broadcast %60 : vector<16x1xf32> to vector<16x16xf32>
    %62 = arith.mulf %57, %61 : vector<16x16xf32>
    %cst_21 = arith.constant dense<0.000000e+00> : vector<16x32xf32>
    %63 = tpu.matmul %62, %47, %cst_21 {dimension_numbers = #tpu.dot_dimension_numbers<[1], [0], [0], [1], [0, 0, 1, 1], [], []>} : vector<16x16xf32>, vector<16x32xf32>, vector<16x32xf32> -> vector<16x32xf32>
    %64 = vector.extract_strided_slice %1 {offsets = [0, 96], sizes = [16, 32], strides = [1, 1]} : vector<16x128xf32> to vector<16x32xf32>
    %65 = vector.extract_strided_slice %3 {offsets = [0, 96], sizes = [16, 32], strides = [1, 1]} : vector<16x256xf32> to vector<16x32xf32>
    %66 = vector.extract_strided_slice %3 {offsets = [0, 224], sizes = [16, 32], strides = [1, 1]} : vector<16x256xf32> to vector<16x32xf32>
    %cst_22 = arith.constant dense<0.000000e+00> : vector<16x16xf32>
    %67 = tpu.matmul %64, %65, %cst_22 {dimension_numbers = #tpu.dot_dimension_numbers<[1], [1], [0], [0], [0, 0, 1, 0], [], []>} : vector<16x32xf32>, vector<16x32xf32>, vector<16x16xf32> -> vector<16x16xf32>
    %cst_23 = arith.constant 0.176776692 : f32
    %68 = vector.broadcast %cst_23 : f32 to vector<16x16xf32>
    %69 = arith.mulf %67, %68 : vector<16x16xf32>
    %cst_24 = arith.constant -1.000000e+30 : f32
    %70 = vector.broadcast %cst_24 : f32 to vector<16x16xf32>
    %71 = arith.select %6, %69, %70 : vector<16x16xi1>, vector<16x16xf32>
    %cst_25 = arith.constant dense<0xFF800000> : vector<16xf32>
    %72 = vector.multi_reduction <maximumf>, %71, %cst_25 [1] : vector<16x16xf32> to vector<16xf32>
    %73 = vector.shape_cast %72 : vector<16xf32> to vector<16x1xf32>
    %74 = vector.broadcast %73 : vector<16x1xf32> to vector<16x16xf32>
    %75 = arith.subf %71, %74 : vector<16x16xf32>
    %76 = math.exp %75 : vector<16x16xf32>
    %cst_26 = arith.constant dense<0.000000e+00> : vector<16xf32>
    %77 = vector.multi_reduction <add>, %76, %cst_26 [1] : vector<16x16xf32> to vector<16xf32>
    %78 = vector.shape_cast %77 : vector<16xf32> to vector<16x1xf32>
    %79 = tpu.reciprocal %78 {approx = true} : vector<16x1xf32> -> vector<16x1xf32>
    %80 = vector.broadcast %79 : vector<16x1xf32> to vector<16x16xf32>
    %81 = arith.mulf %76, %80 : vector<16x16xf32>
    %cst_27 = arith.constant dense<0.000000e+00> : vector<16x32xf32>
    %82 = tpu.matmul %81, %66, %cst_27 {dimension_numbers = #tpu.dot_dimension_numbers<[1], [0], [0], [1], [0, 0, 1, 1], [], []>} : vector<16x16xf32>, vector<16x32xf32>, vector<16x32xf32> -> vector<16x32xf32>
    %83 = tpu.concatenate %25, %44, %63, %82 in 1 : vector<16x32xf32>, vector<16x32xf32>, vector<16x32xf32>, vector<16x32xf32> -> vector<16x128xf32>
    %c0_28 = arith.constant 0 : index
    %c0_29 = arith.constant 0 : index
    %c0_30 = arith.constant 0 : index
    %84 = vector.load %arg3[%c0_28, %c0_29, %c0_30] : memref<1x16x128xf32, #tpu.memory_space<vmem>>, vector<1x16x128xf32>
    %85 = vector.shape_cast %84 : vector<1x16x128xf32> to vector<16x128xf32>
    %86 = vector.shape_cast %83 : vector<16x128xf32> to vector<1x16x128xf32>
    tpu.vector_store %arg3[%c0_28, %c0_29, %c0_30], %86 {strides = array<i32>} : memref<1x16x128xf32, #tpu.memory_space<vmem>>, vector<1x16x128xf32>,
    return
  }
  func.func @transform_0(%arg0: i32) -> (i32, i32, i32) {
    %c0_i32 = arith.constant 0 : i32
    %c0_i32_0 = arith.constant 0 : i32
    %c0_i32_1 = arith.constant 0 : i32
    return %arg0, %c0_i32, %c0_i32_0 : i32, i32, i32
  }
  func.func @transform_1(%arg0: i32) -> (i32, i32, i32) {
    %c0_i32 = arith.constant 0 : i32
    %c0_i32_0 = arith.constant 0 : i32
    %c0_i32_1 = arith.constant 0 : i32
    return %arg0, %c0_i32, %c0_i32_0 : i32, i32, i32
  }
  func.func @transform_2(%arg0: i32) -> (i32, i32, i32) {
    %c0_i32 = arith.constant 0 : i32
    %c0_i32_0 = arith.constant 0 : i32
    %c0_i32_1 = arith.constant 0 : i32
    return %arg0, %c0_i32, %c0_i32_0 : i32, i32, i32
  }
}

module attributes {stable_mosaic.version = 11 : i64} {
  func.func @_fused_matmul_kernel(%arg0: i32, %arg1: i32, %arg2: memref<32x128xf32, #tpu.memory_space<vmem>>, %arg3: memref<128x384xf32, #tpu.memory_space<vmem>>, %arg4: memref<1x384xf32, #tpu.memory_space<vmem>>, %arg5: memref<32x384xf32, #tpu.memory_space<vmem>>, %arg6: memref<32x384xf32, #tpu.memory_space<vmem>>) attributes {dimension_semantics = [#tpu.dimension_semantics<parallel>, #tpu.dimension_semantics<arbitrary>], iteration_bounds = array<i64: 1, 1>, scalar_prefetch = 0 : i64, scratch_operands = 1 : i64, tpu.core_type = #tpu.core_type<tc>, window_params = [{transform_indices = @transform_0, window_bounds = array<i64: 32, 128>}, {transform_indices = @transform_1, window_bounds = array<i64: 128, 384>}, {pipeline_mode = #tpu.pipeline_mode<synchronous>, transform_indices = @transform_2, window_bounds = array<i64: 1, 384>}, {transform_indices = @transform_3, window_bounds = array<i64: 32, 384>}]} {
    %c0_i32 = arith.constant 0 : i32
    %0 = arith.cmpi eq, %arg1, %c0_i32 : i32
    %1 = arith.extui %0 : i1 to i32
    %c0_i32_0 = arith.constant 0 : i32
    %2 = arith.cmpi ne, %1, %c0_i32_0 : i32
    scf.if %2 {
      %cst_10 = arith.constant 0.000000e+00 : f32
      %12 = vector.broadcast %cst_10 : f32 to vector<32x384xf32>
      %c0_11 = arith.constant 0 : index
      %c0_12 = arith.constant 0 : index
      %13 = vector.load %arg6[%c0_11, %c0_12] : memref<32x384xf32, #tpu.memory_space<vmem>>, vector<32x384xf32>
      tpu.vector_store %arg6[%c0_11, %c0_12], %12 {strides = array<i32>} : memref<32x384xf32, #tpu.memory_space<vmem>>, vector<32x384xf32>,
    } else {
    }
    %c0 = arith.constant 0 : index
    %c0_1 = arith.constant 0 : index
    %3 = vector.load %arg6[%c0, %c0_1] : memref<32x384xf32, #tpu.memory_space<vmem>>, vector<32x384xf32>
    %c0_2 = arith.constant 0 : index
    %c0_3 = arith.constant 0 : index
    %4 = vector.load %arg2[%c0_2, %c0_3] : memref<32x128xf32, #tpu.memory_space<vmem>>, vector<32x128xf32>
    %c0_4 = arith.constant 0 : index
    %c0_5 = arith.constant 0 : index
    %5 = vector.load %arg3[%c0_4, %c0_5] : memref<128x384xf32, #tpu.memory_space<vmem>>, vector<128x384xf32>
    %cst = arith.constant dense<0.000000e+00> : vector<32x384xf32>
    %6 = tpu.matmul %4, %5, %cst {dimension_numbers = #tpu.dot_dimension_numbers<[1], [0], [0], [1], [0, 0, 1, 1], [], []>} : vector<32x128xf32>, vector<128x384xf32>, vector<32x384xf32> -> vector<32x384xf32>
    %7 = arith.addf %3, %6 : vector<32x384xf32>
    %c0_6 = arith.constant 0 : index
    %c0_7 = arith.constant 0 : index
    %8 = vector.load %arg6[%c0_6, %c0_7] : memref<32x384xf32, #tpu.memory_space<vmem>>, vector<32x384xf32>
    tpu.vector_store %arg6[%c0_6, %c0_7], %7 {strides = array<i32>} : memref<32x384xf32, #tpu.memory_space<vmem>>, vector<32x384xf32>,
    %c0_i32_8 = arith.constant 0 : i32
    %9 = arith.cmpi eq, %arg1, %c0_i32_8 : i32
    %10 = arith.extui %9 : i1 to i32
    %c0_i32_9 = arith.constant 0 : i32
    %11 = arith.cmpi ne, %10, %c0_i32_9 : i32
    scf.if %11 {
      %c0_10 = arith.constant 0 : index
      %c0_11 = arith.constant 0 : index
      %12 = vector.load %arg6[%c0_10, %c0_11] : memref<32x384xf32, #tpu.memory_space<vmem>>, vector<32x384xf32>
      %c0_12 = arith.constant 0 : index
      %c0_13 = arith.constant 0 : index
      %13 = vector.load %arg4[%c0_12, %c0_13] : memref<1x384xf32, #tpu.memory_space<vmem>>, vector<1x384xf32>
      %14 = vector.broadcast %13 : vector<1x384xf32> to vector<32x384xf32>
      %15 = arith.addf %12, %14 : vector<32x384xf32>
      %c0_14 = arith.constant 0 : index
      %c0_15 = arith.constant 0 : index
      %16 = vector.load %arg5[%c0_14, %c0_15] : memref<32x384xf32, #tpu.memory_space<vmem>>, vector<32x384xf32>
      tpu.vector_store %arg5[%c0_14, %c0_15], %15 {strides = array<i32>} : memref<32x384xf32, #tpu.memory_space<vmem>>, vector<32x384xf32>,
    } else {
    }
    return
  }
  func.func @transform_0(%arg0: i32, %arg1: i32) -> (i32, i32) {
    %c0_i32 = arith.constant 0 : i32
    return %arg0, %arg1 : i32, i32
  }
  func.func @transform_1(%arg0: i32, %arg1: i32) -> (i32, i32) {
    %c0_i32 = arith.constant 0 : i32
    %c0_i32_0 = arith.constant 0 : i32
    return %arg1, %c0_i32 : i32, i32
  }
  func.func @transform_2(%arg0: i32, %arg1: i32) -> (i32, i32) {
    %c0_i32 = arith.constant 0 : i32
    %c0_i32_0 = arith.constant 0 : i32
    %c0_i32_1 = arith.constant 0 : i32
    return %c0_i32, %c0_i32_0 : i32, i32
  }
  func.func @transform_3(%arg0: i32, %arg1: i32) -> (i32, i32) {
    %c0_i32 = arith.constant 0 : i32
    %c0_i32_0 = arith.constant 0 : i32
    return %arg0, %c0_i32 : i32, i32
  }
}

module attributes {stable_mosaic.version = 11 : i64} {
  func.func @_mha_kernel(%arg0: i32, %arg1: memref<1x16x128xf32, #tpu.memory_space<vmem>>, %arg2: memref<1x16x256xf32, #tpu.memory_space<vmem>>, %arg3: memref<1x16x128xf32, #tpu.memory_space<vmem>>) attributes {dimension_semantics = [#tpu.dimension_semantics<parallel>], iteration_bounds = array<i64: 2>, scalar_prefetch = 0 : i64, scratch_operands = 0 : i64, tpu.core_type = #tpu.core_type<tc>, window_params = [{transform_indices = @transform_0, window_bounds = array<i64: 1, 16, 128>}, {transform_indices = @transform_1, window_bounds = array<i64: 1, 16, 256>}, {transform_indices = @transform_2, window_bounds = array<i64: 1, 16, 128>}]} {
    %c0 = arith.constant 0 : index
    %c0_0 = arith.constant 0 : index
    %c0_1 = arith.constant 0 : index
    %0 = vector.load %arg1[%c0, %c0_0, %c0_1] : memref<1x16x128xf32, #tpu.memory_space<vmem>>, vector<1x16x128xf32>
    %1 = vector.shape_cast %0 : vector<1x16x128xf32> to vector<16x128xf32>
    %c0_2 = arith.constant 0 : index
    %c0_3 = arith.constant 0 : index
    %c0_4 = arith.constant 0 : index
    %2 = vector.load %arg2[%c0_2, %c0_3, %c0_4] : memref<1x16x256xf32, #tpu.memory_space<vmem>>, vector<1x16x256xf32>
    %3 = vector.shape_cast %2 : vector<1x16x256xf32> to vector<16x256xf32>
    %4 = vector.extract_strided_slice %1 {offsets = [0, 0], sizes = [16, 32], strides = [1, 1]} : vector<16x128xf32> to vector<16x32xf32>
    %5 = vector.extract_strided_slice %3 {offsets = [0, 0], sizes = [16, 32], strides = [1, 1]} : vector<16x256xf32> to vector<16x32xf32>
    %6 = vector.extract_strided_slice %3 {offsets = [0, 128], sizes = [16, 32], strides = [1, 1]} : vector<16x256xf32> to vector<16x32xf32>
    %cst = arith.constant dense<0.000000e+00> : vector<16x16xf32>
    %7 = tpu.matmul %4, %5, %cst {dimension_numbers = #tpu.dot_dimension_numbers<[1], [1], [0], [0], [0, 0, 1, 0], [], []>} : vector<16x32xf32>, vector<16x32xf32>, vector<16x16xf32> -> vector<16x16xf32>
    %cst_5 = arith.constant 0.176776692 : f32
    %8 = vector.broadcast %cst_5 : f32 to vector<16x16xf32>
    %9 = arith.mulf %7, %8 : vector<16x16xf32>
    %cst_6 = arith.constant dense<0xFF800000> : vector<16xf32>
    %10 = vector.multi_reduction <maximumf>, %9, %cst_6 [1] : vector<16x16xf32> to vector<16xf32>
    %11 = vector.shape_cast %10 : vector<16xf32> to vector<16x1xf32>
    %12 = vector.broadcast %11 : vector<16x1xf32> to vector<16x16xf32>
    %13 = arith.subf %9, %12 : vector<16x16xf32>
    %14 = math.exp %13 : vector<16x16xf32>
    %cst_7 = arith.constant dense<0.000000e+00> : vector<16xf32>
    %15 = vector.multi_reduction <add>, %14, %cst_7 [1] : vector<16x16xf32> to vector<16xf32>
    %16 = vector.shape_cast %15 : vector<16xf32> to vector<16x1xf32>
    %17 = tpu.reciprocal %16 {approx = true} : vector<16x1xf32> -> vector<16x1xf32>
    %18 = vector.broadcast %17 : vector<16x1xf32> to vector<16x16xf32>
    %19 = arith.mulf %14, %18 : vector<16x16xf32>
    %cst_8 = arith.constant dense<0.000000e+00> : vector<16x32xf32>
    %20 = tpu.matmul %19, %6, %cst_8 {dimension_numbers = #tpu.dot_dimension_numbers<[1], [0], [0], [1], [0, 0, 1, 1], [], []>} : vector<16x16xf32>, vector<16x32xf32>, vector<16x32xf32> -> vector<16x32xf32>
    %21 = vector.extract_strided_slice %1 {offsets = [0, 32], sizes = [16, 32], strides = [1, 1]} : vector<16x128xf32> to vector<16x32xf32>
    %22 = vector.extract_strided_slice %3 {offsets = [0, 32], sizes = [16, 32], strides = [1, 1]} : vector<16x256xf32> to vector<16x32xf32>
    %23 = vector.extract_strided_slice %3 {offsets = [0, 160], sizes = [16, 32], strides = [1, 1]} : vector<16x256xf32> to vector<16x32xf32>
    %cst_9 = arith.constant dense<0.000000e+00> : vector<16x16xf32>
    %24 = tpu.matmul %21, %22, %cst_9 {dimension_numbers = #tpu.dot_dimension_numbers<[1], [1], [0], [0], [0, 0, 1, 0], [], []>} : vector<16x32xf32>, vector<16x32xf32>, vector<16x16xf32> -> vector<16x16xf32>
    %cst_10 = arith.constant 0.176776692 : f32
    %25 = vector.broadcast %cst_10 : f32 to vector<16x16xf32>
    %26 = arith.mulf %24, %25 : vector<16x16xf32>
    %cst_11 = arith.constant dense<0xFF800000> : vector<16xf32>
    %27 = vector.multi_reduction <maximumf>, %26, %cst_11 [1] : vector<16x16xf32> to vector<16xf32>
    %28 = vector.shape_cast %27 : vector<16xf32> to vector<16x1xf32>
    %29 = vector.broadcast %28 : vector<16x1xf32> to vector<16x16xf32>
    %30 = arith.subf %26, %29 : vector<16x16xf32>
    %31 = math.exp %30 : vector<16x16xf32>
    %cst_12 = arith.constant dense<0.000000e+00> : vector<16xf32>
    %32 = vector.multi_reduction <add>, %31, %cst_12 [1] : vector<16x16xf32> to vector<16xf32>
    %33 = vector.shape_cast %32 : vector<16xf32> to vector<16x1xf32>
    %34 = tpu.reciprocal %33 {approx = true} : vector<16x1xf32> -> vector<16x1xf32>
    %35 = vector.broadcast %34 : vector<16x1xf32> to vector<16x16xf32>
    %36 = arith.mulf %31, %35 : vector<16x16xf32>
    %cst_13 = arith.constant dense<0.000000e+00> : vector<16x32xf32>
    %37 = tpu.matmul %36, %23, %cst_13 {dimension_numbers = #tpu.dot_dimension_numbers<[1], [0], [0], [1], [0, 0, 1, 1], [], []>} : vector<16x16xf32>, vector<16x32xf32>, vector<16x32xf32> -> vector<16x32xf32>
    %38 = vector.extract_strided_slice %1 {offsets = [0, 64], sizes = [16, 32], strides = [1, 1]} : vector<16x128xf32> to vector<16x32xf32>
    %39 = vector.extract_strided_slice %3 {offsets = [0, 64], sizes = [16, 32], strides = [1, 1]} : vector<16x256xf32> to vector<16x32xf32>
    %40 = vector.extract_strided_slice %3 {offsets = [0, 192], sizes = [16, 32], strides = [1, 1]} : vector<16x256xf32> to vector<16x32xf32>
    %cst_14 = arith.constant dense<0.000000e+00> : vector<16x16xf32>
    %41 = tpu.matmul %38, %39, %cst_14 {dimension_numbers = #tpu.dot_dimension_numbers<[1], [1], [0], [0], [0, 0, 1, 0], [], []>} : vector<16x32xf32>, vector<16x32xf32>, vector<16x16xf32> -> vector<16x16xf32>
    %cst_15 = arith.constant 0.176776692 : f32
    %42 = vector.broadcast %cst_15 : f32 to vector<16x16xf32>
    %43 = arith.mulf %41, %42 : vector<16x16xf32>
    %cst_16 = arith.constant dense<0xFF800000> : vector<16xf32>
    %44 = vector.multi_reduction <maximumf>, %43, %cst_16 [1] : vector<16x16xf32> to vector<16xf32>
    %45 = vector.shape_cast %44 : vector<16xf32> to vector<16x1xf32>
    %46 = vector.broadcast %45 : vector<16x1xf32> to vector<16x16xf32>
    %47 = arith.subf %43, %46 : vector<16x16xf32>
    %48 = math.exp %47 : vector<16x16xf32>
    %cst_17 = arith.constant dense<0.000000e+00> : vector<16xf32>
    %49 = vector.multi_reduction <add>, %48, %cst_17 [1] : vector<16x16xf32> to vector<16xf32>
    %50 = vector.shape_cast %49 : vector<16xf32> to vector<16x1xf32>
    %51 = tpu.reciprocal %50 {approx = true} : vector<16x1xf32> -> vector<16x1xf32>
    %52 = vector.broadcast %51 : vector<16x1xf32> to vector<16x16xf32>
    %53 = arith.mulf %48, %52 : vector<16x16xf32>
    %cst_18 = arith.constant dense<0.000000e+00> : vector<16x32xf32>
    %54 = tpu.matmul %53, %40, %cst_18 {dimension_numbers = #tpu.dot_dimension_numbers<[1], [0], [0], [1], [0, 0, 1, 1], [], []>} : vector<16x16xf32>, vector<16x32xf32>, vector<16x32xf32> -> vector<16x32xf32>
    %55 = vector.extract_strided_slice %1 {offsets = [0, 96], sizes = [16, 32], strides = [1, 1]} : vector<16x128xf32> to vector<16x32xf32>
    %56 = vector.extract_strided_slice %3 {offsets = [0, 96], sizes = [16, 32], strides = [1, 1]} : vector<16x256xf32> to vector<16x32xf32>
    %57 = vector.extract_strided_slice %3 {offsets = [0, 224], sizes = [16, 32], strides = [1, 1]} : vector<16x256xf32> to vector<16x32xf32>
    %cst_19 = arith.constant dense<0.000000e+00> : vector<16x16xf32>
    %58 = tpu.matmul %55, %56, %cst_19 {dimension_numbers = #tpu.dot_dimension_numbers<[1], [1], [0], [0], [0, 0, 1, 0], [], []>} : vector<16x32xf32>, vector<16x32xf32>, vector<16x16xf32> -> vector<16x16xf32>
    %cst_20 = arith.constant 0.176776692 : f32
    %59 = vector.broadcast %cst_20 : f32 to vector<16x16xf32>
    %60 = arith.mulf %58, %59 : vector<16x16xf32>
    %cst_21 = arith.constant dense<0xFF800000> : vector<16xf32>
    %61 = vector.multi_reduction <maximumf>, %60, %cst_21 [1] : vector<16x16xf32> to vector<16xf32>
    %62 = vector.shape_cast %61 : vector<16xf32> to vector<16x1xf32>
    %63 = vector.broadcast %62 : vector<16x1xf32> to vector<16x16xf32>
    %64 = arith.subf %60, %63 : vector<16x16xf32>
    %65 = math.exp %64 : vector<16x16xf32>
    %cst_22 = arith.constant dense<0.000000e+00> : vector<16xf32>
    %66 = vector.multi_reduction <add>, %65, %cst_22 [1] : vector<16x16xf32> to vector<16xf32>
    %67 = vector.shape_cast %66 : vector<16xf32> to vector<16x1xf32>
    %68 = tpu.reciprocal %67 {approx = true} : vector<16x1xf32> -> vector<16x1xf32>
    %69 = vector.broadcast %68 : vector<16x1xf32> to vector<16x16xf32>
    %70 = arith.mulf %65, %69 : vector<16x16xf32>
    %cst_23 = arith.constant dense<0.000000e+00> : vector<16x32xf32>
    %71 = tpu.matmul %70, %57, %cst_23 {dimension_numbers = #tpu.dot_dimension_numbers<[1], [0], [0], [1], [0, 0, 1, 1], [], []>} : vector<16x16xf32>, vector<16x32xf32>, vector<16x32xf32> -> vector<16x32xf32>
    %72 = tpu.concatenate %20, %37, %54, %71 in 1 : vector<16x32xf32>, vector<16x32xf32>, vector<16x32xf32>, vector<16x32xf32> -> vector<16x128xf32>
    %c0_24 = arith.constant 0 : index
    %c0_25 = arith.constant 0 : index
    %c0_26 = arith.constant 0 : index
    %73 = vector.load %arg3[%c0_24, %c0_25, %c0_26] : memref<1x16x128xf32, #tpu.memory_space<vmem>>, vector<1x16x128xf32>
    %74 = vector.shape_cast %73 : vector<1x16x128xf32> to vector<16x128xf32>
    %75 = vector.shape_cast %72 : vector<16x128xf32> to vector<1x16x128xf32>
    tpu.vector_store %arg3[%c0_24, %c0_25, %c0_26], %75 {strides = array<i32>} : memref<1x16x128xf32, #tpu.memory_space<vmem>>, vector<1x16x128xf32>,
    return
  }
  func.func @transform_0(%arg0: i32) -> (i32, i32, i32) {
    %c0_i32 = arith.constant 0 : i32
    %c0_i32_0 = arith.constant 0 : i32
    %c0_i32_1 = arith.constant 0 : i32
    return %arg0, %c0_i32, %c0_i32_0 : i32, i32, i32
  }
  func.func @transform_1(%arg0: i32) -> (i32, i32, i32) {
    %c0_i32 = arith.constant 0 : i32
    %c0_i32_0 = arith.constant 0 : i32
    %c0_i32_1 = arith.constant 0 : i32
    return %arg0, %c0_i32, %c0_i32_0 : i32, i32, i32
  }
  func.func @transform_2(%arg0: i32) -> (i32, i32, i32) {
    %c0_i32 = arith.constant 0 : i32
    %c0_i32_0 = arith.constant 0 : i32
    %c0_i32_1 = arith.constant 0 : i32
    return %arg0, %c0_i32, %c0_i32_0 : i32, i32, i32
  }
}

module attributes {stable_mosaic.version = 11 : i64} {
  func.func @_fused_matmul_kernel(%arg0: i32, %arg1: i32, %arg2: memref<32x128xf32, #tpu.memory_space<vmem>>, %arg3: memref<128x256xf32, #tpu.memory_space<vmem>>, %arg4: memref<1x256xf32, #tpu.memory_space<vmem>>, %arg5: memref<32x256xf32, #tpu.memory_space<vmem>>, %arg6: memref<32x256xf32, #tpu.memory_space<vmem>>) attributes {dimension_semantics = [#tpu.dimension_semantics<parallel>, #tpu.dimension_semantics<arbitrary>], iteration_bounds = array<i64: 1, 1>, scalar_prefetch = 0 : i64, scratch_operands = 1 : i64, tpu.core_type = #tpu.core_type<tc>, window_params = [{transform_indices = @transform_0, window_bounds = array<i64: 32, 128>}, {transform_indices = @transform_1, window_bounds = array<i64: 128, 256>}, {pipeline_mode = #tpu.pipeline_mode<synchronous>, transform_indices = @transform_2, window_bounds = array<i64: 1, 256>}, {transform_indices = @transform_3, window_bounds = array<i64: 32, 256>}]} {
    %c0_i32 = arith.constant 0 : i32
    %0 = arith.cmpi eq, %arg1, %c0_i32 : i32
    %1 = arith.extui %0 : i1 to i32
    %c0_i32_0 = arith.constant 0 : i32
    %2 = arith.cmpi ne, %1, %c0_i32_0 : i32
    scf.if %2 {
      %cst_10 = arith.constant 0.000000e+00 : f32
      %12 = vector.broadcast %cst_10 : f32 to vector<32x256xf32>
      %c0_11 = arith.constant 0 : index
      %c0_12 = arith.constant 0 : index
      %13 = vector.load %arg6[%c0_11, %c0_12] : memref<32x256xf32, #tpu.memory_space<vmem>>, vector<32x256xf32>
      tpu.vector_store %arg6[%c0_11, %c0_12], %12 {strides = array<i32>} : memref<32x256xf32, #tpu.memory_space<vmem>>, vector<32x256xf32>,
    } else {
    }
    %c0 = arith.constant 0 : index
    %c0_1 = arith.constant 0 : index
    %3 = vector.load %arg6[%c0, %c0_1] : memref<32x256xf32, #tpu.memory_space<vmem>>, vector<32x256xf32>
    %c0_2 = arith.constant 0 : index
    %c0_3 = arith.constant 0 : index
    %4 = vector.load %arg2[%c0_2, %c0_3] : memref<32x128xf32, #tpu.memory_space<vmem>>, vector<32x128xf32>
    %c0_4 = arith.constant 0 : index
    %c0_5 = arith.constant 0 : index
    %5 = vector.load %arg3[%c0_4, %c0_5] : memref<128x256xf32, #tpu.memory_space<vmem>>, vector<128x256xf32>
    %cst = arith.constant dense<0.000000e+00> : vector<32x256xf32>
    %6 = tpu.matmul %4, %5, %cst {dimension_numbers = #tpu.dot_dimension_numbers<[1], [0], [0], [1], [0, 0, 1, 1], [], []>} : vector<32x128xf32>, vector<128x256xf32>, vector<32x256xf32> -> vector<32x256xf32>
    %7 = arith.addf %3, %6 : vector<32x256xf32>
    %c0_6 = arith.constant 0 : index
    %c0_7 = arith.constant 0 : index
    %8 = vector.load %arg6[%c0_6, %c0_7] : memref<32x256xf32, #tpu.memory_space<vmem>>, vector<32x256xf32>
    tpu.vector_store %arg6[%c0_6, %c0_7], %7 {strides = array<i32>} : memref<32x256xf32, #tpu.memory_space<vmem>>, vector<32x256xf32>,
    %c0_i32_8 = arith.constant 0 : i32
    %9 = arith.cmpi eq, %arg1, %c0_i32_8 : i32
    %10 = arith.extui %9 : i1 to i32
    %c0_i32_9 = arith.constant 0 : i32
    %11 = arith.cmpi ne, %10, %c0_i32_9 : i32
    scf.if %11 {
      %c0_10 = arith.constant 0 : index
      %c0_11 = arith.constant 0 : index
      %12 = vector.load %arg6[%c0_10, %c0_11] : memref<32x256xf32, #tpu.memory_space<vmem>>, vector<32x256xf32>
      %c0_12 = arith.constant 0 : index
      %c0_13 = arith.constant 0 : index
      %13 = vector.load %arg4[%c0_12, %c0_13] : memref<1x256xf32, #tpu.memory_space<vmem>>, vector<1x256xf32>
      %14 = vector.broadcast %13 : vector<1x256xf32> to vector<32x256xf32>
      %15 = arith.addf %12, %14 : vector<32x256xf32>
      %cst_14 = arith.constant 0.000000e+00 : f32
      %16 = vector.broadcast %cst_14 : f32 to vector<32x256xf32>
      %17 = arith.maximumf %15, %16 : vector<32x256xf32>
      %c0_15 = arith.constant 0 : index
      %c0_16 = arith.constant 0 : index
      %18 = vector.load %arg5[%c0_15, %c0_16] : memref<32x256xf32, #tpu.memory_space<vmem>>, vector<32x256xf32>
      tpu.vector_store %arg5[%c0_15, %c0_16], %17 {strides = array<i32>} : memref<32x256xf32, #tpu.memory_space<vmem>>, vector<32x256xf32>,
    } else {
    }
    return
  }
  func.func @transform_0(%arg0: i32, %arg1: i32) -> (i32, i32) {
    %c0_i32 = arith.constant 0 : i32
    return %arg0, %arg1 : i32, i32
  }
  func.func @transform_1(%arg0: i32, %arg1: i32) -> (i32, i32) {
    %c0_i32 = arith.constant 0 : i32
    %c0_i32_0 = arith.constant 0 : i32
    return %arg1, %c0_i32 : i32, i32
  }
  func.func @transform_2(%arg0: i32, %arg1: i32) -> (i32, i32) {
    %c0_i32 = arith.constant 0 : i32
    %c0_i32_0 = arith.constant 0 : i32
    %c0_i32_1 = arith.constant 0 : i32
    return %c0_i32, %c0_i32_0 : i32, i32
  }
  func.func @transform_3(%arg0: i32, %arg1: i32) -> (i32, i32) {
    %c0_i32 = arith.constant 0 : i32
    %c0_i32_0 = arith.constant 0 : i32
    return %arg0, %c0_i32 : i32, i32
  }
}

module attributes {stable_mosaic.version = 11 : i64} {
  func.func @_fused_matmul_kernel(%arg0: i32, %arg1: i32, %arg2: memref<32x256xf32, #tpu.memory_space<vmem>>, %arg3: memref<256x128xf32, #tpu.memory_space<vmem>>, %arg4: memref<1x128xf32, #tpu.memory_space<vmem>>, %arg5: memref<32x128xf32, #tpu.memory_space<vmem>>, %arg6: memref<1x128xf32, #tpu.memory_space<vmem>>, %arg7: memref<1x128xf32, #tpu.memory_space<vmem>>, %arg8: memref<32x128xf32, #tpu.memory_space<vmem>>, %arg9: memref<32x128xf32, #tpu.memory_space<vmem>>) attributes {dimension_semantics = [#tpu.dimension_semantics<parallel>, #tpu.dimension_semantics<arbitrary>], iteration_bounds = array<i64: 1, 1>, scalar_prefetch = 0 : i64, scratch_operands = 1 : i64, tpu.core_type = #tpu.core_type<tc>, window_params = [{transform_indices = @transform_0, window_bounds = array<i64: 32, 256>}, {transform_indices = @transform_1, window_bounds = array<i64: 256, 128>}, {pipeline_mode = #tpu.pipeline_mode<synchronous>, transform_indices = @transform_2, window_bounds = array<i64: 1, 128>}, {transform_indices = @transform_3, window_bounds = array<i64: 32, 128>}, {pipeline_mode = #tpu.pipeline_mode<synchronous>, transform_indices = @transform_4, window_bounds = array<i64: 1, 128>}, {pipeline_mode = #tpu.pipeline_mode<synchronous>, transform_indices = @transform_5, window_bounds = array<i64: 1, 128>}, {transform_indices = @transform_6, window_bounds = array<i64: 32, 128>}]} {
    %c0_i32 = arith.constant 0 : i32
    %0 = arith.cmpi eq, %arg1, %c0_i32 : i32
    %1 = arith.extui %0 : i1 to i32
    %c0_i32_0 = arith.constant 0 : i32
    %2 = arith.cmpi ne, %1, %c0_i32_0 : i32
    scf.if %2 {
      %cst_10 = arith.constant 0.000000e+00 : f32
      %12 = vector.broadcast %cst_10 : f32 to vector<32x128xf32>
      %c0_11 = arith.constant 0 : index
      %c0_12 = arith.constant 0 : index
      %13 = vector.load %arg9[%c0_11, %c0_12] : memref<32x128xf32, #tpu.memory_space<vmem>>, vector<32x128xf32>
      tpu.vector_store %arg9[%c0_11, %c0_12], %12 {strides = array<i32>} : memref<32x128xf32, #tpu.memory_space<vmem>>, vector<32x128xf32>,
    } else {
    }
    %c0 = arith.constant 0 : index
    %c0_1 = arith.constant 0 : index
    %3 = vector.load %arg9[%c0, %c0_1] : memref<32x128xf32, #tpu.memory_space<vmem>>, vector<32x128xf32>
    %c0_2 = arith.constant 0 : index
    %c0_3 = arith.constant 0 : index
    %4 = vector.load %arg2[%c0_2, %c0_3] : memref<32x256xf32, #tpu.memory_space<vmem>>, vector<32x256xf32>
    %c0_4 = arith.constant 0 : index
    %c0_5 = arith.constant 0 : index
    %5 = vector.load %arg3[%c0_4, %c0_5] : memref<256x128xf32, #tpu.memory_space<vmem>>, vector<256x128xf32>
    %cst = arith.constant dense<0.000000e+00> : vector<32x128xf32>
    %6 = tpu.matmul %4, %5, %cst {dimension_numbers = #tpu.dot_dimension_numbers<[1], [0], [0], [1], [0, 0, 1, 1], [], []>} : vector<32x256xf32>, vector<256x128xf32>, vector<32x128xf32> -> vector<32x128xf32>
    %7 = arith.addf %3, %6 : vector<32x128xf32>
    %c0_6 = arith.constant 0 : index
    %c0_7 = arith.constant 0 : index
    %8 = vector.load %arg9[%c0_6, %c0_7] : memref<32x128xf32, #tpu.memory_space<vmem>>, vector<32x128xf32>
    tpu.vector_store %arg9[%c0_6, %c0_7], %7 {strides = array<i32>} : memref<32x128xf32, #tpu.memory_space<vmem>>, vector<32x128xf32>,
    %c0_i32_8 = arith.constant 0 : i32
    %9 = arith.cmpi eq, %arg1, %c0_i32_8 : i32
    %10 = arith.extui %9 : i1 to i32
    %c0_i32_9 = arith.constant 0 : i32
    %11 = arith.cmpi ne, %10, %c0_i32_9 : i32
    scf.if %11 {
      %c0_10 = arith.constant 0 : index
      %c0_11 = arith.constant 0 : index
      %12 = vector.load %arg9[%c0_10, %c0_11] : memref<32x128xf32, #tpu.memory_space<vmem>>, vector<32x128xf32>
      %c0_12 = arith.constant 0 : index
      %c0_13 = arith.constant 0 : index
      %13 = vector.load %arg4[%c0_12, %c0_13] : memref<1x128xf32, #tpu.memory_space<vmem>>, vector<1x128xf32>
      %14 = vector.broadcast %13 : vector<1x128xf32> to vector<32x128xf32>
      %15 = arith.addf %12, %14 : vector<32x128xf32>
      %c0_14 = arith.constant 0 : index
      %c0_15 = arith.constant 0 : index
      %16 = vector.load %arg5[%c0_14, %c0_15] : memref<32x128xf32, #tpu.memory_space<vmem>>, vector<32x128xf32>
      %17 = arith.addf %15, %16 : vector<32x128xf32>
      %cst_16 = arith.constant dense<0.000000e+00> : vector<32xf32>
      %18 = vector.multi_reduction <add>, %17, %cst_16 [1] : vector<32x128xf32> to vector<32xf32>
      %19 = vector.shape_cast %18 : vector<32xf32> to vector<32x1xf32>
      %cst_17 = arith.constant 1.280000e+02 : f32
      %20 = vector.broadcast %cst_17 : f32 to vector<32x1xf32>
      %21 = arith.divf %19, %20 : vector<32x1xf32>
      %22 = vector.broadcast %21 : vector<32x1xf32> to vector<32x128xf32>
      %23 = arith.subf %17, %22 : vector<32x128xf32>
      %24 = arith.mulf %23, %23 : vector<32x128xf32>
      %cst_18 = arith.constant dense<0.000000e+00> : vector<32xf32>
      %25 = vector.multi_reduction <add>, %24, %cst_18 [1] : vector<32x128xf32> to vector<32xf32>
      %26 = vector.shape_cast %25 : vector<32xf32> to vector<32x1xf32>
      %cst_19 = arith.constant 1.280000e+02 : f32
      %27 = vector.broadcast %cst_19 : f32 to vector<32x1xf32>
      %28 = arith.divf %26, %27 : vector<32x1xf32>
      %29 = vector.broadcast %21 : vector<32x1xf32> to vector<32x128xf32>
      %30 = arith.subf %17, %29 : vector<32x128xf32>
      %cst_20 = arith.constant 9.99999996E-13 : f32
      %31 = vector.broadcast %cst_20 : f32 to vector<32x1xf32>
      %32 = arith.addf %28, %31 : vector<32x1xf32>
      %33 = math.rsqrt %32 : vector<32x1xf32>
      %34 = vector.broadcast %33 : vector<32x1xf32> to vector<32x128xf32>
      %35 = arith.mulf %30, %34 : vector<32x128xf32>
      %c0_21 = arith.constant 0 : index
      %c0_22 = arith.constant 0 : index
      %36 = vector.load %arg6[%c0_21, %c0_22] : memref<1x128xf32, #tpu.memory_space<vmem>>, vector<1x128xf32>
      %37 = vector.broadcast %36 : vector<1x128xf32> to vector<32x128xf32>
      %38 = arith.mulf %35, %37 : vector<32x128xf32>
      %c0_23 = arith.constant 0 : index
      %c0_24 = arith.constant 0 : index
      %39 = vector.load %arg7[%c0_23, %c0_24] : memref<1x128xf32, #tpu.memory_space<vmem>>, vector<1x128xf32>
      %40 = vector.broadcast %39 : vector<1x128xf32> to vector<32x128xf32>
      %41 = arith.addf %38, %40 : vector<32x128xf32>
      %c0_25 = arith.constant 0 : index
      %c0_26 = arith.constant 0 : index
      %42 = vector.load %arg8[%c0_25, %c0_26] : memref<32x128xf32, #tpu.memory_space<vmem>>, vector<32x128xf32>
      tpu.vector_store %arg8[%c0_25, %c0_26], %41 {strides = array<i32>} : memref<32x128xf32, #tpu.memory_space<vmem>>, vector<32x128xf32>,
    } else {
    }
    return
  }
  func.func @transform_0(%arg0: i32, %arg1: i32) -> (i32, i32) {
    %c0_i32 = arith.constant 0 : i32
    return %arg0, %arg1 : i32, i32
  }
  func.func @transform_1(%arg0: i32, %arg1: i32) -> (i32, i32) {
    %c0_i32 = arith.constant 0 : i32
    %c0_i32_0 = arith.constant 0 : i32
    return %arg1, %c0_i32 : i32, i32
  }
  func.func @transform_2(%arg0: i32, %arg1: i32) -> (i32, i32) {
    %c0_i32 = arith.constant 0 : i32
    %c0_i32_0 = arith.constant 0 : i32
    %c0_i32_1 = arith.constant 0 : i32
    return %c0_i32, %c0_i32_0 : i32, i32
  }
  func.func @transform_3(%arg0: i32, %arg1: i32) -> (i32, i32) {
    %c0_i32 = arith.constant 0 : i32
    %c0_i32_0 = arith.constant 0 : i32
    return %arg0, %c0_i32 : i32, i32
  }
  func.func @transform_4(%arg0: i32, %arg1: i32) -> (i32, i32) {
    %c0_i32 = arith.constant 0 : i32
    %c0_i32_0 = arith.constant 0 : i32
    %c0_i32_1 = arith.constant 0 : i32
    return %c0_i32, %c0_i32_0 : i32, i32
  }
  func.func @transform_5(%arg0: i32, %arg1: i32) -> (i32, i32) {
    %c0_i32 = arith.constant 0 : i32
    %c0_i32_0 = arith.constant 0 : i32
    %c0_i32_1 = arith.constant 0 : i32
    return %c0_i32, %c0_i32_0 : i32, i32
  }
  func.func @transform_6(%arg0: i32, %arg1: i32) -> (i32, i32) {
    %c0_i32 = arith.constant 0 : i32
    %c0_i32_0 = arith.constant 0 : i32
    return %arg0, %c0_i32 : i32, i32
  }
}

module attributes {stable_mosaic.version = 11 : i64} {
  func.func @_fused_matmul_kernel(%arg0: i32, %arg1: i32, %arg2: memref<32x128xf32, #tpu.memory_space<vmem>>, %arg3: memref<128x256xf32, #tpu.memory_space<vmem>>, %arg4: memref<1x256xf32, #tpu.memory_space<vmem>>, %arg5: memref<32x256xf32, #tpu.memory_space<vmem>>, %arg6: memref<32x256xf32, #tpu.memory_space<vmem>>) attributes {dimension_semantics = [#tpu.dimension_semantics<parallel>, #tpu.dimension_semantics<arbitrary>], iteration_bounds = array<i64: 1, 1>, scalar_prefetch = 0 : i64, scratch_operands = 1 : i64, tpu.core_type = #tpu.core_type<tc>, window_params = [{transform_indices = @transform_0, window_bounds = array<i64: 32, 128>}, {transform_indices = @transform_1, window_bounds = array<i64: 128, 256>}, {pipeline_mode = #tpu.pipeline_mode<synchronous>, transform_indices = @transform_2, window_bounds = array<i64: 1, 256>}, {transform_indices = @transform_3, window_bounds = array<i64: 32, 256>}]} {
    %c0_i32 = arith.constant 0 : i32
    %0 = arith.cmpi eq, %arg1, %c0_i32 : i32
    %1 = arith.extui %0 : i1 to i32
    %c0_i32_0 = arith.constant 0 : i32
    %2 = arith.cmpi ne, %1, %c0_i32_0 : i32
    scf.if %2 {
      %cst_10 = arith.constant 0.000000e+00 : f32
      %12 = vector.broadcast %cst_10 : f32 to vector<32x256xf32>
      %c0_11 = arith.constant 0 : index
      %c0_12 = arith.constant 0 : index
      %13 = vector.load %arg6[%c0_11, %c0_12] : memref<32x256xf32, #tpu.memory_space<vmem>>, vector<32x256xf32>
      tpu.vector_store %arg6[%c0_11, %c0_12], %12 {strides = array<i32>} : memref<32x256xf32, #tpu.memory_space<vmem>>, vector<32x256xf32>,
    } else {
    }
    %c0 = arith.constant 0 : index
    %c0_1 = arith.constant 0 : index
    %3 = vector.load %arg6[%c0, %c0_1] : memref<32x256xf32, #tpu.memory_space<vmem>>, vector<32x256xf32>
    %c0_2 = arith.constant 0 : index
    %c0_3 = arith.constant 0 : index
    %4 = vector.load %arg2[%c0_2, %c0_3] : memref<32x128xf32, #tpu.memory_space<vmem>>, vector<32x128xf32>
    %c0_4 = arith.constant 0 : index
    %c0_5 = arith.constant 0 : index
    %5 = vector.load %arg3[%c0_4, %c0_5] : memref<128x256xf32, #tpu.memory_space<vmem>>, vector<128x256xf32>
    %cst = arith.constant dense<0.000000e+00> : vector<32x256xf32>
    %6 = tpu.matmul %4, %5, %cst {dimension_numbers = #tpu.dot_dimension_numbers<[1], [0], [0], [1], [0, 0, 1, 1], [], []>} : vector<32x128xf32>, vector<128x256xf32>, vector<32x256xf32> -> vector<32x256xf32>
    %7 = arith.addf %3, %6 : vector<32x256xf32>
    %c0_6 = arith.constant 0 : index
    %c0_7 = arith.constant 0 : index
    %8 = vector.load %arg6[%c0_6, %c0_7] : memref<32x256xf32, #tpu.memory_space<vmem>>, vector<32x256xf32>
    tpu.vector_store %arg6[%c0_6, %c0_7], %7 {strides = array<i32>} : memref<32x256xf32, #tpu.memory_space<vmem>>, vector<32x256xf32>,
    %c0_i32_8 = arith.constant 0 : i32
    %9 = arith.cmpi eq, %arg1, %c0_i32_8 : i32
    %10 = arith.extui %9 : i1 to i32
    %c0_i32_9 = arith.constant 0 : i32
    %11 = arith.cmpi ne, %10, %c0_i32_9 : i32
    scf.if %11 {
      %c0_10 = arith.constant 0 : index
      %c0_11 = arith.constant 0 : index
      %12 = vector.load %arg6[%c0_10, %c0_11] : memref<32x256xf32, #tpu.memory_space<vmem>>, vector<32x256xf32>
      %c0_12 = arith.constant 0 : index
      %c0_13 = arith.constant 0 : index
      %13 = vector.load %arg4[%c0_12, %c0_13] : memref<1x256xf32, #tpu.memory_space<vmem>>, vector<1x256xf32>
      %14 = vector.broadcast %13 : vector<1x256xf32> to vector<32x256xf32>
      %15 = arith.addf %12, %14 : vector<32x256xf32>
      %c0_14 = arith.constant 0 : index
      %c0_15 = arith.constant 0 : index
      %16 = vector.load %arg5[%c0_14, %c0_15] : memref<32x256xf32, #tpu.memory_space<vmem>>, vector<32x256xf32>
      tpu.vector_store %arg5[%c0_14, %c0_15], %15 {strides = array<i32>} : memref<32x256xf32, #tpu.memory_space<vmem>>, vector<32x256xf32>,
    } else {
    }
    return
  }
  func.func @transform_0(%arg0: i32, %arg1: i32) -> (i32, i32) {
    %c0_i32 = arith.constant 0 : i32
    return %arg0, %arg1 : i32, i32
  }
  func.func @transform_1(%arg0: i32, %arg1: i32) -> (i32, i32) {
    %c0_i32 = arith.constant 0 : i32
    %c0_i32_0 = arith.constant 0 : i32
    return %arg1, %c0_i32 : i32, i32
  }
  func.func @transform_2(%arg0: i32, %arg1: i32) -> (i32, i32) {
    %c0_i32 = arith.constant 0 : i32
    %c0_i32_0 = arith.constant 0 : i32
    %c0_i32_1 = arith.constant 0 : i32
    return %c0_i32, %c0_i32_0 : i32, i32
  }
  func.func @transform_3(%arg0: i32, %arg1: i32) -> (i32, i32) {
    %c0_i32 = arith.constant 0 : i32
    %c0_i32_0 = arith.constant 0 : i32
    return %arg0, %c0_i32 : i32, i32
  }
}

module attributes {stable_mosaic.version = 11 : i64} {
  func.func @_fused_matmul_kernel(%arg0: i32, %arg1: i32, %arg2: memref<32x128xf32, #tpu.memory_space<vmem>>, %arg3: memref<128x256xf32, #tpu.memory_space<vmem>>, %arg4: memref<1x256xf32, #tpu.memory_space<vmem>>, %arg5: memref<32x256xf32, #tpu.memory_space<vmem>>, %arg6: memref<32x256xf32, #tpu.memory_space<vmem>>) attributes {dimension_semantics = [#tpu.dimension_semantics<parallel>, #tpu.dimension_semantics<arbitrary>], iteration_bounds = array<i64: 1, 1>, scalar_prefetch = 0 : i64, scratch_operands = 1 : i64, tpu.core_type = #tpu.core_type<tc>, window_params = [{transform_indices = @transform_0, window_bounds = array<i64: 32, 128>}, {transform_indices = @transform_1, window_bounds = array<i64: 128, 256>}, {pipeline_mode = #tpu.pipeline_mode<synchronous>, transform_indices = @transform_2, window_bounds = array<i64: 1, 256>}, {transform_indices = @transform_3, window_bounds = array<i64: 32, 256>}]} {
    %c0_i32 = arith.constant 0 : i32
    %0 = arith.cmpi eq, %arg1, %c0_i32 : i32
    %1 = arith.extui %0 : i1 to i32
    %c0_i32_0 = arith.constant 0 : i32
    %2 = arith.cmpi ne, %1, %c0_i32_0 : i32
    scf.if %2 {
      %cst_10 = arith.constant 0.000000e+00 : f32
      %12 = vector.broadcast %cst_10 : f32 to vector<32x256xf32>
      %c0_11 = arith.constant 0 : index
      %c0_12 = arith.constant 0 : index
      %13 = vector.load %arg6[%c0_11, %c0_12] : memref<32x256xf32, #tpu.memory_space<vmem>>, vector<32x256xf32>
      tpu.vector_store %arg6[%c0_11, %c0_12], %12 {strides = array<i32>} : memref<32x256xf32, #tpu.memory_space<vmem>>, vector<32x256xf32>,
    } else {
    }
    %c0 = arith.constant 0 : index
    %c0_1 = arith.constant 0 : index
    %3 = vector.load %arg6[%c0, %c0_1] : memref<32x256xf32, #tpu.memory_space<vmem>>, vector<32x256xf32>
    %c0_2 = arith.constant 0 : index
    %c0_3 = arith.constant 0 : index
    %4 = vector.load %arg2[%c0_2, %c0_3] : memref<32x128xf32, #tpu.memory_space<vmem>>, vector<32x128xf32>
    %c0_4 = arith.constant 0 : index
    %c0_5 = arith.constant 0 : index
    %5 = vector.load %arg3[%c0_4, %c0_5] : memref<128x256xf32, #tpu.memory_space<vmem>>, vector<128x256xf32>
    %cst = arith.constant dense<0.000000e+00> : vector<32x256xf32>
    %6 = tpu.matmul %4, %5, %cst {dimension_numbers = #tpu.dot_dimension_numbers<[1], [0], [0], [1], [0, 0, 1, 1], [], []>} : vector<32x128xf32>, vector<128x256xf32>, vector<32x256xf32> -> vector<32x256xf32>
    %7 = arith.addf %3, %6 : vector<32x256xf32>
    %c0_6 = arith.constant 0 : index
    %c0_7 = arith.constant 0 : index
    %8 = vector.load %arg6[%c0_6, %c0_7] : memref<32x256xf32, #tpu.memory_space<vmem>>, vector<32x256xf32>
    tpu.vector_store %arg6[%c0_6, %c0_7], %7 {strides = array<i32>} : memref<32x256xf32, #tpu.memory_space<vmem>>, vector<32x256xf32>,
    %c0_i32_8 = arith.constant 0 : i32
    %9 = arith.cmpi eq, %arg1, %c0_i32_8 : i32
    %10 = arith.extui %9 : i1 to i32
    %c0_i32_9 = arith.constant 0 : i32
    %11 = arith.cmpi ne, %10, %c0_i32_9 : i32
    scf.if %11 {
      %c0_10 = arith.constant 0 : index
      %c0_11 = arith.constant 0 : index
      %12 = vector.load %arg6[%c0_10, %c0_11] : memref<32x256xf32, #tpu.memory_space<vmem>>, vector<32x256xf32>
      %c0_12 = arith.constant 0 : index
      %c0_13 = arith.constant 0 : index
      %13 = vector.load %arg4[%c0_12, %c0_13] : memref<1x256xf32, #tpu.memory_space<vmem>>, vector<1x256xf32>
      %14 = vector.broadcast %13 : vector<1x256xf32> to vector<32x256xf32>
      %15 = arith.addf %12, %14 : vector<32x256xf32>
      %cst_14 = arith.constant dense<0xFF800000> : vector<32xf32>
      %16 = vector.multi_reduction <maximumf>, %15, %cst_14 [1] : vector<32x256xf32> to vector<32xf32>
      %17 = vector.shape_cast %16 : vector<32xf32> to vector<32x1xf32>
      %18 = vector.broadcast %17 : vector<32x1xf32> to vector<32x256xf32>
      %19 = arith.subf %15, %18 : vector<32x256xf32>
      %20 = math.exp %19 : vector<32x256xf32>
      %cst_15 = arith.constant dense<0.000000e+00> : vector<32xf32>
      %21 = vector.multi_reduction <add>, %20, %cst_15 [1] : vector<32x256xf32> to vector<32xf32>
      %22 = vector.shape_cast %21 : vector<32xf32> to vector<32x1xf32>
      %23 = vector.broadcast %22 : vector<32x1xf32> to vector<32x256xf32>
      %24 = arith.divf %20, %23 : vector<32x256xf32>
      %c0_16 = arith.constant 0 : index
      %c0_17 = arith.constant 0 : index
      %25 = vector.load %arg5[%c0_16, %c0_17] : memref<32x256xf32, #tpu.memory_space<vmem>>, vector<32x256xf32>
      tpu.vector_store %arg5[%c0_16, %c0_17], %24 {strides = array<i32>} : memref<32x256xf32, #tpu.memory_space<vmem>>, vector<32x256xf32>,
    } else {
    }
    return
  }
  func.func @transform_0(%arg0: i32, %arg1: i32) -> (i32, i32) {
    %c0_i32 = arith.constant 0 : i32
    return %arg0, %arg1 : i32, i32
  }
  func.func @transform_1(%arg0: i32, %arg1: i32) -> (i32, i32) {
    %c0_i32 = arith.constant 0 : i32
    %c0_i32_0 = arith.constant 0 : i32
    return %arg1, %c0_i32 : i32, i32
  }
  func.func @transform_2(%arg0: i32, %arg1: i32) -> (i32, i32) {
    %c0_i32 = arith.constant 0 : i32
    %c0_i32_0 = arith.constant 0 : i32
    %c0_i32_1 = arith.constant 0 : i32
    return %c0_i32, %c0_i32_0 : i32, i32
  }
  func.func @transform_3(%arg0: i32, %arg1: i32) -> (i32, i32) {
    %c0_i32 = arith.constant 0 : i32
    %c0_i32_0 = arith.constant 0 : i32
    return %arg0, %c0_i32 : i32, i32
  }
}

</mosaic_0001>

<llo_original>
// kernel: transformer_forward.41
$region0: #{transformer_forward.41}
  #allocation0 [shape = 'u32[]', space=smem, size = 0x4, offset = 0x4, fixed_abs, tag = 'smem constant byte address 0x4 - core index']
  #allocation1 [shape = 'u32[144,128]{1,0:T(1,128)}', space=vmem, size = 0x12000, scoped, tag = 'internal scratch']
  #allocation2 [shape = 'f32[32,128]{1,0:T(8,128)}', space=vmem, size = 0x4000, scoped, tag = 'scratch operand']
  %s0 = inlined_call_operand.vmem [shape: f32[32,128], index: 0, kind: input, shape index: {}]
  %s1 = inlined_call_operand.vmem [shape: f32[128,128], index: 1, kind: input, shape index: {}]
  %s2 = inlined_call_operand.vmem [shape: f32[1,128], index: 2, kind: input, shape index: {}]
  %s3 = inlined_call_operand.vmem [shape: f32[32,128], index: 3, kind: input, shape index: {}]
  %s4 = inlined_call_operand.vmem [shape: f32[1,128], index: 4, kind: input, shape index: {}]
  %s5 = inlined_call_operand.vmem [shape: f32[1,128], index: 5, kind: input, shape index: {}]
  %s6 = inlined_call_operand.vmem [shape: f32[32,128], index: 6, kind: output, shape index: {}]
  %s7 = sld [smem:[#allocation0]]
  $region42: #{transformer_forward.41} parent=0
    _
  %s9 = ssub.s32 1, %s7
  %s10 = scalar_select 0, %s9, %s7
  // Predicated region
  $region2: #{transformer_forward.41} parent=0 // pred_check
    _
  $region3: #{transformer_forward.41} parent=0 // pred_check_branch
    %12 = sbr.rel (0) target = $region5
  $region4: #{transformer_forward.41} parent=0 // pred_region
    _
  $region5: #{transformer_forward.41} parent=0 // pred_fallthru
    _
  // Predicated region
  $region6: #{transformer_forward.41} parent=0 // pred_check
    _
  $region7: #{transformer_forward.41} parent=0 // pred_check_branch
    %14 = sbr.rel (0) target = $region9
  $region8: #{transformer_forward.41} parent=0 // pred_region
    _
  $region9: #{transformer_forward.41} parent=0 // pred_fallthru
    _
  // Predicated region
  $region10: #{transformer_forward.41} parent=0 // pred_check
    _
  $region11: #{transformer_forward.41} parent=0 // pred_check_branch
    %16 = sbr.rel (0) target = $region13
  $region12: #{transformer_forward.41} parent=0 // pred_region
    _
  $region13: #{transformer_forward.41} parent=0 // pred_fallthru
    _
  // Predicated region
  $region14: #{transformer_forward.41} parent=0 // pred_check
    _
  $region15: #{transformer_forward.41} parent=0 // pred_check_branch
    %18 = sbr.rel (0) target = $region17
  $region16: #{transformer_forward.41} parent=0 // pred_region
    _
  $region17: #{transformer_forward.41} parent=0 // pred_fallthru
    _
  // Predicated region
  $region18: #{transformer_forward.41} parent=0 // pred_check
    _
  $region19: #{transformer_forward.41} parent=0 // pred_check_branch
    %20 = sbr.rel (0) target = $region21
  $region20: #{transformer_forward.41} parent=0 // pred_region
    _
  $region21: #{transformer_forward.41} parent=0 // pred_fallthru
    _
  // Predicated region
  $region22: #{transformer_forward.41} parent=0 // pred_check
    _
  $region23: #{transformer_forward.41} parent=0 // pred_check_branch
    %22 = sbr.rel (0) target = $region25
  $region24: #{transformer_forward.41} parent=0 // pred_region
    _
  $region25: #{transformer_forward.41} parent=0 // pred_fallthru
    _
  %p23 = scmp.eq.s32.totalorder 0, 0
  // Predicated region
  $region26: #{transformer_forward.41} parent=0 // pred_check
    %p24 = pneg %p23
  $region27: #{transformer_forward.41} parent=0 // pred_check_branch
    %26 = sbr.rel (%p24) target = $region29
  $region28: #{transformer_forward.41} parent=0 // pred_region
    %27 = vst [vmem:[#allocation2] sm:$0xff] 0.0
    %28 = vst [vmem:[#allocation2 + $0x8] sm:$0xff] 0.0
    %29 = vst [vmem:[#allocation2 + $0x10] sm:$0xff] 0.0
    %30 = vst [vmem:[#allocation2 + $0x18] sm:$0xff] 0.0
  $region29: #{transformer_forward.41} parent=0 // pred_fallthru
    _
  %v31 = vld [vmem:[#allocation2] sm:$0xff]
  %v32 = vld [vmem:[#allocation2 + $0x8] sm:$0xff]
  %v33 = vld [vmem:[#allocation2 + $0x10] sm:$0xff]
  %v34 = vld [vmem:[#allocation2 + $0x18] sm:$0xff]
  %v35 = vld [vmem:[%s0] sm:$0xff]
  %v36 = vld [vmem:[%s0 + $0x8] sm:$0xff]
  %v37 = vld [vmem:[%s0 + $0x10] sm:$0xff]
  %v38 = vld [vmem:[%s0 + $0x18] sm:$0xff]
  %v39 = vld [vmem:[%s1] sm:$0xff]
  %v40 = vld [vmem:[%s1 + $0x8] sm:$0xff]
  %v41 = vld [vmem:[%s1 + $0x10] sm:$0xff]
  %v42 = vld [vmem:[%s1 + $0x18] sm:$0xff]
  %v43 = vld [vmem:[%s1 + $0x20] sm:$0xff]
  %v44 = vld [vmem:[%s1 + $0x28] sm:$0xff]
  %v45 = vld [vmem:[%s1 + $0x30] sm:$0xff]
  %v46 = vld [vmem:[%s1 + $0x38] sm:$0xff]
  %v47 = vld [vmem:[%s1 + $0x40] sm:$0xff]
  %v48 = vld [vmem:[%s1 + $0x48] sm:$0xff]
  %v49 = vld [vmem:[%s1 + $0x50] sm:$0xff]
  %v50 = vld [vmem:[%s1 + $0x58] sm:$0xff]
  %v51 = vld [vmem:[%s1 + $0x60] sm:$0xff]
  %v52 = vld [vmem:[%s1 + $0x68] sm:$0xff]
  %v53 = vld [vmem:[%s1 + $0x70] sm:$0xff]
  %v54 = vld [vmem:[%s1 + $0x78] sm:$0xff]
  %55 = vmatprep.subr.mxu0 0.0
  %56 = vmatpush1.msra.mxu0 %v39
  %57 = vmatprep.subr.mxu0 0.0
  %58 = vmatpush1.msra.mxu0 %v40
  %59 = vmatprep.subr.mxu0 0.0
  %60 = vmatpush1.msra.mxu0 %v41
  %61 = vmatprep.subr.mxu0 0.0
  %62 = vmatpush1.msra.mxu0 %v42
  %63 = vmatprep.subr.mxu0 0.0
  %64 = vmatpush1.msra.mxu0 %v43
  %65 = vmatprep.subr.mxu0 0.0
  %66 = vmatpush1.msra.mxu0 %v44
  %67 = vmatprep.subr.mxu0 0.0
  %68 = vmatpush1.msra.mxu0 %v45
  %69 = vmatprep.subr.mxu0 0.0
  %70 = vmatpush1.msra.mxu0 %v46
  %71 = vmatprep.subr.mxu0 0.0
  %72 = vmatpush1.msra.mxu0 %v47
  %73 = vmatprep.subr.mxu0 0.0
  %74 = vmatpush1.msra.mxu0 %v48
  %75 = vmatprep.subr.mxu0 0.0
  %76 = vmatpush1.msra.mxu0 %v49
  %77 = vmatprep.subr.mxu0 0.0
  %78 = vmatpush1.msra.mxu0 %v50
  %79 = vmatprep.subr.mxu0 0.0
  %80 = vmatpush1.msra.mxu0 %v51
  %81 = vmatprep.subr.mxu0 0.0
  %82 = vmatpush1.msra.mxu0 %v52
  %83 = vmatprep.subr.mxu0 0.0
  %84 = vmatpush1.msra.mxu0 %v53
  %85 = vmatprep.subr.mxu0 0.0
  %86 = vmatpush1.msra.mxu0 %v54
  %87 = vmatprep.subr.mxu0 0.0
  %88 = vmatpush1.msra.mxu0 0.0
  %89 = vmatprep.subr.mxu0 0.0
  %90 = vmatpush1.msra.mxu0 0.0
  %91 = vmatprep.subr.mxu0 0.0
  %92 = vmatpush1.msra.mxu0 0.0
  %93 = vmatprep.subr.mxu0 0.0
  %94 = vmatpush1.msra.mxu0 0.0
  %95 = vmatprep.subr.mxu0 0.0
  %96 = vmatpush1.msra.mxu0 0.0
  %97 = vmatprep.subr.mxu0 0.0
  %98 = vmatpush1.msra.mxu0 0.0
  %99 = vmatprep.subr.mxu0 0.0
  %100 = vmatpush1.msra.mxu0 0.0
  %101 = vmatprep.subr.mxu0 0.0
  %102 = vmatpush1.msra.mxu0 0.0
  %103 = vmatprep.subr.mxu0 0.0
  %104 = vmatpush1.msra.mxu0 0.0
  %105 = vmatprep.subr.mxu0 0.0
  %106 = vmatpush1.msra.mxu0 0.0
  %107 = vmatprep.subr.mxu0 0.0
  %108 = vmatpush1.msra.mxu0 0.0
  %109 = vmatprep.subr.mxu0 0.0
  %110 = vmatpush1.msra.mxu0 0.0
  %111 = vmatprep.subr.mxu0 0.0
  %112 = vmatpush1.msra.mxu0 0.0
  %113 = vmatprep.subr.mxu0 0.0
  %114 = vmatpush1.msra.mxu0 0.0
  %115 = vmatprep.subr.mxu0 0.0
  %116 = vmatpush1.msra.mxu0 0.0
  %117 = vmatprep.subr.mxu0 0.0
  %118 = vmatpush1.msra.mxu0 0.0
  %119 = vmatprep.mubr.f32.mxu0 0.0
  %120 = vmatmul.mubr.f32.gmra.mrb[0].mxu0 %v35
  %v121 = vpop.f32.mrb[0].mxu0
  %v122 = vadd.f32 0.0, %v121
  %v123 = vpop.f32.mrb[0].mxu0
  %124 = vmatprep.mubr.f32.mxu0 0.0
  %125 = vmatmul.mubr.f32.gmra.mrb[0].mxu0 %v36
  %v126 = vpop.f32.mrb[0].mxu0
  %v127 = vadd.f32 0.0, %v126
  %v128 = vpop.f32.mrb[0].mxu0
  %129 = vmatprep.mubr.f32.mxu0 0.0
  %130 = vmatmul.mubr.f32.gmra.mrb[0].mxu0 %v37
  %v131 = vpop.f32.mrb[0].mxu0
  %v132 = vadd.f32 0.0, %v131
  %v133 = vpop.f32.mrb[0].mxu0
  %134 = vmatprep.mubr.f32.mxu0 0.0
  %135 = vmatmul.mubr.f32.gmra.mrb[0].mxu0 %v38
  %v136 = vpop.f32.mrb[0].mxu0
  %v137 = vadd.f32 0.0, %v136
  %v138 = vpop.f32.mrb[0].mxu0
  %139 = vdwg.mxu0
  %v140 = vadd.f32 %v31, %v122
  %v141 = vadd.f32 %v32, %v127
  %v142 = vadd.f32 %v33, %v132
  %v143 = vadd.f32 %v34, %v137
  %144 = vst [vmem:[#allocation2] sm:$0xff] %v140
  %145 = vst [vmem:[#allocation2 + $0x8] sm:$0xff] %v141
  %146 = vst [vmem:[#allocation2 + $0x10] sm:$0xff] %v142
  %147 = vst [vmem:[#allocation2 + $0x18] sm:$0xff] %v143
  // Predicated region
  $region30: #{transformer_forward.41} parent=0 // pred_check
    %p148 = pneg %p23
  $region31: #{transformer_forward.41} parent=0 // pred_check_branch
    %150 = sbr.rel (%p148) target = $region33
  $region32: #{transformer_forward.41} parent=0 // pred_region
    %v151 = vld [vmem:[#allocation2] sm:$0xff]
    %v152 = vld [vmem:[#allocation2 + $0x8] sm:$0xff]
    %v153 = vld [vmem:[#allocation2 + $0x10] sm:$0xff]
    %v154 = vld [vmem:[#allocation2 + $0x18] sm:$0xff]
    %v155 = vld [vmem:[%s2] sm:$0x1]
    %v157 = vlaneseq
    %v158 = vshrl.u32 %v157, 7
    %v159 = vsub.s32 0, %v158
    %v160 = vrot.slane %v155, %v159
    %v162 = vadd.f32 %v151, %v160
    %v163 = vadd.f32 %v152, %v160
    %v164 = vadd.f32 %v153, %v160
    %v165 = vadd.f32 %v154, %v160
    %v166 = vld [vmem:[%s3] sm:$0xff]
    %v167 = vld [vmem:[%s3 + $0x8] sm:$0xff]
    %v168 = vld [vmem:[%s3 + $0x10] sm:$0xff]
    %v169 = vld [vmem:[%s3 + $0x18] sm:$0xff]
    %v170 = vadd.f32 %v162, %v166
    %v171 = vadd.f32 %v163, %v167
    %v172 = vadd.f32 %v164, %v168
    %v173 = vadd.f32 %v165, %v169
    %174 = vadd.xlane.f32.xlu0 %v170
    %v175 = vpop.xlane.xlu0 %174
    %176 = vadd.xlane.f32.xlu0 %v171
    %v177 = vpop.xlane.xlu0 %176
    %178 = vadd.xlane.f32.xlu0 %v172
    %v179 = vpop.xlane.xlu0 %178
    %180 = vadd.xlane.f32.xlu0 %v173
    %v181 = vpop.xlane.xlu0 %180
    %v182 = vrcp.pop 128.0
    %v183 = vmul.f32 %v175, %v182
    %v184 = vmul.f32 %v177, %v182
    %v185 = vmul.f32 %v179, %v182
    %v186 = vmul.f32 %v181, %v182
    %v187 = vsub.f32 %v170, %v183
    %v188 = vsub.f32 %v171, %v184
    %v189 = vsub.f32 %v172, %v185
    %v190 = vsub.f32 %v173, %v186
    %v191 = vmul.f32 %v187, %v187
    %v192 = vmul.f32 %v188, %v188
    %v193 = vmul.f32 %v189, %v189
    %v194 = vmul.f32 %v190, %v190
    %195 = vadd.xlane.f32.xlu0 %v191
    %v196 = vpop.xlane.xlu0 %195
    %197 = vadd.xlane.f32.xlu0 %v192
    %v198 = vpop.xlane.xlu0 %197
    %199 = vadd.xlane.f32.xlu0 %v193
    %v200 = vpop.xlane.xlu0 %199
    %201 = vadd.xlane.f32.xlu0 %v194
    %v202 = vpop.xlane.xlu0 %201
    %v203 = vmul.f32 %v196, %v182
    %v204 = vmul.f32 %v198, %v182
    %v205 = vmul.f32 %v200, %v182
    %v206 = vmul.f32 %v202, %v182
    %v207 = vadd.f32 %v203, 1e-12
    %v208 = vadd.f32 %v204, 1e-12
    %v209 = vadd.f32 %v205, 1e-12
    %v210 = vadd.f32 %v206, 1e-12
    %v211 = vrsqrt.pop %v207
    %v212 = vrsqrt.pop %v208
    %v213 = vrsqrt.pop %v209
    %v214 = vrsqrt.pop %v210
    %v215 = vmul.f32 %v187, %v211
    %v216 = vmul.f32 %v188, %v212
    %v217 = vmul.f32 %v189, %v213
    %v218 = vmul.f32 %v190, %v214
    %v219 = vld [vmem:[%s4] sm:$0x1]
    %v221 = vlaneseq
    %v222 = vshrl.u32 %v221, 7
    %v223 = vsub.s32 0, %v222
    %v224 = vrot.slane %v219, %v223
    %v226 = vmul.f32 %v215, %v224
    %v227 = vmul.f32 %v216, %v224
    %v228 = vmul.f32 %v217, %v224
    %v229 = vmul.f32 %v218, %v224
    %v230 = vld [vmem:[%s5] sm:$0x1]
    %v232 = vlaneseq
    %v233 = vshrl.u32 %v232, 7
    %v234 = vsub.s32 0, %v233
    %v235 = vrot.slane %v230, %v234
    %v237 = vadd.f32 %v226, %v235
    %v238 = vadd.f32 %v227, %v235
    %v239 = vadd.f32 %v228, %v235
    %v240 = vadd.f32 %v229, %v235
    %241 = vst [vmem:[%s6] sm:$0xff] %v237
    %242 = vst [vmem:[%s6 + $0x8] sm:$0xff] %v238
    %243 = vst [vmem:[%s6 + $0x10] sm:$0xff] %v239
    %244 = vst [vmem:[%s6 + $0x18] sm:$0xff] %v240
  $region33: #{transformer_forward.41} parent=0 // pred_fallthru
    _
  // Predicated region
  $region34: #{transformer_forward.41} parent=0 // pred_check
    _
  $region35: #{transformer_forward.41} parent=0 // pred_check_branch
    %246 = sbr.rel (0) target = $region37
  $region36: #{transformer_forward.41} parent=0 // pred_region
    _
  $region37: #{transformer_forward.41} parent=0 // pred_fallthru
    _
  // Predicated region
  $region38: #{transformer_forward.41} parent=0 // pred_check
    _
  $region39: #{transformer_forward.41} parent=0 // pred_check_branch
    %248 = sbr.rel (0) target = $region41
  $region40: #{transformer_forward.41} parent=0 // pred_region
    _
  $region41: #{transformer_forward.41} parent=0 // pred_fallthru
    _

// kernel: transformer_forward.42
$region0: #{transformer_forward.42}
  #allocation0 [shape = 'u32[]', space=smem, size = 0x4, offset = 0x4, fixed_abs, tag = 'smem constant byte address 0x4 - core index']
  #allocation1 [shape = 'u32[144,128]{1,0:T(1,128)}', space=vmem, size = 0x12000, scoped, tag = 'internal scratch']
  #allocation2 [shape = 'f32[32,128]{1,0:T(8,128)}', space=vmem, size = 0x4000, scoped, tag = 'scratch operand']
  %s0 = inlined_call_operand.vmem [shape: f32[32,128], index: 0, kind: input, shape index: {}]
  %s1 = inlined_call_operand.vmem [shape: f32[128,128], index: 1, kind: input, shape index: {}]
  %s2 = inlined_call_operand.vmem [shape: f32[1,128], index: 2, kind: input, shape index: {}]
  %s3 = inlined_call_operand.vmem [shape: f32[32,128], index: 3, kind: output, shape index: {}]
  %s4 = sld [smem:[#allocation0]]
  $region30: #{transformer_forward.42} parent=0
    _
  %s6 = ssub.s32 1, %s4
  %s7 = scalar_select 0, %s6, %s4
  // Predicated region
  $region2: #{transformer_forward.42} parent=0 // pred_check
    _
  $region3: #{transformer_forward.42} parent=0 // pred_check_branch
    %9 = sbr.rel (0) target = $region5
  $region4: #{transformer_forward.42} parent=0 // pred_region
    _
  $region5: #{transformer_forward.42} parent=0 // pred_fallthru
    _
  // Predicated region
  $region6: #{transformer_forward.42} parent=0 // pred_check
    _
  $region7: #{transformer_forward.42} parent=0 // pred_check_branch
    %11 = sbr.rel (0) target = $region9
  $region8: #{transformer_forward.42} parent=0 // pred_region
    _
  $region9: #{transformer_forward.42} parent=0 // pred_fallthru
    _
  // Predicated region
  $region10: #{transformer_forward.42} parent=0 // pred_check
    _
  $region11: #{transformer_forward.42} parent=0 // pred_check_branch
    %13 = sbr.rel (0) target = $region13
  $region12: #{transformer_forward.42} parent=0 // pred_region
    _
  $region13: #{transformer_forward.42} parent=0 // pred_fallthru
    _
  %p14 = scmp.eq.s32.totalorder 0, 0
  // Predicated region
  $region14: #{transformer_forward.42} parent=0 // pred_check
    %p15 = pneg %p14
  $region15: #{transformer_forward.42} parent=0 // pred_check_branch
    %17 = sbr.rel (%p15) target = $region17
  $region16: #{transformer_forward.42} parent=0 // pred_region
    %18 = vst [vmem:[#allocation2] sm:$0xff] 0.0
    %19 = vst [vmem:[#allocation2 + $0x8] sm:$0xff] 0.0
    %20 = vst [vmem:[#allocation2 + $0x10] sm:$0xff] 0.0
    %21 = vst [vmem:[#allocation2 + $0x18] sm:$0xff] 0.0
  $region17: #{transformer_forward.42} parent=0 // pred_fallthru
    _
  %v22 = vld [vmem:[#allocation2] sm:$0xff]
  %v23 = vld [vmem:[#allocation2 + $0x8] sm:$0xff]
  %v24 = vld [vmem:[#allocation2 + $0x10] sm:$0xff]
  %v25 = vld [vmem:[#allocation2 + $0x18] sm:$0xff]
  %v26 = vld [vmem:[%s0] sm:$0xff]
  %v27 = vld [vmem:[%s0 + $0x8] sm:$0xff]
  %v28 = vld [vmem:[%s0 + $0x10] sm:$0xff]
  %v29 = vld [vmem:[%s0 + $0x18] sm:$0xff]
  %v30 = vld [vmem:[%s1] sm:$0xff]
  %v31 = vld [vmem:[%s1 + $0x8] sm:$0xff]
  %v32 = vld [vmem:[%s1 + $0x10] sm:$0xff]
  %v33 = vld [vmem:[%s1 + $0x18] sm:$0xff]
  %v34 = vld [vmem:[%s1 + $0x20] sm:$0xff]
  %v35 = vld [vmem:[%s1 + $0x28] sm:$0xff]
  %v36 = vld [vmem:[%s1 + $0x30] sm:$0xff]
  %v37 = vld [vmem:[%s1 + $0x38] sm:$0xff]
  %v38 = vld [vmem:[%s1 + $0x40] sm:$0xff]
  %v39 = vld [vmem:[%s1 + $0x48] sm:$0xff]
  %v40 = vld [vmem:[%s1 + $0x50] sm:$0xff]
  %v41 = vld [vmem:[%s1 + $0x58] sm:$0xff]
  %v42 = vld [vmem:[%s1 + $0x60] sm:$0xff]
  %v43 = vld [vmem:[%s1 + $0x68] sm:$0xff]
  %v44 = vld [vmem:[%s1 + $0x70] sm:$0xff]
  %v45 = vld [vmem:[%s1 + $0x78] sm:$0xff]
  %46 = vmatprep.subr.mxu0 0.0
  %47 = vmatpush1.msra.mxu0 %v30
  %48 = vmatprep.subr.mxu0 0.0
  %49 = vmatpush1.msra.mxu0 %v31
  %50 = vmatprep.subr.mxu0 0.0
  %51 = vmatpush1.msra.mxu0 %v32
  %52 = vmatprep.subr.mxu0 0.0
  %53 = vmatpush1.msra.mxu0 %v33
  %54 = vmatprep.subr.mxu0 0.0
  %55 = vmatpush1.msra.mxu0 %v34
  %56 = vmatprep.subr.mxu0 0.0
  %57 = vmatpush1.msra.mxu0 %v35
  %58 = vmatprep.subr.mxu0 0.0
  %59 = vmatpush1.msra.mxu0 %v36
  %60 = vmatprep.subr.mxu0 0.0
  %61 = vmatpush1.msra.mxu0 %v37
  %62 = vmatprep.subr.mxu0 0.0
  %63 = vmatpush1.msra.mxu0 %v38
  %64 = vmatprep.subr.mxu0 0.0
  %65 = vmatpush1.msra.mxu0 %v39
  %66 = vmatprep.subr.mxu0 0.0
  %67 = vmatpush1.msra.mxu0 %v40
  %68 = vmatprep.subr.mxu0 0.0
  %69 = vmatpush1.msra.mxu0 %v41
  %70 = vmatprep.subr.mxu0 0.0
  %71 = vmatpush1.msra.mxu0 %v42
  %72 = vmatprep.subr.mxu0 0.0
  %73 = vmatpush1.msra.mxu0 %v43
  %74 = vmatprep.subr.mxu0 0.0
  %75 = vmatpush1.msra.mxu0 %v44
  %76 = vmatprep.subr.mxu0 0.0
  %77 = vmatpush1.msra.mxu0 %v45
  %78 = vmatprep.subr.mxu0 0.0
  %79 = vmatpush1.msra.mxu0 0.0
  %80 = vmatprep.subr.mxu0 0.0
  %81 = vmatpush1.msra.mxu0 0.0
  %82 = vmatprep.subr.mxu0 0.0
  %83 = vmatpush1.msra.mxu0 0.0
  %84 = vmatprep.subr.mxu0 0.0
  %85 = vmatpush1.msra.mxu0 0.0
  %86 = vmatprep.subr.mxu0 0.0
  %87 = vmatpush1.msra.mxu0 0.0
  %88 = vmatprep.subr.mxu0 0.0
  %89 = vmatpush1.msra.mxu0 0.0
  %90 = vmatprep.subr.mxu0 0.0
  %91 = vmatpush1.msra.mxu0 0.0
  %92 = vmatprep.subr.mxu0 0.0
  %93 = vmatpush1.msra.mxu0 0.0
  %94 = vmatprep.subr.mxu0 0.0
  %95 = vmatpush1.msra.mxu0 0.0
  %96 = vmatprep.subr.mxu0 0.0
  %97 = vmatpush1.msra.mxu0 0.0
  %98 = vmatprep.subr.mxu0 0.0
  %99 = vmatpush1.msra.mxu0 0.0
  %100 = vmatprep.subr.mxu0 0.0
  %101 = vmatpush1.msra.mxu0 0.0
  %102 = vmatprep.subr.mxu0 0.0
  %103 = vmatpush1.msra.mxu0 0.0
  %104 = vmatprep.subr.mxu0 0.0
  %105 = vmatpush1.msra.mxu0 0.0
  %106 = vmatprep.subr.mxu0 0.0
  %107 = vmatpush1.msra.mxu0 0.0
  %108 = vmatprep.subr.mxu0 0.0
  %109 = vmatpush1.msra.mxu0 0.0
  %110 = vmatprep.mubr.f32.mxu0 0.0
  %111 = vmatmul.mubr.f32.gmra.mrb[0].mxu0 %v26
  %v112 = vpop.f32.mrb[0].mxu0
  %v113 = vadd.f32 0.0, %v112
  %v114 = vpop.f32.mrb[0].mxu0
  %115 = vmatprep.mubr.f32.mxu0 0.0
  %116 = vmatmul.mubr.f32.gmra.mrb[0].mxu0 %v27
  %v117 = vpop.f32.mrb[0].mxu0
  %v118 = vadd.f32 0.0, %v117
  %v119 = vpop.f32.mrb[0].mxu0
  %120 = vmatprep.mubr.f32.mxu0 0.0
  %121 = vmatmul.mubr.f32.gmra.mrb[0].mxu0 %v28
  %v122 = vpop.f32.mrb[0].mxu0
  %v123 = vadd.f32 0.0, %v122
  %v124 = vpop.f32.mrb[0].mxu0
  %125 = vmatprep.mubr.f32.mxu0 0.0
  %126 = vmatmul.mubr.f32.gmra.mrb[0].mxu0 %v29
  %v127 = vpop.f32.mrb[0].mxu0
  %v128 = vadd.f32 0.0, %v127
  %v129 = vpop.f32.mrb[0].mxu0
  %130 = vdwg.mxu0
  %v131 = vadd.f32 %v22, %v113
  %v132 = vadd.f32 %v23, %v118
  %v133 = vadd.f32 %v24, %v123
  %v134 = vadd.f32 %v25, %v128
  %135 = vst [vmem:[#allocation2] sm:$0xff] %v131
  %136 = vst [vmem:[#allocation2 + $0x8] sm:$0xff] %v132
  %137 = vst [vmem:[#allocation2 + $0x10] sm:$0xff] %v133
  %138 = vst [vmem:[#allocation2 + $0x18] sm:$0xff] %v134
  // Predicated region
  $region18: #{transformer_forward.42} parent=0 // pred_check
    %p139 = pneg %p14
  $region19: #{transformer_forward.42} parent=0 // pred_check_branch
    %141 = sbr.rel (%p139) target = $region21
  $region20: #{transformer_forward.42} parent=0 // pred_region
    %v142 = vld [vmem:[#allocation2] sm:$0xff]
    %v143 = vld [vmem:[#allocation2 + $0x8] sm:$0xff]
    %v144 = vld [vmem:[#allocation2 + $0x10] sm:$0xff]
    %v145 = vld [vmem:[#allocation2 + $0x18] sm:$0xff]
    %v146 = vld [vmem:[%s2] sm:$0x1]
    %v148 = vlaneseq
    %v149 = vshrl.u32 %v148, 7
    %v150 = vsub.s32 0, %v149
    %v151 = vrot.slane %v146, %v150
    %v153 = vadd.f32 %v142, %v151
    %v154 = vadd.f32 %v143, %v151
    %v155 = vadd.f32 %v144, %v151
    %v156 = vadd.f32 %v145, %v151
    %157 = vst [vmem:[%s3] sm:$0xff] %v153
    %158 = vst [vmem:[%s3 + $0x8] sm:$0xff] %v154
    %159 = vst [vmem:[%s3 + $0x10] sm:$0xff] %v155
    %160 = vst [vmem:[%s3 + $0x18] sm:$0xff] %v156
  $region21: #{transformer_forward.42} parent=0 // pred_fallthru
    _
  // Predicated region
  $region22: #{transformer_forward.42} parent=0 // pred_check
    _
  $region23: #{transformer_forward.42} parent=0 // pred_check_branch
    %162 = sbr.rel (0) target = $region25
  $region24: #{transformer_forward.42} parent=0 // pred_region
    _
  $region25: #{transformer_forward.42} parent=0 // pred_fallthru
    _
  // Predicated region
  $region26: #{transformer_forward.42} parent=0 // pred_check
    _
  $region27: #{transformer_forward.42} parent=0 // pred_check_branch
    %164 = sbr.rel (0) target = $region29
  $region28: #{transformer_forward.42} parent=0 // pred_region
    _
  $region29: #{transformer_forward.42} parent=0 // pred_fallthru
    _

// kernel: transformer_forward.39
$region0: #{transformer_forward.39}
  #allocation0 [shape = 'u32[]', space=smem, size = 0x4, offset = 0x4, fixed_abs, tag = 'smem constant byte address 0x4 - core index']
  #allocation1 [shape = 'u32[144,128]{1,0:T(1,128)}', space=vmem, size = 0x12000, scoped, tag = 'internal scratch']
  #allocation2 [shape = 'f32[32,384]{1,0:T(8,128)}', space=vmem, size = 0xc000, scoped, tag = 'scratch operand']
  %s0 = inlined_call_operand.vmem [shape: f32[32,128], index: 0, kind: input, shape index: {}]
  %s1 = inlined_call_operand.vmem [shape: f32[128,384], index: 1, kind: input, shape index: {}]
  %s2 = inlined_call_operand.vmem [shape: f32[1,384], index: 2, kind: input, shape index: {}]
  %s3 = inlined_call_operand.vmem [shape: f32[32,384], index: 3, kind: output, shape index: {}]
  %s4 = sld [smem:[#allocation0]]
  $region30: #{transformer_forward.39} parent=0
    _
  %s6 = ssub.s32 1, %s4
  %s7 = scalar_select 0, %s6, %s4
  // Predicated region
  $region2: #{transformer_forward.39} parent=0 // pred_check
    _
  $region3: #{transformer_forward.39} parent=0 // pred_check_branch
    %9 = sbr.rel (0) target = $region5
  $region4: #{transformer_forward.39} parent=0 // pred_region
    _
  $region5: #{transformer_forward.39} parent=0 // pred_fallthru
    _
  // Predicated region
  $region6: #{transformer_forward.39} parent=0 // pred_check
    _
  $region7: #{transformer_forward.39} parent=0 // pred_check_branch
    %11 = sbr.rel (0) target = $region9
  $region8: #{transformer_forward.39} parent=0 // pred_region
    _
  $region9: #{transformer_forward.39} parent=0 // pred_fallthru
    _
  // Predicated region
  $region10: #{transformer_forward.39} parent=0 // pred_check
    _
  $region11: #{transformer_forward.39} parent=0 // pred_check_branch
    %13 = sbr.rel (0) target = $region13
  $region12: #{transformer_forward.39} parent=0 // pred_region
    _
  $region13: #{transformer_forward.39} parent=0 // pred_fallthru
    _
  %p14 = scmp.eq.s32.totalorder 0, 0
  // Predicated region
  $region14: #{transformer_forward.39} parent=0 // pred_check
    %p15 = pneg %p14
  $region15: #{transformer_forward.39} parent=0 // pred_check_branch
    %17 = sbr.rel (%p15) target = $region17
  $region16: #{transformer_forward.39} parent=0 // pred_region
    %18 = vst [vmem:[#allocation2] sm:$0xff] 0.0
    %19 = vst [vmem:[#allocation2 + $0x8] sm:$0xff] 0.0
    %20 = vst [vmem:[#allocation2 + $0x10] sm:$0xff] 0.0
    %21 = vst [vmem:[#allocation2 + $0x18] sm:$0xff] 0.0
    %22 = vst [vmem:[#allocation2 + $0x20] sm:$0xff] 0.0
    %23 = vst [vmem:[#allocation2 + $0x28] sm:$0xff] 0.0
    %24 = vst [vmem:[#allocation2 + $0x30] sm:$0xff] 0.0
    %25 = vst [vmem:[#allocation2 + $0x38] sm:$0xff] 0.0
    %26 = vst [vmem:[#allocation2 + $0x40] sm:$0xff] 0.0
    %27 = vst [vmem:[#allocation2 + $0x48] sm:$0xff] 0.0
    %28 = vst [vmem:[#allocation2 + $0x50] sm:$0xff] 0.0
    %29 = vst [vmem:[#allocation2 + $0x58] sm:$0xff] 0.0
  $region17: #{transformer_forward.39} parent=0 // pred_fallthru
    _
  %v30 = vld [vmem:[#allocation2] sm:$0xff]
  %v31 = vld [vmem:[#allocation2 + $0x8] sm:$0xff]
  %v32 = vld [vmem:[#allocation2 + $0x10] sm:$0xff]
  %v33 = vld [vmem:[#allocation2 + $0x18] sm:$0xff]
  %v34 = vld [vmem:[#allocation2 + $0x20] sm:$0xff]
  %v35 = vld [vmem:[#allocation2 + $0x28] sm:$0xff]
  %v36 = vld [vmem:[#allocation2 + $0x30] sm:$0xff]
  %v37 = vld [vmem:[#allocation2 + $0x38] sm:$0xff]
  %v38 = vld [vmem:[#allocation2 + $0x40] sm:$0xff]
  %v39 = vld [vmem:[#allocation2 + $0x48] sm:$0xff]
  %v40 = vld [vmem:[#allocation2 + $0x50] sm:$0xff]
  %v41 = vld [vmem:[#allocation2 + $0x58] sm:$0xff]
  %v42 = vld [vmem:[%s0] sm:$0xff]
  %v43 = vld [vmem:[%s0 + $0x8] sm:$0xff]
  %v44 = vld [vmem:[%s0 + $0x10] sm:$0xff]
  %v45 = vld [vmem:[%s0 + $0x18] sm:$0xff]
  %v46 = vld [vmem:[%s1] sm:$0xff]
  %v47 = vld [vmem:[%s1 + $0x8] sm:$0xff]
  %v48 = vld [vmem:[%s1 + $0x10] sm:$0xff]
  %v49 = vld [vmem:[%s1 + $0x18] sm:$0xff]
  %v50 = vld [vmem:[%s1 + $0x20] sm:$0xff]
  %v51 = vld [vmem:[%s1 + $0x28] sm:$0xff]
  %v52 = vld [vmem:[%s1 + $0x30] sm:$0xff]
  %v53 = vld [vmem:[%s1 + $0x38] sm:$0xff]
  %v54 = vld [vmem:[%s1 + $0x40] sm:$0xff]
  %v55 = vld [vmem:[%s1 + $0x48] sm:$0xff]
  %v56 = vld [vmem:[%s1 + $0x50] sm:$0xff]
  %v57 = vld [vmem:[%s1 + $0x58] sm:$0xff]
  %v58 = vld [vmem:[%s1 + $0x60] sm:$0xff]
  %v59 = vld [vmem:[%s1 + $0x68] sm:$0xff]
  %v60 = vld [vmem:[%s1 + $0x70] sm:$0xff]
  %v61 = vld [vmem:[%s1 + $0x78] sm:$0xff]
  %v62 = vld [vmem:[%s1 + $0x80] sm:$0xff]
  %v63 = vld [vmem:[%s1 + $0x88] sm:$0xff]
  %v64 = vld [vmem:[%s1 + $0x90] sm:$0xff]
  %v65 = vld [vmem:[%s1 + $0x98] sm:$0xff]
  %v66 = vld [vmem:[%s1 + $0xa0] sm:$0xff]
  %v67 = vld [vmem:[%s1 + $0xa8] sm:$0xff]
  %v68 = vld [vmem:[%s1 + $0xb0] sm:$0xff]
  %v69 = vld [vmem:[%s1 + $0xb8] sm:$0xff]
  %v70 = vld [vmem:[%s1 + $0xc0] sm:$0xff]
  %v71 = vld [vmem:[%s1 + $0xc8] sm:$0xff]
  %v72 = vld [vmem:[%s1 + $0xd0] sm:$0xff]
  %v73 = vld [vmem:[%s1 + $0xd8] sm:$0xff]
  %v74 = vld [vmem:[%s1 + $0xe0] sm:$0xff]
  %v75 = vld [vmem:[%s1 + $0xe8] sm:$0xff]
  %v76 = vld [vmem:[%s1 + $0xf0] sm:$0xff]
  %v77 = vld [vmem:[%s1 + $0xf8] sm:$0xff]
  %v78 = vld [vmem:[%s1 + $0x100] sm:$0xff]
  %v79 = vld [vmem:[%s1 + $0x108] sm:$0xff]
  %v80 = vld [vmem:[%s1 + $0x110] sm:$0xff]
  %v81 = vld [vmem:[%s1 + $0x118] sm:$0xff]
  %v82 = vld [vmem:[%s1 + $0x120] sm:$0xff]
  %v83 = vld [vmem:[%s1 + $0x128] sm:$0xff]
  %v84 = vld [vmem:[%s1 + $0x130] sm:$0xff]
  %v85 = vld [vmem:[%s1 + $0x138] sm:$0xff]
  %v86 = vld [vmem:[%s1 + $0x140] sm:$0xff]
  %v87 = vld [vmem:[%s1 + $0x148] sm:$0xff]
  %v88 = vld [vmem:[%s1 + $0x150] sm:$0xff]
  %v89 = vld [vmem:[%s1 + $0x158] sm:$0xff]
  %v90 = vld [vmem:[%s1 + $0x160] sm:$0xff]
  %v91 = vld [vmem:[%s1 + $0x168] sm:$0xff]
  %v92 = vld [vmem:[%s1 + $0x170] sm:$0xff]
  %v93 = vld [vmem:[%s1 + $0x178] sm:$0xff]
  %94 = vmatprep.subr.mxu0 %v47
  %95 = vmatpush1.msra.mxu0 %v46
  %96 = vmatprep.subr.mxu0 %v50
  %97 = vmatpush1.msra.mxu0 %v49
  %98 = vmatprep.subr.mxu0 %v53
  %99 = vmatpush1.msra.mxu0 %v52
  %100 = vmatprep.subr.mxu0 %v56
  %101 = vmatpush1.msra.mxu0 %v55
  %102 = vmatprep.subr.mxu0 %v59
  %103 = vmatpush1.msra.mxu0 %v58
  %104 = vmatprep.subr.mxu0 %v62
  %105 = vmatpush1.msra.mxu0 %v61
  %106 = vmatprep.subr.mxu0 %v65
  %107 = vmatpush1.msra.mxu0 %v64
  %108 = vmatprep.subr.mxu0 %v68
  %109 = vmatpush1.msra.mxu0 %v67
  %110 = vmatprep.subr.mxu0 %v71
  %111 = vmatpush1.msra.mxu0 %v70
  %112 = vmatprep.subr.mxu0 %v74
  %113 = vmatpush1.msra.mxu0 %v73
  %114 = vmatprep.subr.mxu0 %v77
  %115 = vmatpush1.msra.mxu0 %v76
  %116 = vmatprep.subr.mxu0 %v80
  %117 = vmatpush1.msra.mxu0 %v79
  %118 = vmatprep.subr.mxu0 %v83
  %119 = vmatpush1.msra.mxu0 %v82
  %120 = vmatprep.subr.mxu0 %v86
  %121 = vmatpush1.msra.mxu0 %v85
  %122 = vmatprep.subr.mxu0 %v89
  %123 = vmatpush1.msra.mxu0 %v88
  %124 = vmatprep.subr.mxu0 %v92
  %125 = vmatpush1.msra.mxu0 %v91
  %126 = vmatprep.subr.mxu0 0.0
  %127 = vmatpush1.msra.mxu0 0.0
  %128 = vmatprep.subr.mxu0 0.0
  %129 = vmatpush1.msra.mxu0 0.0
  %130 = vmatprep.subr.mxu0 0.0
  %131 = vmatpush1.msra.mxu0 0.0
  %132 = vmatprep.subr.mxu0 0.0
  %133 = vmatpush1.msra.mxu0 0.0
  %134 = vmatprep.subr.mxu0 0.0
  %135 = vmatpush1.msra.mxu0 0.0
  %136 = vmatprep.subr.mxu0 0.0
  %137 = vmatpush1.msra.mxu0 0.0
  %138 = vmatprep.subr.mxu0 0.0
  %139 = vmatpush1.msra.mxu0 0.0
  %140 = vmatprep.subr.mxu0 0.0
  %141 = vmatpush1.msra.mxu0 0.0
  %142 = vmatprep.subr.mxu0 0.0
  %143 = vmatpush1.msra.mxu0 0.0
  %144 = vmatprep.subr.mxu0 0.0
  %145 = vmatpush1.msra.mxu0 0.0
  %146 = vmatprep.subr.mxu0 0.0
  %147 = vmatpush1.msra.mxu0 0.0
  %148 = vmatprep.subr.mxu0 0.0
  %149 = vmatpush1.msra.mxu0 0.0
  %150 = vmatprep.subr.mxu0 0.0
  %151 = vmatpush1.msra.mxu0 0.0
  %152 = vmatprep.subr.mxu0 0.0
  %153 = vmatpush1.msra.mxu0 0.0
  %154 = vmatprep.subr.mxu0 0.0
  %155 = vmatpush1.msra.mxu0 0.0
  %156 = vmatprep.subr.mxu0 0.0
  %157 = vmatpush1.msra.mxu0 0.0
  %158 = vmatprep.mubr.f32.mxu0 0.0
  %159 = vmatmul.mubr.f32.gmra.mrb[0].mxu0 %v42
  %v160 = vpop.f32.mrb[0].mxu0
  %v161 = vadd.f32 0.0, %v160
  %v162 = vpop.f32.mrb[0].mxu0
  %v163 = vadd.f32 0.0, %v162
  %164 = vmatprep.mubr.f32.mxu0 0.0
  %165 = vmatmul.mubr.f32.gmra.mrb[0].mxu0 %v43
  %v166 = vpop.f32.mrb[0].mxu0
  %v167 = vadd.f32 0.0, %v166
  %v168 = vpop.f32.mrb[0].mxu0
  %v169 = vadd.f32 0.0, %v168
  %170 = vmatprep.mubr.f32.mxu0 0.0
  %171 = vmatmul.mubr.f32.gmra.mrb[0].mxu0 %v44
  %v172 = vpop.f32.mrb[0].mxu0
  %v173 = vadd.f32 0.0, %v172
  %v174 = vpop.f32.mrb[0].mxu0
  %v175 = vadd.f32 0.0, %v174
  %176 = vmatprep.mubr.f32.mxu0 0.0
  %177 = vmatmul.mubr.f32.gmra.mrb[0].mxu0 %v45
  %v178 = vpop.f32.mrb[0].mxu0
  %v179 = vadd.f32 0.0, %v178
  %v180 = vpop.f32.mrb[0].mxu0
  %v181 = vadd.f32 0.0, %v180
  %182 = vdwg.mxu0
  %183 = vmatprep.subr.mxu0 0.0
  %184 = vmatpush1.msra.mxu0 %v48
  %185 = vmatprep.subr.mxu0 0.0
  %186 = vmatpush1.msra.mxu0 %v51
  %187 = vmatprep.subr.mxu0 0.0
  %188 = vmatpush1.msra.mxu0 %v54
  %189 = vmatprep.subr.mxu0 0.0
  %190 = vmatpush1.msra.mxu0 %v57
  %191 = vmatprep.subr.mxu0 0.0
  %192 = vmatpush1.msra.mxu0 %v60
  %193 = vmatprep.subr.mxu0 0.0
  %194 = vmatpush1.msra.mxu0 %v63
  %195 = vmatprep.subr.mxu0 0.0
  %196 = vmatpush1.msra.mxu0 %v66
  %197 = vmatprep.subr.mxu0 0.0
  %198 = vmatpush1.msra.mxu0 %v69
  %199 = vmatprep.subr.mxu0 0.0
  %200 = vmatpush1.msra.mxu0 %v72
  %201 = vmatprep.subr.mxu0 0.0
  %202 = vmatpush1.msra.mxu0 %v75
  %203 = vmatprep.subr.mxu0 0.0
  %204 = vmatpush1.msra.mxu0 %v78
  %205 = vmatprep.subr.mxu0 0.0
  %206 = vmatpush1.msra.mxu0 %v81
  %207 = vmatprep.subr.mxu0 0.0
  %208 = vmatpush1.msra.mxu0 %v84
  %209 = vmatprep.subr.mxu0 0.0
  %210 = vmatpush1.msra.mxu0 %v87
  %211 = vmatprep.subr.mxu0 0.0
  %212 = vmatpush1.msra.mxu0 %v90
  %213 = vmatprep.subr.mxu0 0.0
  %214 = vmatpush1.msra.mxu0 %v93
  %215 = vmatprep.subr.mxu0 0.0
  %216 = vmatpush1.msra.mxu0 0.0
  %217 = vmatprep.subr.mxu0 0.0
  %218 = vmatpush1.msra.mxu0 0.0
  %219 = vmatprep.subr.mxu0 0.0
  %220 = vmatpush1.msra.mxu0 0.0
  %221 = vmatprep.subr.mxu0 0.0
  %222 = vmatpush1.msra.mxu0 0.0
  %223 = vmatprep.subr.mxu0 0.0
  %224 = vmatpush1.msra.mxu0 0.0
  %225 = vmatprep.subr.mxu0 0.0
  %226 = vmatpush1.msra.mxu0 0.0
  %227 = vmatprep.subr.mxu0 0.0
  %228 = vmatpush1.msra.mxu0 0.0
  %229 = vmatprep.subr.mxu0 0.0
  %230 = vmatpush1.msra.mxu0 0.0
  %231 = vmatprep.subr.mxu0 0.0
  %232 = vmatpush1.msra.mxu0 0.0
  %233 = vmatprep.subr.mxu0 0.0
  %234 = vmatpush1.msra.mxu0 0.0
  %235 = vmatprep.subr.mxu0 0.0
  %236 = vmatpush1.msra.mxu0 0.0
  %237 = vmatprep.subr.mxu0 0.0
  %238 = vmatpush1.msra.mxu0 0.0
  %239 = vmatprep.subr.mxu0 0.0
  %240 = vmatpush1.msra.mxu0 0.0
  %241 = vmatprep.subr.mxu0 0.0
  %242 = vmatpush1.msra.mxu0 0.0
  %243 = vmatprep.subr.mxu0 0.0
  %244 = vmatpush1.msra.mxu0 0.0
  %245 = vmatprep.subr.mxu0 0.0
  %246 = vmatpush1.msra.mxu0 0.0
  %247 = vmatprep.mubr.f32.mxu0 0.0
  %248 = vmatmul.mubr.f32.gmra.mrb[0].mxu0 %v42
  %v249 = vpop.f32.mrb[0].mxu0
  %v250 = vadd.f32 0.0, %v249
  %v251 = vpop.f32.mrb[0].mxu0
  %252 = vmatprep.mubr.f32.mxu0 0.0
  %253 = vmatmul.mubr.f32.gmra.mrb[0].mxu0 %v43
  %v254 = vpop.f32.mrb[0].mxu0
  %v255 = vadd.f32 0.0, %v254
  %v256 = vpop.f32.mrb[0].mxu0
  %257 = vmatprep.mubr.f32.mxu0 0.0
  %258 = vmatmul.mubr.f32.gmra.mrb[0].mxu0 %v44
  %v259 = vpop.f32.mrb[0].mxu0
  %v260 = vadd.f32 0.0, %v259
  %v261 = vpop.f32.mrb[0].mxu0
  %262 = vmatprep.mubr.f32.mxu0 0.0
  %263 = vmatmul.mubr.f32.gmra.mrb[0].mxu0 %v45
  %v264 = vpop.f32.mrb[0].mxu0
  %v265 = vadd.f32 0.0, %v264
  %v266 = vpop.f32.mrb[0].mxu0
  %267 = vdwg.mxu0
  %v268 = vadd.f32 %v30, %v161
  %v269 = vadd.f32 %v31, %v163
  %v270 = vadd.f32 %v32, %v250
  %v271 = vadd.f32 %v33, %v167
  %v272 = vadd.f32 %v34, %v169
  %v273 = vadd.f32 %v35, %v255
  %v274 = vadd.f32 %v36, %v173
  %v275 = vadd.f32 %v37, %v175
  %v276 = vadd.f32 %v38, %v260
  %v277 = vadd.f32 %v39, %v179
  %v278 = vadd.f32 %v40, %v181
  %v279 = vadd.f32 %v41, %v265
  %280 = vst [vmem:[#allocation2] sm:$0xff] %v268
  %281 = vst [vmem:[#allocation2 + $0x8] sm:$0xff] %v269
  %282 = vst [vmem:[#allocation2 + $0x10] sm:$0xff] %v270
  %283 = vst [vmem:[#allocation2 + $0x18] sm:$0xff] %v271
  %284 = vst [vmem:[#allocation2 + $0x20] sm:$0xff] %v272
  %285 = vst [vmem:[#allocation2 + $0x28] sm:$0xff] %v273
  %286 = vst [vmem:[#allocation2 + $0x30] sm:$0xff] %v274
  %287 = vst [vmem:[#allocation2 + $0x38] sm:$0xff] %v275
  %288 = vst [vmem:[#allocation2 + $0x40] sm:$0xff] %v276
  %289 = vst [vmem:[#allocation2 + $0x48] sm:$0xff] %v277
  %290 = vst [vmem:[#allocation2 + $0x50] sm:$0xff] %v278
  %291 = vst [vmem:[#allocation2 + $0x58] sm:$0xff] %v279
  // Predicated region
  $region18: #{transformer_forward.39} parent=0 // pred_check
    %p292 = pneg %p14
  $region19: #{transformer_forward.39} parent=0 // pred_check_branch
    %294 = sbr.rel (%p292) target = $region21
  $region20: #{transformer_forward.39} parent=0 // pred_region
    %v295 = vld [vmem:[#allocation2] sm:$0xff]
    %v296 = vld [vmem:[#allocation2 + $0x8] sm:$0xff]
    %v297 = vld [vmem:[#allocation2 + $0x10] sm:$0xff]
    %v298 = vld [vmem:[#allocation2 + $0x18] sm:$0xff]
    %v299 = vld [vmem:[#allocation2 + $0x20] sm:$0xff]
    %v300 = vld [vmem:[#allocation2 + $0x28] sm:$0xff]
    %v301 = vld [vmem:[#allocation2 + $0x30] sm:$0xff]
    %v302 = vld [vmem:[#allocation2 + $0x38] sm:$0xff]
    %v303 = vld [vmem:[#allocation2 + $0x40] sm:$0xff]
    %v304 = vld [vmem:[#allocation2 + $0x48] sm:$0xff]
    %v305 = vld [vmem:[#allocation2 + $0x50] sm:$0xff]
    %v306 = vld [vmem:[#allocation2 + $0x58] sm:$0xff]
    %v307 = vld [vmem:[%s2] sm:$0x7]
    %v309 = vlaneseq
    %v310 = vshrl.u32 %v309, 7
    %v311 = vsub.s32 0, %v310
    %v312 = vrot.slane %v307, %v311
    %v313 = vlaneseq
    %v314 = vshrl.u32 %v313, 7
    %v315 = vsub.s32 1, %v314
    %v316 = vrot.slane %v307, %v315
    %v317 = vlaneseq
    %v318 = vshrl.u32 %v317, 7
    %v319 = vsub.s32 2, %v318
    %v320 = vrot.slane %v307, %v319
    %v324 = vadd.f32 %v295, %v312
    %v325 = vadd.f32 %v296, %v316
    %v326 = vadd.f32 %v297, %v320
    %v327 = vadd.f32 %v298, %v312
    %v328 = vadd.f32 %v299, %v316
    %v329 = vadd.f32 %v300, %v320
    %v330 = vadd.f32 %v301, %v312
    %v331 = vadd.f32 %v302, %v316
    %v332 = vadd.f32 %v303, %v320
    %v333 = vadd.f32 %v304, %v312
    %v334 = vadd.f32 %v305, %v316
    %v335 = vadd.f32 %v306, %v320
    %336 = vst [vmem:[%s3] sm:$0xff] %v324
    %337 = vst [vmem:[%s3 + $0x8] sm:$0xff] %v325
    %338 = vst [vmem:[%s3 + $0x10] sm:$0xff] %v326
    %339 = vst [vmem:[%s3 + $0x18] sm:$0xff] %v327
    %340 = vst [vmem:[%s3 + $0x20] sm:$0xff] %v328
    %341 = vst [vmem:[%s3 + $0x28] sm:$0xff] %v329
    %342 = vst [vmem:[%s3 + $0x30] sm:$0xff] %v330
    %343 = vst [vmem:[%s3 + $0x38] sm:$0xff] %v331
    %344 = vst [vmem:[%s3 + $0x40] sm:$0xff] %v332
    %345 = vst [vmem:[%s3 + $0x48] sm:$0xff] %v333
    %346 = vst [vmem:[%s3 + $0x50] sm:$0xff] %v334
    %347 = vst [vmem:[%s3 + $0x58] sm:$0xff] %v335
  $region21: #{transformer_forward.39} parent=0 // pred_fallthru
    _
  // Predicated region
  $region22: #{transformer_forward.39} parent=0 // pred_check
    _
  $region23: #{transformer_forward.39} parent=0 // pred_check_branch
    %349 = sbr.rel (0) target = $region25
  $region24: #{transformer_forward.39} parent=0 // pred_region
    _
  $region25: #{transformer_forward.39} parent=0 // pred_fallthru
    _
  // Predicated region
  $region26: #{transformer_forward.39} parent=0 // pred_check
    _
  $region27: #{transformer_forward.39} parent=0 // pred_check_branch
    %351 = sbr.rel (0) target = $region29
  $region28: #{transformer_forward.39} parent=0 // pred_region
    _
  $region29: #{transformer_forward.39} parent=0 // pred_fallthru
    _

// kernel: transformer_forward.40
$region0: #{transformer_forward.40}
  #allocation0 [shape = 'u32[]', space=smem, size = 0x4, offset = 0x4, fixed_abs, tag = 'smem constant byte address 0x4 - core index']
  #allocation1 [shape = 'u32[144,128]{1,0:T(1,128)}', space=vmem, size = 0x12000, scoped, tag = 'internal scratch']
  %s0 = inlined_call_operand.vmem [shape: f32[2,16,128], index: 0, kind: input, shape index: {}]
  %s1 = inlined_call_operand.vmem [shape: f32[2,16,256], index: 1, kind: input, shape index: {}]
  %s2 = inlined_call_operand.vmem [shape: f32[2,16,128], index: 2, kind: output, shape index: {}]
  %s3 = sld [smem:[#allocation0]]
  $region41: #{transformer_forward.40} parent=0
    _
  %s5 = ssub.s32 1, %s3
  %s6 = scalar_select 0, %s5, %s3
  loop: start=0, step=1, limit=4
  $region2: #{transformer_forward.40} parent=0 // loop_pre_header
    _
  $region3: #{transformer_forward.40} parent=0 // loop_header
    %s8 = sphi 0, %s12
    %p9 = scmp.ge.s32.totalorder %s8, 4
    %s18 = sphi 0, %s20
    %s21 = sphi 0, %s18
    %s22 = sphi 0, %s21
    %s38 = sphi 0, %s22
    %s44 = sphi 0, %s46
    %s47 = sphi 0, %s44
    %s48 = sphi 0, %s47
    %s64 = sphi 0, %s48
    %s70 = sphi 0, %s72
    %s73 = sphi 0, %s70
    %s74 = sphi 0, %s73
    %s90 = sphi 0, %s74
  $region4: #{transformer_forward.40} parent=0 // loop_header_branch
    %11 = sbr.rel (%p9) target = $region8
  $region5: #{transformer_forward.40} parent=0 // loop_body
    %s13 = ssub.s32 %s8, 1
    %s14 = ssub.s32 %s8, 2
    %s15 = sadd.s32 %s8, 1
    %s16 = ssub.s32 %s8, %s15
    %p17 = scmp.eq.s32.totalorder %s16, 0
    %s19 = sadd.s32 %s18, 1
    %s20 = scalar_select %p17, %s18, %s19
    %p23 = pneg %p17
    %p24 = scmp.eq.s32.totalorder %s8, 1
    %p25 = por %p23, %p24
    %p26 = scmp.ne.s32.totalorder %s18, %s21
    %p27 = scmp.eq.s32.totalorder %s8, 0
    %p28 = por %p26, %p27
    %p29 = scmp.ne.s32.totalorder %s18, %s21
    %p30 = scmp.eq.s32.totalorder %s13, 1
    %p31 = por %p29, %p30
    %p32 = scmp.ne.s32.totalorder %s21, %s22
    %p33 = scmp.eq.s32.totalorder %s13, 0
    %p34 = por %p32, %p33
    %p35 = scmp.ne.s32.totalorder %s21, %s22
    %p36 = scmp.eq.s32.totalorder %s14, 1
    %p37 = por %p35, %p36
    %p39 = scmp.ne.s32.totalorder %s22, %s38
    %p40 = scmp.eq.s32.totalorder %s14, 0
    %p41 = por %p39, %p40
    %s42 = ssub.s32 %s8, %s15
    %p43 = scmp.eq.s32.totalorder %s42, 0
    %s45 = sadd.s32 %s44, 1
    %s46 = scalar_select %p43, %s44, %s45
    %p49 = pneg %p43
    %p50 = scmp.eq.s32.totalorder %s8, 1
    %p51 = por %p49, %p50
    %p52 = scmp.ne.s32.totalorder %s44, %s47
    %p53 = scmp.eq.s32.totalorder %s8, 0
    %p54 = por %p52, %p53
    %p55 = scmp.ne.s32.totalorder %s44, %s47
    %p56 = scmp.eq.s32.totalorder %s13, 1
    %p57 = por %p55, %p56
    %p58 = scmp.ne.s32.totalorder %s47, %s48
    %p59 = scmp.eq.s32.totalorder %s13, 0
    %p60 = por %p58, %p59
    %p61 = scmp.ne.s32.totalorder %s47, %s48
    %p62 = scmp.eq.s32.totalorder %s14, 1
    %p63 = por %p61, %p62
    %p65 = scmp.ne.s32.totalorder %s48, %s64
    %p66 = scmp.eq.s32.totalorder %s14, 0
    %p67 = por %p65, %p66
    %s68 = ssub.s32 %s8, %s15
    %p69 = scmp.eq.s32.totalorder %s68, 0
    %s71 = sadd.s32 %s70, 1
    %s72 = scalar_select %p69, %s70, %s71
    %p75 = pneg %p69
    %p76 = scmp.eq.s32.totalorder %s8, 1
    %p77 = por %p75, %p76
    %p78 = scmp.ne.s32.totalorder %s70, %s73
    %p79 = scmp.eq.s32.totalorder %s8, 0
    %p80 = por %p78, %p79
    %p81 = scmp.ne.s32.totalorder %s70, %s73
    %p82 = scmp.eq.s32.totalorder %s13, 1
    %p83 = por %p81, %p82
    %p84 = scmp.ne.s32.totalorder %s73, %s74
    %p85 = scmp.eq.s32.totalorder %s13, 0
    %p86 = por %p84, %p85
    %p87 = scmp.ne.s32.totalorder %s73, %s74
    %p88 = scmp.eq.s32.totalorder %s14, 1
    %p89 = por %p87, %p88
    %p91 = scmp.ne.s32.totalorder %s74, %s90
    %p92 = scmp.eq.s32.totalorder %s14, 0
    %p93 = por %p91, %p92
    %p94 = scmp.le.s32.totalorder 1, %s8
    %p95 = scmp.lt.s32.totalorder %s8, 3
    %p96 = pnand %p94, %p95
    %p97 = pneg %p96
    // Predicated region
    $region9: #{transformer_forward.40} parent=5 // pred_check
      _
    $region10: #{transformer_forward.40} parent=5 // pred_check_branch
      %99 = sbr.rel (%p96) target = $region12
    $region11: #{transformer_forward.40} parent=5 // pred_region
      %s100 = ssub.s32 %s8, 1
    $region12: #{transformer_forward.40} parent=5 // pred_fallthru
      _
    %p101 = scmp.lt.s32.totalorder %s8, 2
    // Predicated region
    $region13: #{transformer_forward.40} parent=5 // pred_check
      %p102 = pneg %p101
    $region14: #{transformer_forward.40} parent=5 // pred_check_branch
      %104 = sbr.rel (%p102) target = $region16
    $region15: #{transformer_forward.40} parent=5 // pred_region
      // Predicated region
      $region17: #{transformer_forward.40} parent=15 // pred_check
        %p105 = pneg %p28
      $region18: #{transformer_forward.40} parent=15 // pred_check_branch
        %107 = sbr.rel (%p105) target = $region20
      $region19: #{transformer_forward.40} parent=15 // pred_region
        %p108 = scmp.lt.s32.totalorder %s8, 1
        %s109 = scalar_select %p108, %s8, 1
        %s110 = smul.addr %s109, 2
        %s111 = smul.addr %s110, 8
        %s112 = scalar_lea.vmem %s0, %s111
      $region20: #{transformer_forward.40} parent=15 // pred_fallthru
        _
      // Predicated region
      $region21: #{transformer_forward.40} parent=15 // pred_check
        %p113 = pneg %p54
      $region22: #{transformer_forward.40} parent=15 // pred_check_branch
        %115 = sbr.rel (%p113) target = $region24
      $region23: #{transformer_forward.40} parent=15 // pred_region
        %p116 = scmp.lt.s32.totalorder %s8, 1
        %s117 = scalar_select %p116, %s8, 1
        %s118 = smul.addr %s117, 4
        %s119 = smul.addr %s118, 8
        %s120 = scalar_lea.vmem %s1, %s119
      $region24: #{transformer_forward.40} parent=15 // pred_fallthru
        _
    $region16: #{transformer_forward.40} parent=5 // pred_fallthru
      _
    %p121 = scmp.le.s32.totalorder 1, %s8
    %p122 = scmp.lt.s32.totalorder %s8, 3
    %p123 = pnand %p121, %p122
    %p124 = pneg %p123
    // Predicated region
    $region25: #{transformer_forward.40} parent=5 // pred_check
      _
    $region26: #{transformer_forward.40} parent=5 // pred_check_branch
      %126 = sbr.rel (%p123) target = $region28
    $region27: #{transformer_forward.40} parent=5 // pred_region
      %s127 = ssub.s32 %s8, 1
      %p128 = scmp.lt.s32.totalorder %s13, 1
      %s129 = scalar_select %p128, %s13, 1
      %s130 = smul.addr %s129, 2
      %s131 = smul.addr %s130, 8
      %s132 = scalar_lea.vmem %s0, %s131
      %p133 = pneg %p34
      %p134 = pneg %p31
      %p135 = scmp.lt.s32.totalorder %s13, 1
      %s136 = scalar_select %p135, %s13, 1
      %s137 = smul.addr %s136, 4
      %s138 = smul.addr %s137, 8
      %s139 = scalar_lea.vmem %s1, %s138
      %p140 = pneg %p60
      %p141 = pneg %p57
      %p142 = pneg %p86
      %p143 = pneg %p83
      %p144 = scmp.lt.s32.totalorder %s13, 1
      %s145 = scalar_select %p144, %s13, 1
      %s146 = smul.addr %s145, 2
      %s147 = smul.addr %s146, 8
      %s148 = scalar_lea.vmem %s2, %s147
      %p149 = scmp.lt.s32.totalorder %s13, 1
      %s150 = scalar_select %p149, %s13, 1
      %s151 = smul.addr %s150, 2
      %s152 = smul.addr %s151, 8
      %s153 = scalar_lea.vmem %s0, %s152
      %p154 = scmp.lt.s32.totalorder %s13, 1
      %s155 = scalar_select %p154, %s13, 1
      %s156 = smul.addr %s155, 4
      %s157 = smul.addr %s156, 8
      %s158 = scalar_lea.vmem %s1, %s157
      %p159 = scmp.lt.s32.totalorder %s13, 1
      %s160 = scalar_select %p159, %s13, 1
      %s161 = smul.addr %s160, 2
      %s162 = smul.addr %s161, 8
      %s163 = scalar_lea.vmem %s2, %s162
      %v164 = vld [vmem:[%s153] sm:$0xff]
      %v165 = vld [vmem:[%s153 + $0x8] sm:$0xff]
      %v166 = vld [vmem:[%s158] sm:$0xff]
      %v167 = vld [vmem:[%s158 + $0x8] sm:$0xff]
      %v168 = vld [vmem:[%s158 + $0x10] sm:$0xff]
      %v169 = vld [vmem:[%s158 + $0x18] sm:$0xff]
      %v170 = vlaneseq
      %v171 = vshrl.u32 %v170, 7
      %v172 = vadd.s32 %v171, 8
      %v173 = vlaneseq
      %v174 = vand.u32 %v173, 127
      %vm175 = vcmp.le.s32.totalorder %v174, %v171
      %vm176 = vcmp.le.s32.totalorder %v174, %v172
      %vm177 = vcmask 261120
      %v179 = vsel %vm177, %v164, 0
      %v182 = vsel %vm177, %v165, 0
      %v185 = vsel %vm177, %v166, 0
      %v188 = vsel %vm177, %v168, 0
      %190 = vmatprep.subr.mxu0 0.0
      %191 = vmatpush1.xpose.msra.mxu0 %v185
      %192 = vmatprep.subr.mxu0 0.0
      %193 = vmatpush1.xpose.msra.mxu0 %v188
      %194 = vmatprep.subr.mxu0 0.0
      %195 = vmatpush1.xpose.msra.mxu0 0.0
      %196 = vmatprep.subr.mxu0 0.0
      %197 = vmatpush1.xpose.msra.mxu0 0.0
      %198 = vmatprep.subr.mxu0 0.0
      %199 = vmatpush1.xpose.msra.mxu0 0.0
      %200 = vmatprep.subr.mxu0 0.0
      %201 = vmatpush1.xpose.msra.mxu0 0.0
      %202 = vmatprep.subr.mxu0 0.0
      %203 = vmatpush1.xpose.msra.mxu0 0.0
      %204 = vmatprep.subr.mxu0 0.0
      %205 = vmatpush1.xpose.msra.mxu0 0.0
      %206 = vmatprep.subr.mxu0 0.0
      %207 = vmatpush1.xpose.msra.mxu0 0.0
      %208 = vmatprep.subr.mxu0 0.0
      %209 = vmatpush1.xpose.msra.mxu0 0.0
      %210 = vmatprep.subr.mxu0 0.0
      %211 = vmatpush1.xpose.msra.mxu0 0.0
      %212 = vmatprep.subr.mxu0 0.0
      %213 = vmatpush1.xpose.msra.mxu0 0.0
      %214 = vmatprep.subr.mxu0 0.0
      %215 = vmatpush1.xpose.msra.mxu0 0.0
      %216 = vmatprep.subr.mxu0 0.0
      %217 = vmatpush1.xpose.msra.mxu0 0.0
      %218 = vmatprep.subr.mxu0 0.0
      %219 = vmatpush1.xpose.msra.mxu0 0.0
      %220 = vmatprep.subr.mxu0 0.0
      %221 = vmatpush1.xpose.msra.mxu0 0.0
      %222 = vmatprep.subr.mxu0 0.0
      %223 = vmatpush1.xpose.msra.mxu0 0.0
      %224 = vmatprep.subr.mxu0 0.0
      %225 = vmatpush1.xpose.msra.mxu0 0.0
      %226 = vmatprep.subr.mxu0 0.0
      %227 = vmatpush1.xpose.msra.mxu0 0.0
      %228 = vmatprep.subr.mxu0 0.0
      %229 = vmatpush1.xpose.msra.mxu0 0.0
      %230 = vmatprep.subr.mxu0 0.0
      %231 = vmatpush1.xpose.msra.mxu0 0.0
      %232 = vmatprep.subr.mxu0 0.0
      %233 = vmatpush1.xpose.msra.mxu0 0.0
      %234 = vmatprep.subr.mxu0 0.0
      %235 = vmatpush1.xpose.msra.mxu0 0.0
      %236 = vmatprep.subr.mxu0 0.0
      %237 = vmatpush1.xpose.msra.mxu0 0.0
      %238 = vmatprep.subr.mxu0 0.0
      %239 = vmatpush1.xpose.msra.mxu0 0.0
      %240 = vmatprep.subr.mxu0 0.0
      %241 = vmatpush1.xpose.msra.mxu0 0.0
      %242 = vmatprep.subr.mxu0 0.0
      %243 = vmatpush1.xpose.msra.mxu0 0.0
      %244 = vmatprep.subr.mxu0 0.0
      %245 = vmatpush1.xpose.msra.mxu0 0.0
      %246 = vmatprep.subr.mxu0 0.0
      %247 = vmatpush1.xpose.msra.mxu0 0.0
      %248 = vmatprep.subr.mxu0 0.0
      %249 = vmatpush1.xpose.msra.mxu0 0.0
      %250 = vmatprep.subr.mxu0 0.0
      %251 = vmatpush1.xpose.msra.mxu0 0.0
      %252 = vmatprep.subr.mxu0 0.0
      %253 = vmatpush1.xpose.msra.mxu0 0.0
      %254 = vmatprep.mubr.f32.mxu0 0.0
      %255 = vmatmul.mubr.f32.gmra.mrb[0].mxu0 %v179
      %v256 = vpop.f32.mrb[0].mxu0
      %v257 = vadd.f32 0.0, %v256
      %v258 = vpop.f32.mrb[0].mxu0
      %259 = vmatprep.mubr.f32.mxu0 0.0
      %260 = vmatmul.mubr.f32.gmra.mrb[0].mxu0 %v182
      %v261 = vpop.f32.mrb[0].mxu0
      %v262 = vadd.f32 0.0, %v261
      %v263 = vpop.f32.mrb[0].mxu0
      %264 = vdwg.mxu0
      %v265 = vmul.f32 %v257, 0.17677669
      %v266 = vmul.f32 %v262, 0.17677669
      %v267 = vsel %vm175, %v265, -1e+30
      %v268 = vsel %vm176, %v266, -1e+30
      %vm269 = vcmask 130048
      %v270 = vsel %vm269, %v267, -inf
      %271 = vmax.xlane.f32.xlu0 %v270
      %v272 = vpop.xlane.xlu0 %271
      %v273 = vsel %vm269, %v268, -inf
      %274 = vmax.xlane.f32.xlu0 %v273
      %v275 = vpop.xlane.xlu0 %274
      %v276 = vsub.f32 %v267, %v272
      %v277 = vsub.f32 %v268, %v275
      %v278 = vmul.f32 %v276, 1.442695
      %v279 = vpow.pop %v278
      %v280 = vmul.f32 %v277, 1.442695
      %v281 = vpow.pop %v280
      %v282 = vsel %vm269, %v279, 0.0
      %283 = vadd.xlane.f32.xlu0 %v282
      %v284 = vpop.xlane.xlu0 %283
      %v285 = vsel %vm269, %v281, 0.0
      %286 = vadd.xlane.f32.xlu0 %v285
      %v287 = vpop.xlane.xlu0 %286
      %v288 = vrcp.pop %v284
      %v289 = vrcp.pop %v287
      %v290 = vmul.f32 %v279, %v288
      %v291 = vmul.f32 %v281, %v289
      %v293 = vsel %vm269, %v290, 0
      %v296 = vsel %vm269, %v291, 0
      %298 = vmatprep.subr.mxu0 0.0
      %299 = vmatpush1.msra.mxu0 %v167
      %300 = vmatprep.subr.mxu0 0.0
      %301 = vmatpush1.msra.mxu0 %v169
      %302 = vmatprep.subr.mxu0 0.0
      %303 = vmatpush1.msra.mxu0 0.0
      %304 = vmatprep.subr.mxu0 0.0
      %305 = vmatpush1.msra.mxu0 0.0
      %306 = vmatprep.subr.mxu0 0.0
      %307 = vmatpush1.msra.mxu0 0.0
      %308 = vmatprep.subr.mxu0 0.0
      %309 = vmatpush1.msra.mxu0 0.0
      %310 = vmatprep.subr.mxu0 0.0
      %311 = vmatpush1.msra.mxu0 0.0
      %312 = vmatprep.subr.mxu0 0.0
      %313 = vmatpush1.msra.mxu0 0.0
      %314 = vmatprep.subr.mxu0 0.0
      %315 = vmatpush1.msra.mxu0 0.0
      %316 = vmatprep.subr.mxu0 0.0
      %317 = vmatpush1.msra.mxu0 0.0
      %318 = vmatprep.subr.mxu0 0.0
      %319 = vmatpush1.msra.mxu0 0.0
      %320 = vmatprep.subr.mxu0 0.0
      %321 = vmatpush1.msra.mxu0 0.0
      %322 = vmatprep.subr.mxu0 0.0
      %323 = vmatpush1.msra.mxu0 0.0
      %324 = vmatprep.subr.mxu0 0.0
      %325 = vmatpush1.msra.mxu0 0.0
      %326 = vmatprep.subr.mxu0 0.0
      %327 = vmatpush1.msra.mxu0 0.0
      %328 = vmatprep.subr.mxu0 0.0
      %329 = vmatpush1.msra.mxu0 0.0
      %330 = vmatprep.subr.mxu0 0.0
      %331 = vmatpush1.msra.mxu0 0.0
      %332 = vmatprep.subr.mxu0 0.0
      %333 = vmatpush1.msra.mxu0 0.0
      %334 = vmatprep.subr.mxu0 0.0
      %335 = vmatpush1.msra.mxu0 0.0
      %336 = vmatprep.subr.mxu0 0.0
      %337 = vmatpush1.msra.mxu0 0.0
      %338 = vmatprep.subr.mxu0 0.0
      %339 = vmatpush1.msra.mxu0 0.0
      %340 = vmatprep.subr.mxu0 0.0
      %341 = vmatpush1.msra.mxu0 0.0
      %342 = vmatprep.subr.mxu0 0.0
      %343 = vmatpush1.msra.mxu0 0.0
      %344 = vmatprep.subr.mxu0 0.0
      %345 = vmatpush1.msra.mxu0 0.0
      %346 = vmatprep.subr.mxu0 0.0
      %347 = vmatpush1.msra.mxu0 0.0
      %348 = vmatprep.subr.mxu0 0.0
      %349 = vmatpush1.msra.mxu0 0.0
      %350 = vmatprep.subr.mxu0 0.0
      %351 = vmatpush1.msra.mxu0 0.0
      %352 = vmatprep.subr.mxu0 0.0
      %353 = vmatpush1.msra.mxu0 0.0
      %354 = vmatprep.subr.mxu0 0.0
      %355 = vmatpush1.msra.mxu0 0.0
      %356 = vmatprep.subr.mxu0 0.0
      %357 = vmatpush1.msra.mxu0 0.0
      %358 = vmatprep.subr.mxu0 0.0
      %359 = vmatpush1.msra.mxu0 0.0
      %360 = vmatprep.subr.mxu0 0.0
      %361 = vmatpush1.msra.mxu0 0.0
      %362 = vmatprep.mubr.f32.mxu0 0.0
      %363 = vmatmul.mubr.f32.gmra.mrb[0].mxu0 %v293
      %v364 = vpop.f32.mrb[0].mxu0
      %v365 = vadd.f32 0.0, %v364
      %v366 = vpop.f32.mrb[0].mxu0
      %367 = vmatprep.mubr.f32.mxu0 0.0
      %368 = vmatmul.mubr.f32.gmra.mrb[0].mxu0 %v296
      %v369 = vpop.f32.mrb[0].mxu0
      %v370 = vadd.f32 0.0, %v369
      %v371 = vpop.f32.mrb[0].mxu0
      %372 = vdwg.mxu0
      %373 = vrot.lane.b32.xlu0 %v164, 96
      %v374 = vpop.permute.xlu0 %373
      %375 = vrot.lane.b32.xlu0 %v165, 96
      %v376 = vpop.permute.xlu0 %375
      %377 = vrot.lane.b32.xlu0 %v166, 96
      %v378 = vpop.permute.xlu0 %377
      %379 = vrot.lane.b32.xlu0 %v168, 96
      %v380 = vpop.permute.xlu0 %379
      %v381 = vsel %vm177, %v374, 0
      %v383 = vsel %vm177, %v376, 0
      %v385 = vsel %vm177, %v378, 0
      %v387 = vsel %vm177, %v380, 0
      %389 = vmatprep.subr.mxu0 0.0
      %390 = vmatpush1.xpose.msra.mxu0 %v385
      %391 = vmatprep.subr.mxu0 0.0
      %392 = vmatpush1.xpose.msra.mxu0 %v387
      %393 = vmatprep.subr.mxu0 0.0
      %394 = vmatpush1.xpose.msra.mxu0 0.0
      %395 = vmatprep.subr.mxu0 0.0
      %396 = vmatpush1.xpose.msra.mxu0 0.0
      %397 = vmatprep.subr.mxu0 0.0
      %398 = vmatpush1.xpose.msra.mxu0 0.0
      %399 = vmatprep.subr.mxu0 0.0
      %400 = vmatpush1.xpose.msra.mxu0 0.0
      %401 = vmatprep.subr.mxu0 0.0
      %402 = vmatpush1.xpose.msra.mxu0 0.0
      %403 = vmatprep.subr.mxu0 0.0
      %404 = vmatpush1.xpose.msra.mxu0 0.0
      %405 = vmatprep.subr.mxu0 0.0
      %406 = vmatpush1.xpose.msra.mxu0 0.0
      %407 = vmatprep.subr.mxu0 0.0
      %408 = vmatpush1.xpose.msra.mxu0 0.0
      %409 = vmatprep.subr.mxu0 0.0
      %410 = vmatpush1.xpose.msra.mxu0 0.0
      %411 = vmatprep.subr.mxu0 0.0
      %412 = vmatpush1.xpose.msra.mxu0 0.0
      %413 = vmatprep.subr.mxu0 0.0
      %414 = vmatpush1.xpose.msra.mxu0 0.0
      %415 = vmatprep.subr.mxu0 0.0
      %416 = vmatpush1.xpose.msra.mxu0 0.0
      %417 = vmatprep.subr.mxu0 0.0
      %418 = vmatpush1.xpose.msra.mxu0 0.0
      %419 = vmatprep.subr.mxu0 0.0
      %420 = vmatpush1.xpose.msra.mxu0 0.0
      %421 = vmatprep.subr.mxu0 0.0
      %422 = vmatpush1.xpose.msra.mxu0 0.0
      %423 = vmatprep.subr.mxu0 0.0
      %424 = vmatpush1.xpose.msra.mxu0 0.0
      %425 = vmatprep.subr.mxu0 0.0
      %426 = vmatpush1.xpose.msra.mxu0 0.0
      %427 = vmatprep.subr.mxu0 0.0
      %428 = vmatpush1.xpose.msra.mxu0 0.0
      %429 = vmatprep.subr.mxu0 0.0
      %430 = vmatpush1.xpose.msra.mxu0 0.0
      %431 = vmatprep.subr.mxu0 0.0
      %432 = vmatpush1.xpose.msra.mxu0 0.0
      %433 = vmatprep.subr.mxu0 0.0
      %434 = vmatpush1.xpose.msra.mxu0 0.0
      %435 = vmatprep.subr.mxu0 0.0
      %436 = vmatpush1.xpose.msra.mxu0 0.0
      %437 = vmatprep.subr.mxu0 0.0
      %438 = vmatpush1.xpose.msra.mxu0 0.0
      %439 = vmatprep.subr.mxu0 0.0
      %440 = vmatpush1.xpose.msra.mxu0 0.0
      %441 = vmatprep.subr.mxu0 0.0
      %442 = vmatpush1.xpose.msra.mxu0 0.0
      %443 = vmatprep.subr.mxu0 0.0
      %444 = vmatpush1.xpose.msra.mxu0 0.0
      %445 = vmatprep.subr.mxu0 0.0
      %446 = vmatpush1.xpose.msra.mxu0 0.0
      %447 = vmatprep.subr.mxu0 0.0
      %448 = vmatpush1.xpose.msra.mxu0 0.0
      %449 = vmatprep.subr.mxu0 0.0
      %450 = vmatpush1.xpose.msra.mxu0 0.0
      %451 = vmatprep.subr.mxu0 0.0
      %452 = vmatpush1.xpose.msra.mxu0 0.0
      %453 = vmatprep.mubr.f32.mxu0 0.0
      %454 = vmatmul.mubr.f32.gmra.mrb[0].mxu0 %v381
      %v455 = vpop.f32.mrb[0].mxu0
      %v456 = vadd.f32 0.0, %v455
      %v457 = vpop.f32.mrb[0].mxu0
      %458 = vmatprep.mubr.f32.mxu0 0.0
      %459 = vmatmul.mubr.f32.gmra.mrb[0].mxu0 %v383
      %v460 = vpop.f32.mrb[0].mxu0
      %v461 = vadd.f32 0.0, %v460
      %v462 = vpop.f32.mrb[0].mxu0
      %463 = vdwg.mxu0
      %v464 = vmul.f32 %v456, 0.17677669
      %v465 = vmul.f32 %v461, 0.17677669
      %v466 = vsel %vm175, %v464, -1e+30
      %v467 = vsel %vm176, %v465, -1e+30
      %v468 = vsel %vm269, %v466, -inf
      %469 = vmax.xlane.f32.xlu0 %v468
      %v470 = vpop.xlane.xlu0 %469
      %v471 = vsel %vm269, %v467, -inf
      %472 = vmax.xlane.f32.xlu0 %v471
      %v473 = vpop.xlane.xlu0 %472
      %v474 = vsub.f32 %v466, %v470
      %v475 = vsub.f32 %v467, %v473
      %v476 = vmul.f32 %v474, 1.442695
      %v477 = vpow.pop %v476
      %v478 = vmul.f32 %v475, 1.442695
      %v479 = vpow.pop %v478
      %v480 = vsel %vm269, %v477, 0.0
      %481 = vadd.xlane.f32.xlu0 %v480
      %v482 = vpop.xlane.xlu0 %481
      %v483 = vsel %vm269, %v479, 0.0
      %484 = vadd.xlane.f32.xlu0 %v483
      %v485 = vpop.xlane.xlu0 %484
      %v486 = vrcp.pop %v482
      %v487 = vrcp.pop %v485
      %v488 = vmul.f32 %v477, %v486
      %v489 = vmul.f32 %v479, %v487
      %492 = vrot.lane.b32.xlu0 %v167, 96
      %v493 = vpop.permute.xlu0 %492
      %494 = vrot.lane.b32.xlu0 %v169, 96
      %v495 = vpop.permute.xlu0 %494
      %v499 = vsel %vm269, %v488, 0
      %v502 = vsel %vm269, %v489, 0
      %504 = vmatprep.subr.mxu0 0.0
      %505 = vmatpush1.msra.mxu0 %v493
      %506 = vmatprep.subr.mxu0 0.0
      %507 = vmatpush1.msra.mxu0 %v495
      %508 = vmatprep.subr.mxu0 0.0
      %509 = vmatpush1.msra.mxu0 0.0
      %510 = vmatprep.subr.mxu0 0.0
      %511 = vmatpush1.msra.mxu0 0.0
      %512 = vmatprep.subr.mxu0 0.0
      %513 = vmatpush1.msra.mxu0 0.0
      %514 = vmatprep.subr.mxu0 0.0
      %515 = vmatpush1.msra.mxu0 0.0
      %516 = vmatprep.subr.mxu0 0.0
      %517 = vmatpush1.msra.mxu0 0.0
      %518 = vmatprep.subr.mxu0 0.0
      %519 = vmatpush1.msra.mxu0 0.0
      %520 = vmatprep.subr.mxu0 0.0
      %521 = vmatpush1.msra.mxu0 0.0
      %522 = vmatprep.subr.mxu0 0.0
      %523 = vmatpush1.msra.mxu0 0.0
      %524 = vmatprep.subr.mxu0 0.0
      %525 = vmatpush1.msra.mxu0 0.0
      %526 = vmatprep.subr.mxu0 0.0
      %527 = vmatpush1.msra.mxu0 0.0
      %528 = vmatprep.subr.mxu0 0.0
      %529 = vmatpush1.msra.mxu0 0.0
      %530 = vmatprep.subr.mxu0 0.0
      %531 = vmatpush1.msra.mxu0 0.0
      %532 = vmatprep.subr.mxu0 0.0
      %533 = vmatpush1.msra.mxu0 0.0
      %534 = vmatprep.subr.mxu0 0.0
      %535 = vmatpush1.msra.mxu0 0.0
      %536 = vmatprep.subr.mxu0 0.0
      %537 = vmatpush1.msra.mxu0 0.0
      %538 = vmatprep.subr.mxu0 0.0
      %539 = vmatpush1.msra.mxu0 0.0
      %540 = vmatprep.subr.mxu0 0.0
      %541 = vmatpush1.msra.mxu0 0.0
      %542 = vmatprep.subr.mxu0 0.0
      %543 = vmatpush1.msra.mxu0 0.0
      %544 = vmatprep.subr.mxu0 0.0
      %545 = vmatpush1.msra.mxu0 0.0
      %546 = vmatprep.subr.mxu0 0.0
      %547 = vmatpush1.msra.mxu0 0.0
      %548 = vmatprep.subr.mxu0 0.0
      %549 = vmatpush1.msra.mxu0 0.0
      %550 = vmatprep.subr.mxu0 0.0
      %551 = vmatpush1.msra.mxu0 0.0
      %552 = vmatprep.subr.mxu0 0.0
      %553 = vmatpush1.msra.mxu0 0.0
      %554 = vmatprep.subr.mxu0 0.0
      %555 = vmatpush1.msra.mxu0 0.0
      %556 = vmatprep.subr.mxu0 0.0
      %557 = vmatpush1.msra.mxu0 0.0
      %558 = vmatprep.subr.mxu0 0.0
      %559 = vmatpush1.msra.mxu0 0.0
      %560 = vmatprep.subr.mxu0 0.0
      %561 = vmatpush1.msra.mxu0 0.0
      %562 = vmatprep.subr.mxu0 0.0
      %563 = vmatpush1.msra.mxu0 0.0
      %564 = vmatprep.subr.mxu0 0.0
      %565 = vmatpush1.msra.mxu0 0.0
      %566 = vmatprep.subr.mxu0 0.0
      %567 = vmatpush1.msra.mxu0 0.0
      %568 = vmatprep.mubr.f32.mxu0 0.0
      %569 = vmatmul.mubr.f32.gmra.mrb[0].mxu0 %v499
      %v570 = vpop.f32.mrb[0].mxu0
      %v571 = vadd.f32 0.0, %v570
      %v572 = vpop.f32.mrb[0].mxu0
      %573 = vmatprep.mubr.f32.mxu0 0.0
      %574 = vmatmul.mubr.f32.gmra.mrb[0].mxu0 %v502
      %v575 = vpop.f32.mrb[0].mxu0
      %v576 = vadd.f32 0.0, %v575
      %v577 = vpop.f32.mrb[0].mxu0
      %578 = vdwg.mxu0
      %579 = vrot.lane.b32.xlu0 %v164, 64
      %v580 = vpop.permute.xlu0 %579
      %581 = vrot.lane.b32.xlu0 %v165, 64
      %v582 = vpop.permute.xlu0 %581
      %583 = vrot.lane.b32.xlu0 %v166, 64
      %v584 = vpop.permute.xlu0 %583
      %585 = vrot.lane.b32.xlu0 %v168, 64
      %v586 = vpop.permute.xlu0 %585
      %v587 = vsel %vm177, %v580, 0
      %v589 = vsel %vm177, %v582, 0
      %v591 = vsel %vm177, %v584, 0
      %v593 = vsel %vm177, %v586, 0
      %595 = vmatprep.subr.mxu0 0.0
      %596 = vmatpush1.xpose.msra.mxu0 %v591
      %597 = vmatprep.subr.mxu0 0.0
      %598 = vmatpush1.xpose.msra.mxu0 %v593
      %599 = vmatprep.subr.mxu0 0.0
      %600 = vmatpush1.xpose.msra.mxu0 0.0
      %601 = vmatprep.subr.mxu0 0.0
      %602 = vmatpush1.xpose.msra.mxu0 0.0
      %603 = vmatprep.subr.mxu0 0.0
      %604 = vmatpush1.xpose.msra.mxu0 0.0
      %605 = vmatprep.subr.mxu0 0.0
      %606 = vmatpush1.xpose.msra.mxu0 0.0
      %607 = vmatprep.subr.mxu0 0.0
      %608 = vmatpush1.xpose.msra.mxu0 0.0
      %609 = vmatprep.subr.mxu0 0.0
      %610 = vmatpush1.xpose.msra.mxu0 0.0
      %611 = vmatprep.subr.mxu0 0.0
      %612 = vmatpush1.xpose.msra.mxu0 0.0
      %613 = vmatprep.subr.mxu0 0.0
      %614 = vmatpush1.xpose.msra.mxu0 0.0
      %615 = vmatprep.subr.mxu0 0.0
      %616 = vmatpush1.xpose.msra.mxu0 0.0
      %617 = vmatprep.subr.mxu0 0.0
      %618 = vmatpush1.xpose.msra.mxu0 0.0
      %619 = vmatprep.subr.mxu0 0.0
      %620 = vmatpush1.xpose.msra.mxu0 0.0
      %621 = vmatprep.subr.mxu0 0.0
      %622 = vmatpush1.xpose.msra.mxu0 0.0
      %623 = vmatprep.subr.mxu0 0.0
      %624 = vmatpush1.xpose.msra.mxu0 0.0
      %625 = vmatprep.subr.mxu0 0.0
      %626 = vmatpush1.xpose.msra.mxu0 0.0
      %627 = vmatprep.subr.mxu0 0.0
      %628 = vmatpush1.xpose.msra.mxu0 0.0
      %629 = vmatprep.subr.mxu0 0.0
      %630 = vmatpush1.xpose.msra.mxu0 0.0
      %631 = vmatprep.subr.mxu0 0.0
      %632 = vmatpush1.xpose.msra.mxu0 0.0
      %633 = vmatprep.subr.mxu0 0.0
      %634 = vmatpush1.xpose.msra.mxu0 0.0
      %635 = vmatprep.subr.mxu0 0.0
      %636 = vmatpush1.xpose.msra.mxu0 0.0
      %637 = vmatprep.subr.mxu0 0.0
      %638 = vmatpush1.xpose.msra.mxu0 0.0
      %639 = vmatprep.subr.mxu0 0.0
      %640 = vmatpush1.xpose.msra.mxu0 0.0
      %641 = vmatprep.subr.mxu0 0.0
      %642 = vmatpush1.xpose.msra.mxu0 0.0
      %643 = vmatprep.subr.mxu0 0.0
      %644 = vmatpush1.xpose.msra.mxu0 0.0
      %645 = vmatprep.subr.mxu0 0.0
      %646 = vmatpush1.xpose.msra.mxu0 0.0
      %647 = vmatprep.subr.mxu0 0.0
      %648 = vmatpush1.xpose.msra.mxu0 0.0
      %649 = vmatprep.subr.mxu0 0.0
      %650 = vmatpush1.xpose.msra.mxu0 0.0
      %651 = vmatprep.subr.mxu0 0.0
      %652 = vmatpush1.xpose.msra.mxu0 0.0
      %653 = vmatprep.subr.mxu0 0.0
      %654 = vmatpush1.xpose.msra.mxu0 0.0
      %655 = vmatprep.subr.mxu0 0.0
      %656 = vmatpush1.xpose.msra.mxu0 0.0
      %657 = vmatprep.subr.mxu0 0.0
      %658 = vmatpush1.xpose.msra.mxu0 0.0
      %659 = vmatprep.mubr.f32.mxu0 0.0
      %660 = vmatmul.mubr.f32.gmra.mrb[0].mxu0 %v587
      %v661 = vpop.f32.mrb[0].mxu0
      %v662 = vadd.f32 0.0, %v661
      %v663 = vpop.f32.mrb[0].mxu0
      %664 = vmatprep.mubr.f32.mxu0 0.0
      %665 = vmatmul.mubr.f32.gmra.mrb[0].mxu0 %v589
      %v666 = vpop.f32.mrb[0].mxu0
      %v667 = vadd.f32 0.0, %v666
      %v668 = vpop.f32.mrb[0].mxu0
      %669 = vdwg.mxu0
      %v670 = vmul.f32 %v662, 0.17677669
      %v671 = vmul.f32 %v667, 0.17677669
      %v672 = vsel %vm175, %v670, -1e+30
      %v673 = vsel %vm176, %v671, -1e+30
      %v674 = vsel %vm269, %v672, -inf
      %675 = vmax.xlane.f32.xlu0 %v674
      %v676 = vpop.xlane.xlu0 %675
      %v677 = vsel %vm269, %v673, -inf
      %678 = vmax.xlane.f32.xlu0 %v677
      %v679 = vpop.xlane.xlu0 %678
      %v680 = vsub.f32 %v672, %v676
      %v681 = vsub.f32 %v673, %v679
      %v682 = vmul.f32 %v680, 1.442695
      %v683 = vpow.pop %v682
      %v684 = vmul.f32 %v681, 1.442695
      %v685 = vpow.pop %v684
      %v686 = vsel %vm269, %v683, 0.0
      %687 = vadd.xlane.f32.xlu0 %v686
      %v688 = vpop.xlane.xlu0 %687
      %v689 = vsel %vm269, %v685, 0.0
      %690 = vadd.xlane.f32.xlu0 %v689
      %v691 = vpop.xlane.xlu0 %690
      %v692 = vrcp.pop %v688
      %v693 = vrcp.pop %v691
      %v694 = vmul.f32 %v683, %v692
      %v695 = vmul.f32 %v685, %v693
      %696 = vrot.lane.b32.xlu0 %v167, 64
      %v697 = vpop.permute.xlu0 %696
      %698 = vrot.lane.b32.xlu0 %v169, 64
      %v699 = vpop.permute.xlu0 %698
      %v703 = vsel %vm269, %v694, 0
      %v706 = vsel %vm269, %v695, 0
      %708 = vmatprep.subr.mxu0 0.0
      %709 = vmatpush1.msra.mxu0 %v697
      %710 = vmatprep.subr.mxu0 0.0
      %711 = vmatpush1.msra.mxu0 %v699
      %712 = vmatprep.subr.mxu0 0.0
      %713 = vmatpush1.msra.mxu0 0.0
      %714 = vmatprep.subr.mxu0 0.0
      %715 = vmatpush1.msra.mxu0 0.0
      %716 = vmatprep.subr.mxu0 0.0
      %717 = vmatpush1.msra.mxu0 0.0
      %718 = vmatprep.subr.mxu0 0.0
      %719 = vmatpush1.msra.mxu0 0.0
      %720 = vmatprep.subr.mxu0 0.0
      %721 = vmatpush1.msra.mxu0 0.0
      %722 = vmatprep.subr.mxu0 0.0
      %723 = vmatpush1.msra.mxu0 0.0
      %724 = vmatprep.subr.mxu0 0.0
      %725 = vmatpush1.msra.mxu0 0.0
      %726 = vmatprep.subr.mxu0 0.0
      %727 = vmatpush1.msra.mxu0 0.0
      %728 = vmatprep.subr.mxu0 0.0
      %729 = vmatpush1.msra.mxu0 0.0
      %730 = vmatprep.subr.mxu0 0.0
      %731 = vmatpush1.msra.mxu0 0.0
      %732 = vmatprep.subr.mxu0 0.0
      %733 = vmatpush1.msra.mxu0 0.0
      %734 = vmatprep.subr.mxu0 0.0
      %735 = vmatpush1.msra.mxu0 0.0
      %736 = vmatprep.subr.mxu0 0.0
      %737 = vmatpush1.msra.mxu0 0.0
      %738 = vmatprep.subr.mxu0 0.0
      %739 = vmatpush1.msra.mxu0 0.0
      %740 = vmatprep.subr.mxu0 0.0
      %741 = vmatpush1.msra.mxu0 0.0
      %742 = vmatprep.subr.mxu0 0.0
      %743 = vmatpush1.msra.mxu0 0.0
      %744 = vmatprep.subr.mxu0 0.0
      %745 = vmatpush1.msra.mxu0 0.0
      %746 = vmatprep.subr.mxu0 0.0
      %747 = vmatpush1.msra.mxu0 0.0
      %748 = vmatprep.subr.mxu0 0.0
      %749 = vmatpush1.msra.mxu0 0.0
      %750 = vmatprep.subr.mxu0 0.0
      %751 = vmatpush1.msra.mxu0 0.0
      %752 = vmatprep.subr.mxu0 0.0
      %753 = vmatpush1.msra.mxu0 0.0
      %754 = vmatprep.subr.mxu0 0.0
      %755 = vmatpush1.msra.mxu0 0.0
      %756 = vmatprep.subr.mxu0 0.0
      %757 = vmatpush1.msra.mxu0 0.0
      %758 = vmatprep.subr.mxu0 0.0
      %759 = vmatpush1.msra.mxu0 0.0
      %760 = vmatprep.subr.mxu0 0.0
      %761 = vmatpush1.msra.mxu0 0.0
      %762 = vmatprep.subr.mxu0 0.0
      %763 = vmatpush1.msra.mxu0 0.0
      %764 = vmatprep.subr.mxu0 0.0
      %765 = vmatpush1.msra.mxu0 0.0
      %766 = vmatprep.subr.mxu0 0.0
      %767 = vmatpush1.msra.mxu0 0.0
      %768 = vmatprep.subr.mxu0 0.0
      %769 = vmatpush1.msra.mxu0 0.0
      %770 = vmatprep.subr.mxu0 0.0
      %771 = vmatpush1.msra.mxu0 0.0
      %772 = vmatprep.mubr.f32.mxu0 0.0
      %773 = vmatmul.mubr.f32.gmra.mrb[0].mxu0 %v703
      %v774 = vpop.f32.mrb[0].mxu0
      %v775 = vadd.f32 0.0, %v774
      %v776 = vpop.f32.mrb[0].mxu0
      %777 = vmatprep.mubr.f32.mxu0 0.0
      %778 = vmatmul.mubr.f32.gmra.mrb[0].mxu0 %v706
      %v779 = vpop.f32.mrb[0].mxu0
      %v780 = vadd.f32 0.0, %v779
      %v781 = vpop.f32.mrb[0].mxu0
      %782 = vdwg.mxu0
      %783 = vrot.lane.b32.xlu0 %v164, 32
      %v784 = vpop.permute.xlu0 %783
      %785 = vrot.lane.b32.xlu0 %v165, 32
      %v786 = vpop.permute.xlu0 %785
      %787 = vrot.lane.b32.xlu0 %v166, 32
      %v788 = vpop.permute.xlu0 %787
      %789 = vrot.lane.b32.xlu0 %v168, 32
      %v790 = vpop.permute.xlu0 %789
      %v791 = vsel %vm177, %v784, 0
      %v793 = vsel %vm177, %v786, 0
      %v795 = vsel %vm177, %v788, 0
      %v797 = vsel %vm177, %v790, 0
      %799 = vmatprep.subr.mxu0 0.0
      %800 = vmatpush1.xpose.msra.mxu0 %v795
      %801 = vmatprep.subr.mxu0 0.0
      %802 = vmatpush1.xpose.msra.mxu0 %v797
      %803 = vmatprep.subr.mxu0 0.0
      %804 = vmatpush1.xpose.msra.mxu0 0.0
      %805 = vmatprep.subr.mxu0 0.0
      %806 = vmatpush1.xpose.msra.mxu0 0.0
      %807 = vmatprep.subr.mxu0 0.0
      %808 = vmatpush1.xpose.msra.mxu0 0.0
      %809 = vmatprep.subr.mxu0 0.0
      %810 = vmatpush1.xpose.msra.mxu0 0.0
      %811 = vmatprep.subr.mxu0 0.0
      %812 = vmatpush1.xpose.msra.mxu0 0.0
      %813 = vmatprep.subr.mxu0 0.0
      %814 = vmatpush1.xpose.msra.mxu0 0.0
      %815 = vmatprep.subr.mxu0 0.0
      %816 = vmatpush1.xpose.msra.mxu0 0.0
      %817 = vmatprep.subr.mxu0 0.0
      %818 = vmatpush1.xpose.msra.mxu0 0.0
      %819 = vmatprep.subr.mxu0 0.0
      %820 = vmatpush1.xpose.msra.mxu0 0.0
      %821 = vmatprep.subr.mxu0 0.0
      %822 = vmatpush1.xpose.msra.mxu0 0.0
      %823 = vmatprep.subr.mxu0 0.0
      %824 = vmatpush1.xpose.msra.mxu0 0.0
      %825 = vmatprep.subr.mxu0 0.0
      %826 = vmatpush1.xpose.msra.mxu0 0.0
      %827 = vmatprep.subr.mxu0 0.0
      %828 = vmatpush1.xpose.msra.mxu0 0.0
      %829 = vmatprep.subr.mxu0 0.0
      %830 = vmatpush1.xpose.msra.mxu0 0.0
      %831 = vmatprep.subr.mxu0 0.0
      %832 = vmatpush1.xpose.msra.mxu0 0.0
      %833 = vmatprep.subr.mxu0 0.0
      %834 = vmatpush1.xpose.msra.mxu0 0.0
      %835 = vmatprep.subr.mxu0 0.0
      %836 = vmatpush1.xpose.msra.mxu0 0.0
      %837 = vmatprep.subr.mxu0 0.0
      %838 = vmatpush1.xpose.msra.mxu0 0.0
      %839 = vmatprep.subr.mxu0 0.0
      %840 = vmatpush1.xpose.msra.mxu0 0.0
      %841 = vmatprep.subr.mxu0 0.0
      %842 = vmatpush1.xpose.msra.mxu0 0.0
      %843 = vmatprep.subr.mxu0 0.0
      %844 = vmatpush1.xpose.msra.mxu0 0.0
      %845 = vmatprep.subr.mxu0 0.0
      %846 = vmatpush1.xpose.msra.mxu0 0.0
      %847 = vmatprep.subr.mxu0 0.0
      %848 = vmatpush1.xpose.msra.mxu0 0.0
      %849 = vmatprep.subr.mxu0 0.0
      %850 = vmatpush1.xpose.msra.mxu0 0.0
      %851 = vmatprep.subr.mxu0 0.0
      %852 = vmatpush1.xpose.msra.mxu0 0.0
      %853 = vmatprep.subr.mxu0 0.0
      %854 = vmatpush1.xpose.msra.mxu0 0.0
      %855 = vmatprep.subr.mxu0 0.0
      %856 = vmatpush1.xpose.msra.mxu0 0.0
      %857 = vmatprep.subr.mxu0 0.0
      %858 = vmatpush1.xpose.msra.mxu0 0.0
      %859 = vmatprep.subr.mxu0 0.0
      %860 = vmatpush1.xpose.msra.mxu0 0.0
      %861 = vmatprep.subr.mxu0 0.0
      %862 = vmatpush1.xpose.msra.mxu0 0.0
      %863 = vmatprep.mubr.f32.mxu0 0.0
      %864 = vmatmul.mubr.f32.gmra.mrb[0].mxu0 %v791
      %v865 = vpop.f32.mrb[0].mxu0
      %v866 = vadd.f32 0.0, %v865
      %v867 = vpop.f32.mrb[0].mxu0
      %868 = vmatprep.mubr.f32.mxu0 0.0
      %869 = vmatmul.mubr.f32.gmra.mrb[0].mxu0 %v793
      %v870 = vpop.f32.mrb[0].mxu0
      %v871 = vadd.f32 0.0, %v870
      %v872 = vpop.f32.mrb[0].mxu0
      %873 = vdwg.mxu0
      %v874 = vmul.f32 %v866, 0.17677669
      %v875 = vmul.f32 %v871, 0.17677669
      %v876 = vsel %vm175, %v874, -1e+30
      %v877 = vsel %vm176, %v875, -1e+30
      %v878 = vsel %vm269, %v876, -inf
      %879 = vmax.xlane.f32.xlu0 %v878
      %v880 = vpop.xlane.xlu0 %879
      %v881 = vsel %vm269, %v877, -inf
      %882 = vmax.xlane.f32.xlu0 %v881
      %v883 = vpop.xlane.xlu0 %882
      %v884 = vsub.f32 %v876, %v880
      %v885 = vsub.f32 %v877, %v883
      %v886 = vmul.f32 %v884, 1.442695
      %v887 = vpow.pop %v886
      %v888 = vmul.f32 %v885, 1.442695
      %v889 = vpow.pop %v888
      %v890 = vsel %vm269, %v887, 0.0
      %891 = vadd.xlane.f32.xlu0 %v890
      %v892 = vpop.xlane.xlu0 %891
      %v893 = vsel %vm269, %v889, 0.0
      %894 = vadd.xlane.f32.xlu0 %v893
      %v895 = vpop.xlane.xlu0 %894
      %v896 = vrcp.pop %v892
      %v897 = vrcp.pop %v895
      %v898 = vmul.f32 %v887, %v896
      %v899 = vmul.f32 %v889, %v897
      %900 = vrot.lane.b32.xlu0 %v167, 32
      %v901 = vpop.permute.xlu0 %900
      %902 = vrot.lane.b32.xlu0 %v169, 32
      %v903 = vpop.permute.xlu0 %902
      %v907 = vsel %vm269, %v898, 0
      %v910 = vsel %vm269, %v899, 0
      %912 = vmatprep.subr.mxu0 0.0
      %913 = vmatpush1.msra.mxu0 %v901
      %914 = vmatprep.subr.mxu0 0.0
      %915 = vmatpush1.msra.mxu0 %v903
      %916 = vmatprep.subr.mxu0 0.0
      %917 = vmatpush1.msra.mxu0 0.0
      %918 = vmatprep.subr.mxu0 0.0
      %919 = vmatpush1.msra.mxu0 0.0
      %920 = vmatprep.subr.mxu0 0.0
      %921 = vmatpush1.msra.mxu0 0.0
      %922 = vmatprep.subr.mxu0 0.0
      %923 = vmatpush1.msra.mxu0 0.0
      %924 = vmatprep.subr.mxu0 0.0
      %925 = vmatpush1.msra.mxu0 0.0
      %926 = vmatprep.subr.mxu0 0.0
      %927 = vmatpush1.msra.mxu0 0.0
      %928 = vmatprep.subr.mxu0 0.0
      %929 = vmatpush1.msra.mxu0 0.0
      %930 = vmatprep.subr.mxu0 0.0
      %931 = vmatpush1.msra.mxu0 0.0
      %932 = vmatprep.subr.mxu0 0.0
      %933 = vmatpush1.msra.mxu0 0.0
      %934 = vmatprep.subr.mxu0 0.0
      %935 = vmatpush1.msra.mxu0 0.0
      %936 = vmatprep.subr.mxu0 0.0
      %937 = vmatpush1.msra.mxu0 0.0
      %938 = vmatprep.subr.mxu0 0.0
      %939 = vmatpush1.msra.mxu0 0.0
      %940 = vmatprep.subr.mxu0 0.0
      %941 = vmatpush1.msra.mxu0 0.0
      %942 = vmatprep.subr.mxu0 0.0
      %943 = vmatpush1.msra.mxu0 0.0
      %944 = vmatprep.subr.mxu0 0.0
      %945 = vmatpush1.msra.mxu0 0.0
      %946 = vmatprep.subr.mxu0 0.0
      %947 = vmatpush1.msra.mxu0 0.0
      %948 = vmatprep.subr.mxu0 0.0
      %949 = vmatpush1.msra.mxu0 0.0
      %950 = vmatprep.subr.mxu0 0.0
      %951 = vmatpush1.msra.mxu0 0.0
      %952 = vmatprep.subr.mxu0 0.0
      %953 = vmatpush1.msra.mxu0 0.0
      %954 = vmatprep.subr.mxu0 0.0
      %955 = vmatpush1.msra.mxu0 0.0
      %956 = vmatprep.subr.mxu0 0.0
      %957 = vmatpush1.msra.mxu0 0.0
      %958 = vmatprep.subr.mxu0 0.0
      %959 = vmatpush1.msra.mxu0 0.0
      %960 = vmatprep.subr.mxu0 0.0
      %961 = vmatpush1.msra.mxu0 0.0
      %962 = vmatprep.subr.mxu0 0.0
      %963 = vmatpush1.msra.mxu0 0.0
      %964 = vmatprep.subr.mxu0 0.0
      %965 = vmatpush1.msra.mxu0 0.0
      %966 = vmatprep.subr.mxu0 0.0
      %967 = vmatpush1.msra.mxu0 0.0
      %968 = vmatprep.subr.mxu0 0.0
      %969 = vmatpush1.msra.mxu0 0.0
      %970 = vmatprep.subr.mxu0 0.0
      %971 = vmatpush1.msra.mxu0 0.0
      %972 = vmatprep.subr.mxu0 0.0
      %973 = vmatpush1.msra.mxu0 0.0
      %974 = vmatprep.subr.mxu0 0.0
      %975 = vmatpush1.msra.mxu0 0.0
      %976 = vmatprep.mubr.f32.mxu0 0.0
      %977 = vmatmul.mubr.f32.gmra.mrb[0].mxu0 %v907
      %v978 = vpop.f32.mrb[0].mxu0
      %v979 = vadd.f32 0.0, %v978
      %v980 = vpop.f32.mrb[0].mxu0
      %981 = vmatprep.mubr.f32.mxu0 0.0
      %982 = vmatmul.mubr.f32.gmra.mrb[0].mxu0 %v910
      %v983 = vpop.f32.mrb[0].mxu0
      %v984 = vadd.f32 0.0, %v983
      %v985 = vpop.f32.mrb[0].mxu0
      %986 = vdwg.mxu0
      %989 = vrot.lane.b32.xlu0 %v571, 32
      %v990 = vpop.permute.xlu0 %989
      %991 = vrot.lane.b32.xlu0 %v576, 32
      %v992 = vpop.permute.xlu0 %991
      %997 = vrot.lane.b32.xlu0 %v775, 64
      %v998 = vpop.permute.xlu0 %997
      %999 = vrot.lane.b32.xlu0 %v780, 64
      %v1000 = vpop.permute.xlu0 %999
      %1005 = vrot.lane.b32.xlu0 %v979, 96
      %v1006 = vpop.permute.xlu0 %1005
      %1007 = vrot.lane.b32.xlu0 %v984, 96
      %v1008 = vpop.permute.xlu0 %1007
      %v1011 = vsel %vm177, %v365, %v990
      %v1012 = vsel %vm177, %v370, %v992
      %vm1013 = vcmask 523264
      %v1014 = vsel %vm1013, %v1011, %v998
      %v1015 = vsel %vm1013, %v1012, %v1000
      %vm1016 = vcmask 785408
      %v1017 = vsel %vm1016, %v1014, %v1006
      %v1018 = vsel %vm1016, %v1015, %v1008
      %1019 = vst [vmem:[%s163] sm:$0xff] %v1017
      %1020 = vst [vmem:[%s163 + $0x8] sm:$0xff] %v1018
      %p1021 = scmp.lt.s32.totalorder %s13, 1
      %s1022 = scalar_select %p1021, %s13, 1
      %s1023 = smul.addr %s1022, 2
      %s1024 = smul.addr %s1023, 8
      %s1025 = scalar_lea.vmem %s2, %s1024
      // Predicated region
      $region29: #{transformer_forward.40} parent=27 // pred_check
        %p1026 = pneg %p83
      $region30: #{transformer_forward.40} parent=27 // pred_check_branch
        %1028 = sbr.rel (%p1026) target = $region32
      $region31: #{transformer_forward.40} parent=27 // pred_region
        _
      $region32: #{transformer_forward.40} parent=27 // pred_fallthru
        _
    $region28: #{transformer_forward.40} parent=5 // pred_fallthru
      _
    %p1029 = scmp.le.s32.totalorder 2, %s8
    // Predicated region
    $region33: #{transformer_forward.40} parent=5 // pred_check
      %p1030 = pneg %p1029
    $region34: #{transformer_forward.40} parent=5 // pred_check_branch
      %1032 = sbr.rel (%p1030) target = $region36
    $region35: #{transformer_forward.40} parent=5 // pred_region
      %s1033 = ssub.s32 %s8, 2
      // Predicated region
      $region37: #{transformer_forward.40} parent=35 // pred_check
        %p1034 = pneg %p89
      $region38: #{transformer_forward.40} parent=35 // pred_check_branch
        %1036 = sbr.rel (%p1034) target = $region40
      $region39: #{transformer_forward.40} parent=35 // pred_region
        %p1037 = scmp.lt.s32.totalorder %s14, 1
        %s1038 = scalar_select %p1037, %s14, 1
        %s1039 = smul.addr %s1038, 2
        %s1040 = smul.addr %s1039, 8
        %s1041 = scalar_lea.vmem %s2, %s1040
      $region40: #{transformer_forward.40} parent=35 // pred_fallthru
        _
    $region36: #{transformer_forward.40} parent=5 // pred_fallthru
      _
  $region6: #{transformer_forward.40} parent=0 // loop_footer
    %s12 = sadd.s32 1, %s8
  $region7: #{transformer_forward.40} parent=0 // loop_footer_branch
    %7 = sbr.rel target = $region3
  $region8: #{transformer_forward.40} parent=0 // loop_exit
    _

// kernel: transformer_forward.32
$region0: #{transformer_forward.32}
  #allocation0 [shape = 'u32[]', space=smem, size = 0x4, offset = 0x4, fixed_abs, tag = 'smem constant byte address 0x4 - core index']
  #allocation1 [shape = 'u32[144,128]{1,0:T(1,128)}', space=vmem, size = 0x12000, scoped, tag = 'internal scratch']
  #allocation2 [shape = 'f32[32,256]{1,0:T(8,128)}', space=vmem, size = 0x8000, scoped, tag = 'scratch operand']
  %s0 = inlined_call_operand.vmem [shape: f32[32,128], index: 0, kind: input, shape index: {}]
  %s1 = inlined_call_operand.vmem [shape: f32[128,256], index: 1, kind: input, shape index: {}]
  %s2 = inlined_call_operand.vmem [shape: f32[1,256], index: 2, kind: input, shape index: {}]
  %s3 = inlined_call_operand.vmem [shape: f32[32,256], index: 3, kind: output, shape index: {}]
  %s4 = sld [smem:[#allocation0]]
  $region30: #{transformer_forward.32} parent=0
    _
  %s6 = ssub.s32 1, %s4
  %s7 = scalar_select 0, %s6, %s4
  // Predicated region
  $region2: #{transformer_forward.32} parent=0 // pred_check
    _
  $region3: #{transformer_forward.32} parent=0 // pred_check_branch
    %9 = sbr.rel (0) target = $region5
  $region4: #{transformer_forward.32} parent=0 // pred_region
    _
  $region5: #{transformer_forward.32} parent=0 // pred_fallthru
    _
  // Predicated region
  $region6: #{transformer_forward.32} parent=0 // pred_check
    _
  $region7: #{transformer_forward.32} parent=0 // pred_check_branch
    %11 = sbr.rel (0) target = $region9
  $region8: #{transformer_forward.32} parent=0 // pred_region
    _
  $region9: #{transformer_forward.32} parent=0 // pred_fallthru
    _
  // Predicated region
  $region10: #{transformer_forward.32} parent=0 // pred_check
    _
  $region11: #{transformer_forward.32} parent=0 // pred_check_branch
    %13 = sbr.rel (0) target = $region13
  $region12: #{transformer_forward.32} parent=0 // pred_region
    _
  $region13: #{transformer_forward.32} parent=0 // pred_fallthru
    _
  %p14 = scmp.eq.s32.totalorder 0, 0
  // Predicated region
  $region14: #{transformer_forward.32} parent=0 // pred_check
    %p15 = pneg %p14
  $region15: #{transformer_forward.32} parent=0 // pred_check_branch
    %17 = sbr.rel (%p15) target = $region17
  $region16: #{transformer_forward.32} parent=0 // pred_region
    %18 = vst [vmem:[#allocation2] sm:$0xff] 0.0
    %19 = vst [vmem:[#allocation2 + $0x8] sm:$0xff] 0.0
    %20 = vst [vmem:[#allocation2 + $0x10] sm:$0xff] 0.0
    %21 = vst [vmem:[#allocation2 + $0x18] sm:$0xff] 0.0
    %22 = vst [vmem:[#allocation2 + $0x20] sm:$0xff] 0.0
    %23 = vst [vmem:[#allocation2 + $0x28] sm:$0xff] 0.0
    %24 = vst [vmem:[#allocation2 + $0x30] sm:$0xff] 0.0
    %25 = vst [vmem:[#allocation2 + $0x38] sm:$0xff] 0.0
  $region17: #{transformer_forward.32} parent=0 // pred_fallthru
    _
  %v26 = vld [vmem:[#allocation2] sm:$0xff]
  %v27 = vld [vmem:[#allocation2 + $0x8] sm:$0xff]
  %v28 = vld [vmem:[#allocation2 + $0x10] sm:$0xff]
  %v29 = vld [vmem:[#allocation2 + $0x18] sm:$0xff]
  %v30 = vld [vmem:[#allocation2 + $0x20] sm:$0xff]
  %v31 = vld [vmem:[#allocation2 + $0x28] sm:$0xff]
  %v32 = vld [vmem:[#allocation2 + $0x30] sm:$0xff]
  %v33 = vld [vmem:[#allocation2 + $0x38] sm:$0xff]
  %v34 = vld [vmem:[%s0] sm:$0xff]
  %v35 = vld [vmem:[%s0 + $0x8] sm:$0xff]
  %v36 = vld [vmem:[%s0 + $0x10] sm:$0xff]
  %v37 = vld [vmem:[%s0 + $0x18] sm:$0xff]
  %v38 = vld [vmem:[%s1] sm:$0xff]
  %v39 = vld [vmem:[%s1 + $0x8] sm:$0xff]
  %v40 = vld [vmem:[%s1 + $0x10] sm:$0xff]
  %v41 = vld [vmem:[%s1 + $0x18] sm:$0xff]
  %v42 = vld [vmem:[%s1 + $0x20] sm:$0xff]
  %v43 = vld [vmem:[%s1 + $0x28] sm:$0xff]
  %v44 = vld [vmem:[%s1 + $0x30] sm:$0xff]
  %v45 = vld [vmem:[%s1 + $0x38] sm:$0xff]
  %v46 = vld [vmem:[%s1 + $0x40] sm:$0xff]
  %v47 = vld [vmem:[%s1 + $0x48] sm:$0xff]
  %v48 = vld [vmem:[%s1 + $0x50] sm:$0xff]
  %v49 = vld [vmem:[%s1 + $0x58] sm:$0xff]
  %v50 = vld [vmem:[%s1 + $0x60] sm:$0xff]
  %v51 = vld [vmem:[%s1 + $0x68] sm:$0xff]
  %v52 = vld [vmem:[%s1 + $0x70] sm:$0xff]
  %v53 = vld [vmem:[%s1 + $0x78] sm:$0xff]
  %v54 = vld [vmem:[%s1 + $0x80] sm:$0xff]
  %v55 = vld [vmem:[%s1 + $0x88] sm:$0xff]
  %v56 = vld [vmem:[%s1 + $0x90] sm:$0xff]
  %v57 = vld [vmem:[%s1 + $0x98] sm:$0xff]
  %v58 = vld [vmem:[%s1 + $0xa0] sm:$0xff]
  %v59 = vld [vmem:[%s1 + $0xa8] sm:$0xff]
  %v60 = vld [vmem:[%s1 + $0xb0] sm:$0xff]
  %v61 = vld [vmem:[%s1 + $0xb8] sm:$0xff]
  %v62 = vld [vmem:[%s1 + $0xc0] sm:$0xff]
  %v63 = vld [vmem:[%s1 + $0xc8] sm:$0xff]
  %v64 = vld [vmem:[%s1 + $0xd0] sm:$0xff]
  %v65 = vld [vmem:[%s1 + $0xd8] sm:$0xff]
  %v66 = vld [vmem:[%s1 + $0xe0] sm:$0xff]
  %v67 = vld [vmem:[%s1 + $0xe8] sm:$0xff]
  %v68 = vld [vmem:[%s1 + $0xf0] sm:$0xff]
  %v69 = vld [vmem:[%s1 + $0xf8] sm:$0xff]
  %70 = vmatprep.subr.mxu0 %v39
  %71 = vmatpush1.msra.mxu0 %v38
  %72 = vmatprep.subr.mxu0 %v41
  %73 = vmatpush1.msra.mxu0 %v40
  %74 = vmatprep.subr.mxu0 %v43
  %75 = vmatpush1.msra.mxu0 %v42
  %76 = vmatprep.subr.mxu0 %v45
  %77 = vmatpush1.msra.mxu0 %v44
  %78 = vmatprep.subr.mxu0 %v47
  %79 = vmatpush1.msra.mxu0 %v46
  %80 = vmatprep.subr.mxu0 %v49
  %81 = vmatpush1.msra.mxu0 %v48
  %82 = vmatprep.subr.mxu0 %v51
  %83 = vmatpush1.msra.mxu0 %v50
  %84 = vmatprep.subr.mxu0 %v53
  %85 = vmatpush1.msra.mxu0 %v52
  %86 = vmatprep.subr.mxu0 %v55
  %87 = vmatpush1.msra.mxu0 %v54
  %88 = vmatprep.subr.mxu0 %v57
  %89 = vmatpush1.msra.mxu0 %v56
  %90 = vmatprep.subr.mxu0 %v59
  %91 = vmatpush1.msra.mxu0 %v58
  %92 = vmatprep.subr.mxu0 %v61
  %93 = vmatpush1.msra.mxu0 %v60
  %94 = vmatprep.subr.mxu0 %v63
  %95 = vmatpush1.msra.mxu0 %v62
  %96 = vmatprep.subr.mxu0 %v65
  %97 = vmatpush1.msra.mxu0 %v64
  %98 = vmatprep.subr.mxu0 %v67
  %99 = vmatpush1.msra.mxu0 %v66
  %100 = vmatprep.subr.mxu0 %v69
  %101 = vmatpush1.msra.mxu0 %v68
  %102 = vmatprep.subr.mxu0 0.0
  %103 = vmatpush1.msra.mxu0 0.0
  %104 = vmatprep.subr.mxu0 0.0
  %105 = vmatpush1.msra.mxu0 0.0
  %106 = vmatprep.subr.mxu0 0.0
  %107 = vmatpush1.msra.mxu0 0.0
  %108 = vmatprep.subr.mxu0 0.0
  %109 = vmatpush1.msra.mxu0 0.0
  %110 = vmatprep.subr.mxu0 0.0
  %111 = vmatpush1.msra.mxu0 0.0
  %112 = vmatprep.subr.mxu0 0.0
  %113 = vmatpush1.msra.mxu0 0.0
  %114 = vmatprep.subr.mxu0 0.0
  %115 = vmatpush1.msra.mxu0 0.0
  %116 = vmatprep.subr.mxu0 0.0
  %117 = vmatpush1.msra.mxu0 0.0
  %118 = vmatprep.subr.mxu0 0.0
  %119 = vmatpush1.msra.mxu0 0.0
  %120 = vmatprep.subr.mxu0 0.0
  %121 = vmatpush1.msra.mxu0 0.0
  %122 = vmatprep.subr.mxu0 0.0
  %123 = vmatpush1.msra.mxu0 0.0
  %124 = vmatprep.subr.mxu0 0.0
  %125 = vmatpush1.msra.mxu0 0.0
  %126 = vmatprep.subr.mxu0 0.0
  %127 = vmatpush1.msra.mxu0 0.0
  %128 = vmatprep.subr.mxu0 0.0
  %129 = vmatpush1.msra.mxu0 0.0
  %130 = vmatprep.subr.mxu0 0.0
  %131 = vmatpush1.msra.mxu0 0.0
  %132 = vmatprep.subr.mxu0 0.0
  %133 = vmatpush1.msra.mxu0 0.0
  %134 = vmatprep.mubr.f32.mxu0 0.0
  %135 = vmatmul.mubr.f32.gmra.mrb[0].mxu0 %v34
  %v136 = vpop.f32.mrb[0].mxu0
  %v137 = vadd.f32 0.0, %v136
  %v138 = vpop.f32.mrb[0].mxu0
  %v139 = vadd.f32 0.0, %v138
  %140 = vmatprep.mubr.f32.mxu0 0.0
  %141 = vmatmul.mubr.f32.gmra.mrb[0].mxu0 %v35
  %v142 = vpop.f32.mrb[0].mxu0
  %v143 = vadd.f32 0.0, %v142
  %v144 = vpop.f32.mrb[0].mxu0
  %v145 = vadd.f32 0.0, %v144
  %146 = vmatprep.mubr.f32.mxu0 0.0
  %147 = vmatmul.mubr.f32.gmra.mrb[0].mxu0 %v36
  %v148 = vpop.f32.mrb[0].mxu0
  %v149 = vadd.f32 0.0, %v148
  %v150 = vpop.f32.mrb[0].mxu0
  %v151 = vadd.f32 0.0, %v150
  %152 = vmatprep.mubr.f32.mxu0 0.0
  %153 = vmatmul.mubr.f32.gmra.mrb[0].mxu0 %v37
  %v154 = vpop.f32.mrb[0].mxu0
  %v155 = vadd.f32 0.0, %v154
  %v156 = vpop.f32.mrb[0].mxu0
  %v157 = vadd.f32 0.0, %v156
  %158 = vdwg.mxu0
  %v159 = vadd.f32 %v26, %v137
  %v160 = vadd.f32 %v27, %v139
  %v161 = vadd.f32 %v28, %v143
  %v162 = vadd.f32 %v29, %v145
  %v163 = vadd.f32 %v30, %v149
  %v164 = vadd.f32 %v31, %v151
  %v165 = vadd.f32 %v32, %v155
  %v166 = vadd.f32 %v33, %v157
  %167 = vst [vmem:[#allocation2] sm:$0xff] %v159
  %168 = vst [vmem:[#allocation2 + $0x8] sm:$0xff] %v160
  %169 = vst [vmem:[#allocation2 + $0x10] sm:$0xff] %v161
  %170 = vst [vmem:[#allocation2 + $0x18] sm:$0xff] %v162
  %171 = vst [vmem:[#allocation2 + $0x20] sm:$0xff] %v163
  %172 = vst [vmem:[#allocation2 + $0x28] sm:$0xff] %v164
  %173 = vst [vmem:[#allocation2 + $0x30] sm:$0xff] %v165
  %174 = vst [vmem:[#allocation2 + $0x38] sm:$0xff] %v166
  // Predicated region
  $region18: #{transformer_forward.32} parent=0 // pred_check
    %p175 = pneg %p14
  $region19: #{transformer_forward.32} parent=0 // pred_check_branch
    %177 = sbr.rel (%p175) target = $region21
  $region20: #{transformer_forward.32} parent=0 // pred_region
    %v178 = vld [vmem:[#allocation2] sm:$0xff]
    %v179 = vld [vmem:[#allocation2 + $0x8] sm:$0xff]
    %v180 = vld [vmem:[#allocation2 + $0x10] sm:$0xff]
    %v181 = vld [vmem:[#allocation2 + $0x18] sm:$0xff]
    %v182 = vld [vmem:[#allocation2 + $0x20] sm:$0xff]
    %v183 = vld [vmem:[#allocation2 + $0x28] sm:$0xff]
    %v184 = vld [vmem:[#allocation2 + $0x30] sm:$0xff]
    %v185 = vld [vmem:[#allocation2 + $0x38] sm:$0xff]
    %v186 = vld [vmem:[%s2] sm:$0x3]
    %v188 = vlaneseq
    %v189 = vshrl.u32 %v188, 7
    %v190 = vsub.s32 0, %v189
    %v191 = vrot.slane %v186, %v190
    %v192 = vlaneseq
    %v193 = vshrl.u32 %v192, 7
    %v194 = vsub.s32 1, %v193
    %v195 = vrot.slane %v186, %v194
    %v198 = vadd.f32 %v178, %v191
    %v199 = vadd.f32 %v179, %v195
    %v200 = vadd.f32 %v180, %v191
    %v201 = vadd.f32 %v181, %v195
    %v202 = vadd.f32 %v182, %v191
    %v203 = vadd.f32 %v183, %v195
    %v204 = vadd.f32 %v184, %v191
    %v205 = vadd.f32 %v185, %v195
    %v206 = vmax.f32 %v198, 0.0
    %v207 = vmax.f32 %v199, 0.0
    %v208 = vmax.f32 %v200, 0.0
    %v209 = vmax.f32 %v201, 0.0
    %v210 = vmax.f32 %v202, 0.0
    %v211 = vmax.f32 %v203, 0.0
    %v212 = vmax.f32 %v204, 0.0
    %v213 = vmax.f32 %v205, 0.0
    %214 = vst [vmem:[%s3] sm:$0xff] %v206
    %215 = vst [vmem:[%s3 + $0x8] sm:$0xff] %v207
    %216 = vst [vmem:[%s3 + $0x10] sm:$0xff] %v208
    %217 = vst [vmem:[%s3 + $0x18] sm:$0xff] %v209
    %218 = vst [vmem:[%s3 + $0x20] sm:$0xff] %v210
    %219 = vst [vmem:[%s3 + $0x28] sm:$0xff] %v211
    %220 = vst [vmem:[%s3 + $0x30] sm:$0xff] %v212
    %221 = vst [vmem:[%s3 + $0x38] sm:$0xff] %v213
  $region21: #{transformer_forward.32} parent=0 // pred_fallthru
    _
  // Predicated region
  $region22: #{transformer_forward.32} parent=0 // pred_check
    _
  $region23: #{transformer_forward.32} parent=0 // pred_check_branch
    %223 = sbr.rel (0) target = $region25
  $region24: #{transformer_forward.32} parent=0 // pred_region
    _
  $region25: #{transformer_forward.32} parent=0 // pred_fallthru
    _
  // Predicated region
  $region26: #{transformer_forward.32} parent=0 // pred_check
    _
  $region27: #{transformer_forward.32} parent=0 // pred_check_branch
    %225 = sbr.rel (0) target = $region29
  $region28: #{transformer_forward.32} parent=0 // pred_region
    _
  $region29: #{transformer_forward.32} parent=0 // pred_fallthru
    _

// kernel: transformer_forward.33
$region0: #{transformer_forward.33}
  #allocation0 [shape = 'u32[]', space=smem, size = 0x4, offset = 0x4, fixed_abs, tag = 'smem constant byte address 0x4 - core index']
  #allocation1 [shape = 'u32[144,128]{1,0:T(1,128)}', space=vmem, size = 0x12000, scoped, tag = 'internal scratch']
  #allocation2 [shape = 'f32[32,128]{1,0:T(8,128)}', space=vmem, size = 0x4000, scoped, tag = 'scratch operand']
  %s0 = inlined_call_operand.vmem [shape: f32[32,256], index: 0, kind: input, shape index: {}]
  %s1 = inlined_call_operand.vmem [shape: f32[256,128], index: 1, kind: input, shape index: {}]
  %s2 = inlined_call_operand.vmem [shape: f32[1,128], index: 2, kind: input, shape index: {}]
  %s3 = inlined_call_operand.vmem [shape: f32[32,128], index: 3, kind: input, shape index: {}]
  %s4 = inlined_call_operand.vmem [shape: f32[1,128], index: 4, kind: input, shape index: {}]
  %s5 = inlined_call_operand.vmem [shape: f32[1,128], index: 5, kind: input, shape index: {}]
  %s6 = inlined_call_operand.vmem [shape: f32[32,128], index: 6, kind: output, shape index: {}]
  %s7 = sld [smem:[#allocation0]]
  $region42: #{transformer_forward.33} parent=0
    _
  %s9 = ssub.s32 1, %s7
  %s10 = scalar_select 0, %s9, %s7
  // Predicated region
  $region2: #{transformer_forward.33} parent=0 // pred_check
    _
  $region3: #{transformer_forward.33} parent=0 // pred_check_branch
    %12 = sbr.rel (0) target = $region5
  $region4: #{transformer_forward.33} parent=0 // pred_region
    _
  $region5: #{transformer_forward.33} parent=0 // pred_fallthru
    _
  // Predicated region
  $region6: #{transformer_forward.33} parent=0 // pred_check
    _
  $region7: #{transformer_forward.33} parent=0 // pred_check_branch
    %14 = sbr.rel (0) target = $region9
  $region8: #{transformer_forward.33} parent=0 // pred_region
    _
  $region9: #{transformer_forward.33} parent=0 // pred_fallthru
    _
  // Predicated region
  $region10: #{transformer_forward.33} parent=0 // pred_check
    _
  $region11: #{transformer_forward.33} parent=0 // pred_check_branch
    %16 = sbr.rel (0) target = $region13
  $region12: #{transformer_forward.33} parent=0 // pred_region
    _
  $region13: #{transformer_forward.33} parent=0 // pred_fallthru
    _
  // Predicated region
  $region14: #{transformer_forward.33} parent=0 // pred_check
    _
  $region15: #{transformer_forward.33} parent=0 // pred_check_branch
    %18 = sbr.rel (0) target = $region17
  $region16: #{transformer_forward.33} parent=0 // pred_region
    _
  $region17: #{transformer_forward.33} parent=0 // pred_fallthru
    _
  // Predicated region
  $region18: #{transformer_forward.33} parent=0 // pred_check
    _
  $region19: #{transformer_forward.33} parent=0 // pred_check_branch
    %20 = sbr.rel (0) target = $region21
  $region20: #{transformer_forward.33} parent=0 // pred_region
    _
  $region21: #{transformer_forward.33} parent=0 // pred_fallthru
    _
  // Predicated region
  $region22: #{transformer_forward.33} parent=0 // pred_check
    _
  $region23: #{transformer_forward.33} parent=0 // pred_check_branch
    %22 = sbr.rel (0) target = $region25
  $region24: #{transformer_forward.33} parent=0 // pred_region
    _
  $region25: #{transformer_forward.33} parent=0 // pred_fallthru
    _
  %p23 = scmp.eq.s32.totalorder 0, 0
  // Predicated region
  $region26: #{transformer_forward.33} parent=0 // pred_check
    %p24 = pneg %p23
  $region27: #{transformer_forward.33} parent=0 // pred_check_branch
    %26 = sbr.rel (%p24) target = $region29
  $region28: #{transformer_forward.33} parent=0 // pred_region
    %27 = vst [vmem:[#allocation2] sm:$0xff] 0.0
    %28 = vst [vmem:[#allocation2 + $0x8] sm:$0xff] 0.0
    %29 = vst [vmem:[#allocation2 + $0x10] sm:$0xff] 0.0
    %30 = vst [vmem:[#allocation2 + $0x18] sm:$0xff] 0.0
  $region29: #{transformer_forward.33} parent=0 // pred_fallthru
    _
  %v31 = vld [vmem:[#allocation2] sm:$0xff]
  %v32 = vld [vmem:[#allocation2 + $0x8] sm:$0xff]
  %v33 = vld [vmem:[#allocation2 + $0x10] sm:$0xff]
  %v34 = vld [vmem:[#allocation2 + $0x18] sm:$0xff]
  %v35 = vld [vmem:[%s0] sm:$0xff]
  %v36 = vld [vmem:[%s0 + $0x8] sm:$0xff]
  %v37 = vld [vmem:[%s0 + $0x10] sm:$0xff]
  %v38 = vld [vmem:[%s0 + $0x18] sm:$0xff]
  %v39 = vld [vmem:[%s0 + $0x20] sm:$0xff]
  %v40 = vld [vmem:[%s0 + $0x28] sm:$0xff]
  %v41 = vld [vmem:[%s0 + $0x30] sm:$0xff]
  %v42 = vld [vmem:[%s0 + $0x38] sm:$0xff]
  %v43 = vld [vmem:[%s1] sm:$0xff]
  %v44 = vld [vmem:[%s1 + $0x8] sm:$0xff]
  %v45 = vld [vmem:[%s1 + $0x10] sm:$0xff]
  %v46 = vld [vmem:[%s1 + $0x18] sm:$0xff]
  %v47 = vld [vmem:[%s1 + $0x20] sm:$0xff]
  %v48 = vld [vmem:[%s1 + $0x28] sm:$0xff]
  %v49 = vld [vmem:[%s1 + $0x30] sm:$0xff]
  %v50 = vld [vmem:[%s1 + $0x38] sm:$0xff]
  %v51 = vld [vmem:[%s1 + $0x40] sm:$0xff]
  %v52 = vld [vmem:[%s1 + $0x48] sm:$0xff]
  %v53 = vld [vmem:[%s1 + $0x50] sm:$0xff]
  %v54 = vld [vmem:[%s1 + $0x58] sm:$0xff]
  %v55 = vld [vmem:[%s1 + $0x60] sm:$0xff]
  %v56 = vld [vmem:[%s1 + $0x68] sm:$0xff]
  %v57 = vld [vmem:[%s1 + $0x70] sm:$0xff]
  %v58 = vld [vmem:[%s1 + $0x78] sm:$0xff]
  %v59 = vld [vmem:[%s1 + $0x80] sm:$0xff]
  %v60 = vld [vmem:[%s1 + $0x88] sm:$0xff]
  %v61 = vld [vmem:[%s1 + $0x90] sm:$0xff]
  %v62 = vld [vmem:[%s1 + $0x98] sm:$0xff]
  %v63 = vld [vmem:[%s1 + $0xa0] sm:$0xff]
  %v64 = vld [vmem:[%s1 + $0xa8] sm:$0xff]
  %v65 = vld [vmem:[%s1 + $0xb0] sm:$0xff]
  %v66 = vld [vmem:[%s1 + $0xb8] sm:$0xff]
  %v67 = vld [vmem:[%s1 + $0xc0] sm:$0xff]
  %v68 = vld [vmem:[%s1 + $0xc8] sm:$0xff]
  %v69 = vld [vmem:[%s1 + $0xd0] sm:$0xff]
  %v70 = vld [vmem:[%s1 + $0xd8] sm:$0xff]
  %v71 = vld [vmem:[%s1 + $0xe0] sm:$0xff]
  %v72 = vld [vmem:[%s1 + $0xe8] sm:$0xff]
  %v73 = vld [vmem:[%s1 + $0xf0] sm:$0xff]
  %v74 = vld [vmem:[%s1 + $0xf8] sm:$0xff]
  %75 = vmatprep.subr.mxu0 0.0
  %76 = vmatpush1.msra.mxu0 %v43
  %77 = vmatprep.subr.mxu0 0.0
  %78 = vmatpush1.msra.mxu0 %v44
  %79 = vmatprep.subr.mxu0 0.0
  %80 = vmatpush1.msra.mxu0 %v45
  %81 = vmatprep.subr.mxu0 0.0
  %82 = vmatpush1.msra.mxu0 %v46
  %83 = vmatprep.subr.mxu0 0.0
  %84 = vmatpush1.msra.mxu0 %v47
  %85 = vmatprep.subr.mxu0 0.0
  %86 = vmatpush1.msra.mxu0 %v48
  %87 = vmatprep.subr.mxu0 0.0
  %88 = vmatpush1.msra.mxu0 %v49
  %89 = vmatprep.subr.mxu0 0.0
  %90 = vmatpush1.msra.mxu0 %v50
  %91 = vmatprep.subr.mxu0 0.0
  %92 = vmatpush1.msra.mxu0 %v51
  %93 = vmatprep.subr.mxu0 0.0
  %94 = vmatpush1.msra.mxu0 %v52
  %95 = vmatprep.subr.mxu0 0.0
  %96 = vmatpush1.msra.mxu0 %v53
  %97 = vmatprep.subr.mxu0 0.0
  %98 = vmatpush1.msra.mxu0 %v54
  %99 = vmatprep.subr.mxu0 0.0
  %100 = vmatpush1.msra.mxu0 %v55
  %101 = vmatprep.subr.mxu0 0.0
  %102 = vmatpush1.msra.mxu0 %v56
  %103 = vmatprep.subr.mxu0 0.0
  %104 = vmatpush1.msra.mxu0 %v57
  %105 = vmatprep.subr.mxu0 0.0
  %106 = vmatpush1.msra.mxu0 %v58
  %107 = vmatprep.subr.mxu0 0.0
  %108 = vmatpush1.msra.mxu0 %v59
  %109 = vmatprep.subr.mxu0 0.0
  %110 = vmatpush1.msra.mxu0 %v60
  %111 = vmatprep.subr.mxu0 0.0
  %112 = vmatpush1.msra.mxu0 %v61
  %113 = vmatprep.subr.mxu0 0.0
  %114 = vmatpush1.msra.mxu0 %v62
  %115 = vmatprep.subr.mxu0 0.0
  %116 = vmatpush1.msra.mxu0 %v63
  %117 = vmatprep.subr.mxu0 0.0
  %118 = vmatpush1.msra.mxu0 %v64
  %119 = vmatprep.subr.mxu0 0.0
  %120 = vmatpush1.msra.mxu0 %v65
  %121 = vmatprep.subr.mxu0 0.0
  %122 = vmatpush1.msra.mxu0 %v66
  %123 = vmatprep.subr.mxu0 0.0
  %124 = vmatpush1.msra.mxu0 %v67
  %125 = vmatprep.subr.mxu0 0.0
  %126 = vmatpush1.msra.mxu0 %v68
  %127 = vmatprep.subr.mxu0 0.0
  %128 = vmatpush1.msra.mxu0 %v69
  %129 = vmatprep.subr.mxu0 0.0
  %130 = vmatpush1.msra.mxu0 %v70
  %131 = vmatprep.subr.mxu0 0.0
  %132 = vmatpush1.msra.mxu0 %v71
  %133 = vmatprep.subr.mxu0 0.0
  %134 = vmatpush1.msra.mxu0 %v72
  %135 = vmatprep.subr.mxu0 0.0
  %136 = vmatpush1.msra.mxu0 %v73
  %137 = vmatprep.subr.mxu0 0.0
  %138 = vmatpush1.msra.mxu0 %v74
  %139 = vmatprep.mubr.f32.mxu0 %v36
  %140 = vmatmul.mubr.f32.gmra.mrb[0].mxu0 %v35
  %v141 = vpop.f32.mrb[0].mxu0
  %v142 = vadd.f32 0.0, %v141
  %v143 = vpop.f32.mrb[0].mxu0
  %144 = vmatprep.mubr.f32.mxu0 %v38
  %145 = vmatmul.mubr.f32.gmra.mrb[0].mxu0 %v37
  %v146 = vpop.f32.mrb[0].mxu0
  %v147 = vadd.f32 0.0, %v146
  %v148 = vpop.f32.mrb[0].mxu0
  %149 = vmatprep.mubr.f32.mxu0 %v40
  %150 = vmatmul.mubr.f32.gmra.mrb[0].mxu0 %v39
  %v151 = vpop.f32.mrb[0].mxu0
  %v152 = vadd.f32 0.0, %v151
  %v153 = vpop.f32.mrb[0].mxu0
  %154 = vmatprep.mubr.f32.mxu0 %v42
  %155 = vmatmul.mubr.f32.gmra.mrb[0].mxu0 %v41
  %v156 = vpop.f32.mrb[0].mxu0
  %v157 = vadd.f32 0.0, %v156
  %v158 = vpop.f32.mrb[0].mxu0
  %159 = vdwg.mxu0
  %v160 = vadd.f32 %v31, %v142
  %v161 = vadd.f32 %v32, %v147
  %v162 = vadd.f32 %v33, %v152
  %v163 = vadd.f32 %v34, %v157
  %164 = vst [vmem:[#allocation2] sm:$0xff] %v160
  %165 = vst [vmem:[#allocation2 + $0x8] sm:$0xff] %v161
  %166 = vst [vmem:[#allocation2 + $0x10] sm:$0xff] %v162
  %167 = vst [vmem:[#allocation2 + $0x18] sm:$0xff] %v163
  // Predicated region
  $region30: #{transformer_forward.33} parent=0 // pred_check
    %p168 = pneg %p23
  $region31: #{transformer_forward.33} parent=0 // pred_check_branch
    %170 = sbr.rel (%p168) target = $region33
  $region32: #{transformer_forward.33} parent=0 // pred_region
    %v171 = vld [vmem:[#allocation2] sm:$0xff]
    %v172 = vld [vmem:[#allocation2 + $0x8] sm:$0xff]
    %v173 = vld [vmem:[#allocation2 + $0x10] sm:$0xff]
    %v174 = vld [vmem:[#allocation2 + $0x18] sm:$0xff]
    %v175 = vld [vmem:[%s2] sm:$0x1]
    %v177 = vlaneseq
    %v178 = vshrl.u32 %v177, 7
    %v179 = vsub.s32 0, %v178
    %v180 = vrot.slane %v175, %v179
    %v182 = vadd.f32 %v171, %v180
    %v183 = vadd.f32 %v172, %v180
    %v184 = vadd.f32 %v173, %v180
    %v185 = vadd.f32 %v174, %v180
    %v186 = vld [vmem:[%s3] sm:$0xff]
    %v187 = vld [vmem:[%s3 + $0x8] sm:$0xff]
    %v188 = vld [vmem:[%s3 + $0x10] sm:$0xff]
    %v189 = vld [vmem:[%s3 + $0x18] sm:$0xff]
    %v190 = vadd.f32 %v182, %v186
    %v191 = vadd.f32 %v183, %v187
    %v192 = vadd.f32 %v184, %v188
    %v193 = vadd.f32 %v185, %v189
    %194 = vadd.xlane.f32.xlu0 %v190
    %v195 = vpop.xlane.xlu0 %194
    %196 = vadd.xlane.f32.xlu0 %v191
    %v197 = vpop.xlane.xlu0 %196
    %198 = vadd.xlane.f32.xlu0 %v192
    %v199 = vpop.xlane.xlu0 %198
    %200 = vadd.xlane.f32.xlu0 %v193
    %v201 = vpop.xlane.xlu0 %200
    %v202 = vrcp.pop 128.0
    %v203 = vmul.f32 %v195, %v202
    %v204 = vmul.f32 %v197, %v202
    %v205 = vmul.f32 %v199, %v202
    %v206 = vmul.f32 %v201, %v202
    %v207 = vsub.f32 %v190, %v203
    %v208 = vsub.f32 %v191, %v204
    %v209 = vsub.f32 %v192, %v205
    %v210 = vsub.f32 %v193, %v206
    %v211 = vmul.f32 %v207, %v207
    %v212 = vmul.f32 %v208, %v208
    %v213 = vmul.f32 %v209, %v209
    %v214 = vmul.f32 %v210, %v210
    %215 = vadd.xlane.f32.xlu0 %v211
    %v216 = vpop.xlane.xlu0 %215
    %217 = vadd.xlane.f32.xlu0 %v212
    %v218 = vpop.xlane.xlu0 %217
    %219 = vadd.xlane.f32.xlu0 %v213
    %v220 = vpop.xlane.xlu0 %219
    %221 = vadd.xlane.f32.xlu0 %v214
    %v222 = vpop.xlane.xlu0 %221
    %v223 = vmul.f32 %v216, %v202
    %v224 = vmul.f32 %v218, %v202
    %v225 = vmul.f32 %v220, %v202
    %v226 = vmul.f32 %v222, %v202
    %v227 = vadd.f32 %v223, 1e-12
    %v228 = vadd.f32 %v224, 1e-12
    %v229 = vadd.f32 %v225, 1e-12
    %v230 = vadd.f32 %v226, 1e-12
    %v231 = vrsqrt.pop %v227
    %v232 = vrsqrt.pop %v228
    %v233 = vrsqrt.pop %v229
    %v234 = vrsqrt.pop %v230
    %v235 = vmul.f32 %v207, %v231
    %v236 = vmul.f32 %v208, %v232
    %v237 = vmul.f32 %v209, %v233
    %v238 = vmul.f32 %v210, %v234
    %v239 = vld [vmem:[%s4] sm:$0x1]
    %v241 = vlaneseq
    %v242 = vshrl.u32 %v241, 7
    %v243 = vsub.s32 0, %v242
    %v244 = vrot.slane %v239, %v243
    %v246 = vmul.f32 %v235, %v244
    %v247 = vmul.f32 %v236, %v244
    %v248 = vmul.f32 %v237, %v244
    %v249 = vmul.f32 %v238, %v244
    %v250 = vld [vmem:[%s5] sm:$0x1]
    %v252 = vlaneseq
    %v253 = vshrl.u32 %v252, 7
    %v254 = vsub.s32 0, %v253
    %v255 = vrot.slane %v250, %v254
    %v257 = vadd.f32 %v246, %v255
    %v258 = vadd.f32 %v247, %v255
    %v259 = vadd.f32 %v248, %v255
    %v260 = vadd.f32 %v249, %v255
    %261 = vst [vmem:[%s6] sm:$0xff] %v257
    %262 = vst [vmem:[%s6 + $0x8] sm:$0xff] %v258
    %263 = vst [vmem:[%s6 + $0x10] sm:$0xff] %v259
    %264 = vst [vmem:[%s6 + $0x18] sm:$0xff] %v260
  $region33: #{transformer_forward.33} parent=0 // pred_fallthru
    _
  // Predicated region
  $region34: #{transformer_forward.33} parent=0 // pred_check
    _
  $region35: #{transformer_forward.33} parent=0 // pred_check_branch
    %266 = sbr.rel (0) target = $region37
  $region36: #{transformer_forward.33} parent=0 // pred_region
    _
  $region37: #{transformer_forward.33} parent=0 // pred_fallthru
    _
  // Predicated region
  $region38: #{transformer_forward.33} parent=0 // pred_check
    _
  $region39: #{transformer_forward.33} parent=0 // pred_check_branch
    %268 = sbr.rel (0) target = $region41
  $region40: #{transformer_forward.33} parent=0 // pred_region
    _
  $region41: #{transformer_forward.33} parent=0 // pred_fallthru
    _

// kernel: transformer_forward.30
$region0: #{transformer_forward.30}
  #allocation0 [shape = 'u32[]', space=smem, size = 0x4, offset = 0x4, fixed_abs, tag = 'smem constant byte address 0x4 - core index']
  #allocation1 [shape = 'u32[144,128]{1,0:T(1,128)}', space=vmem, size = 0x12000, scoped, tag = 'internal scratch']
  %s0 = inlined_call_operand.vmem [shape: f32[2,16,128], index: 0, kind: input, shape index: {}]
  %s1 = inlined_call_operand.vmem [shape: f32[2,16,256], index: 1, kind: input, shape index: {}]
  %s2 = inlined_call_operand.vmem [shape: f32[2,16,128], index: 2, kind: output, shape index: {}]
  %s3 = sld [smem:[#allocation0]]
  $region41: #{transformer_forward.30} parent=0
    _
  %s5 = ssub.s32 1, %s3
  %s6 = scalar_select 0, %s5, %s3
  loop: start=0, step=1, limit=4
  $region2: #{transformer_forward.30} parent=0 // loop_pre_header
    _
  $region3: #{transformer_forward.30} parent=0 // loop_header
    %s8 = sphi 0, %s12
    %p9 = scmp.ge.s32.totalorder %s8, 4
    %s18 = sphi 0, %s20
    %s21 = sphi 0, %s18
    %s22 = sphi 0, %s21
    %s38 = sphi 0, %s22
    %s44 = sphi 0, %s46
    %s47 = sphi 0, %s44
    %s48 = sphi 0, %s47
    %s64 = sphi 0, %s48
    %s70 = sphi 0, %s72
    %s73 = sphi 0, %s70
    %s74 = sphi 0, %s73
    %s90 = sphi 0, %s74
  $region4: #{transformer_forward.30} parent=0 // loop_header_branch
    %11 = sbr.rel (%p9) target = $region8
  $region5: #{transformer_forward.30} parent=0 // loop_body
    %s13 = ssub.s32 %s8, 1
    %s14 = ssub.s32 %s8, 2
    %s15 = sadd.s32 %s8, 1
    %s16 = ssub.s32 %s8, %s15
    %p17 = scmp.eq.s32.totalorder %s16, 0
    %s19 = sadd.s32 %s18, 1
    %s20 = scalar_select %p17, %s18, %s19
    %p23 = pneg %p17
    %p24 = scmp.eq.s32.totalorder %s8, 1
    %p25 = por %p23, %p24
    %p26 = scmp.ne.s32.totalorder %s18, %s21
    %p27 = scmp.eq.s32.totalorder %s8, 0
    %p28 = por %p26, %p27
    %p29 = scmp.ne.s32.totalorder %s18, %s21
    %p30 = scmp.eq.s32.totalorder %s13, 1
    %p31 = por %p29, %p30
    %p32 = scmp.ne.s32.totalorder %s21, %s22
    %p33 = scmp.eq.s32.totalorder %s13, 0
    %p34 = por %p32, %p33
    %p35 = scmp.ne.s32.totalorder %s21, %s22
    %p36 = scmp.eq.s32.totalorder %s14, 1
    %p37 = por %p35, %p36
    %p39 = scmp.ne.s32.totalorder %s22, %s38
    %p40 = scmp.eq.s32.totalorder %s14, 0
    %p41 = por %p39, %p40
    %s42 = ssub.s32 %s8, %s15
    %p43 = scmp.eq.s32.totalorder %s42, 0
    %s45 = sadd.s32 %s44, 1
    %s46 = scalar_select %p43, %s44, %s45
    %p49 = pneg %p43
    %p50 = scmp.eq.s32.totalorder %s8, 1
    %p51 = por %p49, %p50
    %p52 = scmp.ne.s32.totalorder %s44, %s47
    %p53 = scmp.eq.s32.totalorder %s8, 0
    %p54 = por %p52, %p53
    %p55 = scmp.ne.s32.totalorder %s44, %s47
    %p56 = scmp.eq.s32.totalorder %s13, 1
    %p57 = por %p55, %p56
    %p58 = scmp.ne.s32.totalorder %s47, %s48
    %p59 = scmp.eq.s32.totalorder %s13, 0
    %p60 = por %p58, %p59
    %p61 = scmp.ne.s32.totalorder %s47, %s48
    %p62 = scmp.eq.s32.totalorder %s14, 1
    %p63 = por %p61, %p62
    %p65 = scmp.ne.s32.totalorder %s48, %s64
    %p66 = scmp.eq.s32.totalorder %s14, 0
    %p67 = por %p65, %p66
    %s68 = ssub.s32 %s8, %s15
    %p69 = scmp.eq.s32.totalorder %s68, 0
    %s71 = sadd.s32 %s70, 1
    %s72 = scalar_select %p69, %s70, %s71
    %p75 = pneg %p69
    %p76 = scmp.eq.s32.totalorder %s8, 1
    %p77 = por %p75, %p76
    %p78 = scmp.ne.s32.totalorder %s70, %s73
    %p79 = scmp.eq.s32.totalorder %s8, 0
    %p80 = por %p78, %p79
    %p81 = scmp.ne.s32.totalorder %s70, %s73
    %p82 = scmp.eq.s32.totalorder %s13, 1
    %p83 = por %p81, %p82
    %p84 = scmp.ne.s32.totalorder %s73, %s74
    %p85 = scmp.eq.s32.totalorder %s13, 0
    %p86 = por %p84, %p85
    %p87 = scmp.ne.s32.totalorder %s73, %s74
    %p88 = scmp.eq.s32.totalorder %s14, 1
    %p89 = por %p87, %p88
    %p91 = scmp.ne.s32.totalorder %s74, %s90
    %p92 = scmp.eq.s32.totalorder %s14, 0
    %p93 = por %p91, %p92
    %p94 = scmp.le.s32.totalorder 1, %s8
    %p95 = scmp.lt.s32.totalorder %s8, 3
    %p96 = pnand %p94, %p95
    %p97 = pneg %p96
    // Predicated region
    $region9: #{transformer_forward.30} parent=5 // pred_check
      _
    $region10: #{transformer_forward.30} parent=5 // pred_check_branch
      %99 = sbr.rel (%p96) target = $region12
    $region11: #{transformer_forward.30} parent=5 // pred_region
      %s100 = ssub.s32 %s8, 1
    $region12: #{transformer_forward.30} parent=5 // pred_fallthru
      _
    %p101 = scmp.lt.s32.totalorder %s8, 2
    // Predicated region
    $region13: #{transformer_forward.30} parent=5 // pred_check
      %p102 = pneg %p101
    $region14: #{transformer_forward.30} parent=5 // pred_check_branch
      %104 = sbr.rel (%p102) target = $region16
    $region15: #{transformer_forward.30} parent=5 // pred_region
      // Predicated region
      $region17: #{transformer_forward.30} parent=15 // pred_check
        %p105 = pneg %p28
      $region18: #{transformer_forward.30} parent=15 // pred_check_branch
        %107 = sbr.rel (%p105) target = $region20
      $region19: #{transformer_forward.30} parent=15 // pred_region
        %p108 = scmp.lt.s32.totalorder %s8, 1
        %s109 = scalar_select %p108, %s8, 1
        %s110 = smul.addr %s109, 2
        %s111 = smul.addr %s110, 8
        %s112 = scalar_lea.vmem %s0, %s111
      $region20: #{transformer_forward.30} parent=15 // pred_fallthru
        _
      // Predicated region
      $region21: #{transformer_forward.30} parent=15 // pred_check
        %p113 = pneg %p54
      $region22: #{transformer_forward.30} parent=15 // pred_check_branch
        %115 = sbr.rel (%p113) target = $region24
      $region23: #{transformer_forward.30} parent=15 // pred_region
        %p116 = scmp.lt.s32.totalorder %s8, 1
        %s117 = scalar_select %p116, %s8, 1
        %s118 = smul.addr %s117, 4
        %s119 = smul.addr %s118, 8
        %s120 = scalar_lea.vmem %s1, %s119
      $region24: #{transformer_forward.30} parent=15 // pred_fallthru
        _
    $region16: #{transformer_forward.30} parent=5 // pred_fallthru
      _
    %p121 = scmp.le.s32.totalorder 1, %s8
    %p122 = scmp.lt.s32.totalorder %s8, 3
    %p123 = pnand %p121, %p122
    %p124 = pneg %p123
    // Predicated region
    $region25: #{transformer_forward.30} parent=5 // pred_check
      _
    $region26: #{transformer_forward.30} parent=5 // pred_check_branch
      %126 = sbr.rel (%p123) target = $region28
    $region27: #{transformer_forward.30} parent=5 // pred_region
      %s127 = ssub.s32 %s8, 1
      %p128 = scmp.lt.s32.totalorder %s13, 1
      %s129 = scalar_select %p128, %s13, 1
      %s130 = smul.addr %s129, 2
      %s131 = smul.addr %s130, 8
      %s132 = scalar_lea.vmem %s0, %s131
      %p133 = pneg %p34
      %p134 = pneg %p31
      %p135 = scmp.lt.s32.totalorder %s13, 1
      %s136 = scalar_select %p135, %s13, 1
      %s137 = smul.addr %s136, 4
      %s138 = smul.addr %s137, 8
      %s139 = scalar_lea.vmem %s1, %s138
      %p140 = pneg %p60
      %p141 = pneg %p57
      %p142 = pneg %p86
      %p143 = pneg %p83
      %p144 = scmp.lt.s32.totalorder %s13, 1
      %s145 = scalar_select %p144, %s13, 1
      %s146 = smul.addr %s145, 2
      %s147 = smul.addr %s146, 8
      %s148 = scalar_lea.vmem %s2, %s147
      %p149 = scmp.lt.s32.totalorder %s13, 1
      %s150 = scalar_select %p149, %s13, 1
      %s151 = smul.addr %s150, 2
      %s152 = smul.addr %s151, 8
      %s153 = scalar_lea.vmem %s0, %s152
      %p154 = scmp.lt.s32.totalorder %s13, 1
      %s155 = scalar_select %p154, %s13, 1
      %s156 = smul.addr %s155, 4
      %s157 = smul.addr %s156, 8
      %s158 = scalar_lea.vmem %s1, %s157
      %p159 = scmp.lt.s32.totalorder %s13, 1
      %s160 = scalar_select %p159, %s13, 1
      %s161 = smul.addr %s160, 2
      %s162 = smul.addr %s161, 8
      %s163 = scalar_lea.vmem %s2, %s162
      %v164 = vld [vmem:[%s153] sm:$0xff]
      %v165 = vld [vmem:[%s153 + $0x8] sm:$0xff]
      %v166 = vld [vmem:[%s158] sm:$0xff]
      %v167 = vld [vmem:[%s158 + $0x8] sm:$0xff]
      %v168 = vld [vmem:[%s158 + $0x10] sm:$0xff]
      %v169 = vld [vmem:[%s158 + $0x18] sm:$0xff]
      %vm170 = vcmask 261120
      %v172 = vsel %vm170, %v164, 0
      %v175 = vsel %vm170, %v165, 0
      %v178 = vsel %vm170, %v166, 0
      %v181 = vsel %vm170, %v168, 0
      %183 = vmatprep.subr.mxu0 0.0
      %184 = vmatpush1.xpose.msra.mxu0 %v178
      %185 = vmatprep.subr.mxu0 0.0
      %186 = vmatpush1.xpose.msra.mxu0 %v181
      %187 = vmatprep.subr.mxu0 0.0
      %188 = vmatpush1.xpose.msra.mxu0 0.0
      %189 = vmatprep.subr.mxu0 0.0
      %190 = vmatpush1.xpose.msra.mxu0 0.0
      %191 = vmatprep.subr.mxu0 0.0
      %192 = vmatpush1.xpose.msra.mxu0 0.0
      %193 = vmatprep.subr.mxu0 0.0
      %194 = vmatpush1.xpose.msra.mxu0 0.0
      %195 = vmatprep.subr.mxu0 0.0
      %196 = vmatpush1.xpose.msra.mxu0 0.0
      %197 = vmatprep.subr.mxu0 0.0
      %198 = vmatpush1.xpose.msra.mxu0 0.0
      %199 = vmatprep.subr.mxu0 0.0
      %200 = vmatpush1.xpose.msra.mxu0 0.0
      %201 = vmatprep.subr.mxu0 0.0
      %202 = vmatpush1.xpose.msra.mxu0 0.0
      %203 = vmatprep.subr.mxu0 0.0
      %204 = vmatpush1.xpose.msra.mxu0 0.0
      %205 = vmatprep.subr.mxu0 0.0
      %206 = vmatpush1.xpose.msra.mxu0 0.0
      %207 = vmatprep.subr.mxu0 0.0
      %208 = vmatpush1.xpose.msra.mxu0 0.0
      %209 = vmatprep.subr.mxu0 0.0
      %210 = vmatpush1.xpose.msra.mxu0 0.0
      %211 = vmatprep.subr.mxu0 0.0
      %212 = vmatpush1.xpose.msra.mxu0 0.0
      %213 = vmatprep.subr.mxu0 0.0
      %214 = vmatpush1.xpose.msra.mxu0 0.0
      %215 = vmatprep.subr.mxu0 0.0
      %216 = vmatpush1.xpose.msra.mxu0 0.0
      %217 = vmatprep.subr.mxu0 0.0
      %218 = vmatpush1.xpose.msra.mxu0 0.0
      %219 = vmatprep.subr.mxu0 0.0
      %220 = vmatpush1.xpose.msra.mxu0 0.0
      %221 = vmatprep.subr.mxu0 0.0
      %222 = vmatpush1.xpose.msra.mxu0 0.0
      %223 = vmatprep.subr.mxu0 0.0
      %224 = vmatpush1.xpose.msra.mxu0 0.0
      %225 = vmatprep.subr.mxu0 0.0
      %226 = vmatpush1.xpose.msra.mxu0 0.0
      %227 = vmatprep.subr.mxu0 0.0
      %228 = vmatpush1.xpose.msra.mxu0 0.0
      %229 = vmatprep.subr.mxu0 0.0
      %230 = vmatpush1.xpose.msra.mxu0 0.0
      %231 = vmatprep.subr.mxu0 0.0
      %232 = vmatpush1.xpose.msra.mxu0 0.0
      %233 = vmatprep.subr.mxu0 0.0
      %234 = vmatpush1.xpose.msra.mxu0 0.0
      %235 = vmatprep.subr.mxu0 0.0
      %236 = vmatpush1.xpose.msra.mxu0 0.0
      %237 = vmatprep.subr.mxu0 0.0
      %238 = vmatpush1.xpose.msra.mxu0 0.0
      %239 = vmatprep.subr.mxu0 0.0
      %240 = vmatpush1.xpose.msra.mxu0 0.0
      %241 = vmatprep.subr.mxu0 0.0
      %242 = vmatpush1.xpose.msra.mxu0 0.0
      %243 = vmatprep.subr.mxu0 0.0
      %244 = vmatpush1.xpose.msra.mxu0 0.0
      %245 = vmatprep.subr.mxu0 0.0
      %246 = vmatpush1.xpose.msra.mxu0 0.0
      %247 = vmatprep.mubr.f32.mxu0 0.0
      %248 = vmatmul.mubr.f32.gmra.mrb[0].mxu0 %v172
      %v249 = vpop.f32.mrb[0].mxu0
      %v250 = vadd.f32 0.0, %v249
      %v251 = vpop.f32.mrb[0].mxu0
      %252 = vmatprep.mubr.f32.mxu0 0.0
      %253 = vmatmul.mubr.f32.gmra.mrb[0].mxu0 %v175
      %v254 = vpop.f32.mrb[0].mxu0
      %v255 = vadd.f32 0.0, %v254
      %v256 = vpop.f32.mrb[0].mxu0
      %257 = vdwg.mxu0
      %v258 = vmul.f32 %v250, 0.17677669
      %v259 = vmul.f32 %v255, 0.17677669
      %vm260 = vcmask 130048
      %v261 = vsel %vm260, %v258, -inf
      %262 = vmax.xlane.f32.xlu0 %v261
      %v263 = vpop.xlane.xlu0 %262
      %v264 = vsel %vm260, %v259, -inf
      %265 = vmax.xlane.f32.xlu0 %v264
      %v266 = vpop.xlane.xlu0 %265
      %v267 = vsub.f32 %v258, %v263
      %v268 = vsub.f32 %v259, %v266
      %v269 = vmul.f32 %v267, 1.442695
      %v270 = vpow.pop %v269
      %v271 = vmul.f32 %v268, 1.442695
      %v272 = vpow.pop %v271
      %v273 = vsel %vm260, %v270, 0.0
      %274 = vadd.xlane.f32.xlu0 %v273
      %v275 = vpop.xlane.xlu0 %274
      %v276 = vsel %vm260, %v272, 0.0
      %277 = vadd.xlane.f32.xlu0 %v276
      %v278 = vpop.xlane.xlu0 %277
      %v279 = vrcp.pop %v275
      %v280 = vrcp.pop %v278
      %v281 = vmul.f32 %v270, %v279
      %v282 = vmul.f32 %v272, %v280
      %v284 = vsel %vm260, %v281, 0
      %v287 = vsel %vm260, %v282, 0
      %289 = vmatprep.subr.mxu0 0.0
      %290 = vmatpush1.msra.mxu0 %v167
      %291 = vmatprep.subr.mxu0 0.0
      %292 = vmatpush1.msra.mxu0 %v169
      %293 = vmatprep.subr.mxu0 0.0
      %294 = vmatpush1.msra.mxu0 0.0
      %295 = vmatprep.subr.mxu0 0.0
      %296 = vmatpush1.msra.mxu0 0.0
      %297 = vmatprep.subr.mxu0 0.0
      %298 = vmatpush1.msra.mxu0 0.0
      %299 = vmatprep.subr.mxu0 0.0
      %300 = vmatpush1.msra.mxu0 0.0
      %301 = vmatprep.subr.mxu0 0.0
      %302 = vmatpush1.msra.mxu0 0.0
      %303 = vmatprep.subr.mxu0 0.0
      %304 = vmatpush1.msra.mxu0 0.0
      %305 = vmatprep.subr.mxu0 0.0
      %306 = vmatpush1.msra.mxu0 0.0
      %307 = vmatprep.subr.mxu0 0.0
      %308 = vmatpush1.msra.mxu0 0.0
      %309 = vmatprep.subr.mxu0 0.0
      %310 = vmatpush1.msra.mxu0 0.0
      %311 = vmatprep.subr.mxu0 0.0
      %312 = vmatpush1.msra.mxu0 0.0
      %313 = vmatprep.subr.mxu0 0.0
      %314 = vmatpush1.msra.mxu0 0.0
      %315 = vmatprep.subr.mxu0 0.0
      %316 = vmatpush1.msra.mxu0 0.0
      %317 = vmatprep.subr.mxu0 0.0
      %318 = vmatpush1.msra.mxu0 0.0
      %319 = vmatprep.subr.mxu0 0.0
      %320 = vmatpush1.msra.mxu0 0.0
      %321 = vmatprep.subr.mxu0 0.0
      %322 = vmatpush1.msra.mxu0 0.0
      %323 = vmatprep.subr.mxu0 0.0
      %324 = vmatpush1.msra.mxu0 0.0
      %325 = vmatprep.subr.mxu0 0.0
      %326 = vmatpush1.msra.mxu0 0.0
      %327 = vmatprep.subr.mxu0 0.0
      %328 = vmatpush1.msra.mxu0 0.0
      %329 = vmatprep.subr.mxu0 0.0
      %330 = vmatpush1.msra.mxu0 0.0
      %331 = vmatprep.subr.mxu0 0.0
      %332 = vmatpush1.msra.mxu0 0.0
      %333 = vmatprep.subr.mxu0 0.0
      %334 = vmatpush1.msra.mxu0 0.0
      %335 = vmatprep.subr.mxu0 0.0
      %336 = vmatpush1.msra.mxu0 0.0
      %337 = vmatprep.subr.mxu0 0.0
      %338 = vmatpush1.msra.mxu0 0.0
      %339 = vmatprep.subr.mxu0 0.0
      %340 = vmatpush1.msra.mxu0 0.0
      %341 = vmatprep.subr.mxu0 0.0
      %342 = vmatpush1.msra.mxu0 0.0
      %343 = vmatprep.subr.mxu0 0.0
      %344 = vmatpush1.msra.mxu0 0.0
      %345 = vmatprep.subr.mxu0 0.0
      %346 = vmatpush1.msra.mxu0 0.0
      %347 = vmatprep.subr.mxu0 0.0
      %348 = vmatpush1.msra.mxu0 0.0
      %349 = vmatprep.subr.mxu0 0.0
      %350 = vmatpush1.msra.mxu0 0.0
      %351 = vmatprep.subr.mxu0 0.0
      %352 = vmatpush1.msra.mxu0 0.0
      %353 = vmatprep.mubr.f32.mxu0 0.0
      %354 = vmatmul.mubr.f32.gmra.mrb[0].mxu0 %v284
      %v355 = vpop.f32.mrb[0].mxu0
      %v356 = vadd.f32 0.0, %v355
      %v357 = vpop.f32.mrb[0].mxu0
      %358 = vmatprep.mubr.f32.mxu0 0.0
      %359 = vmatmul.mubr.f32.gmra.mrb[0].mxu0 %v287
      %v360 = vpop.f32.mrb[0].mxu0
      %v361 = vadd.f32 0.0, %v360
      %v362 = vpop.f32.mrb[0].mxu0
      %363 = vdwg.mxu0
      %364 = vrot.lane.b32.xlu0 %v164, 96
      %v365 = vpop.permute.xlu0 %364
      %366 = vrot.lane.b32.xlu0 %v165, 96
      %v367 = vpop.permute.xlu0 %366
      %368 = vrot.lane.b32.xlu0 %v166, 96
      %v369 = vpop.permute.xlu0 %368
      %370 = vrot.lane.b32.xlu0 %v168, 96
      %v371 = vpop.permute.xlu0 %370
      %v372 = vsel %vm170, %v365, 0
      %v374 = vsel %vm170, %v367, 0
      %v376 = vsel %vm170, %v369, 0
      %v378 = vsel %vm170, %v371, 0
      %380 = vmatprep.subr.mxu0 0.0
      %381 = vmatpush1.xpose.msra.mxu0 %v376
      %382 = vmatprep.subr.mxu0 0.0
      %383 = vmatpush1.xpose.msra.mxu0 %v378
      %384 = vmatprep.subr.mxu0 0.0
      %385 = vmatpush1.xpose.msra.mxu0 0.0
      %386 = vmatprep.subr.mxu0 0.0
      %387 = vmatpush1.xpose.msra.mxu0 0.0
      %388 = vmatprep.subr.mxu0 0.0
      %389 = vmatpush1.xpose.msra.mxu0 0.0
      %390 = vmatprep.subr.mxu0 0.0
      %391 = vmatpush1.xpose.msra.mxu0 0.0
      %392 = vmatprep.subr.mxu0 0.0
      %393 = vmatpush1.xpose.msra.mxu0 0.0
      %394 = vmatprep.subr.mxu0 0.0
      %395 = vmatpush1.xpose.msra.mxu0 0.0
      %396 = vmatprep.subr.mxu0 0.0
      %397 = vmatpush1.xpose.msra.mxu0 0.0
      %398 = vmatprep.subr.mxu0 0.0
      %399 = vmatpush1.xpose.msra.mxu0 0.0
      %400 = vmatprep.subr.mxu0 0.0
      %401 = vmatpush1.xpose.msra.mxu0 0.0
      %402 = vmatprep.subr.mxu0 0.0
      %403 = vmatpush1.xpose.msra.mxu0 0.0
      %404 = vmatprep.subr.mxu0 0.0
      %405 = vmatpush1.xpose.msra.mxu0 0.0
      %406 = vmatprep.subr.mxu0 0.0
      %407 = vmatpush1.xpose.msra.mxu0 0.0
      %408 = vmatprep.subr.mxu0 0.0
      %409 = vmatpush1.xpose.msra.mxu0 0.0
      %410 = vmatprep.subr.mxu0 0.0
      %411 = vmatpush1.xpose.msra.mxu0 0.0
      %412 = vmatprep.subr.mxu0 0.0
      %413 = vmatpush1.xpose.msra.mxu0 0.0
      %414 = vmatprep.subr.mxu0 0.0
      %415 = vmatpush1.xpose.msra.mxu0 0.0
      %416 = vmatprep.subr.mxu0 0.0
      %417 = vmatpush1.xpose.msra.mxu0 0.0
      %418 = vmatprep.subr.mxu0 0.0
      %419 = vmatpush1.xpose.msra.mxu0 0.0
      %420 = vmatprep.subr.mxu0 0.0
      %421 = vmatpush1.xpose.msra.mxu0 0.0
      %422 = vmatprep.subr.mxu0 0.0
      %423 = vmatpush1.xpose.msra.mxu0 0.0
      %424 = vmatprep.subr.mxu0 0.0
      %425 = vmatpush1.xpose.msra.mxu0 0.0
      %426 = vmatprep.subr.mxu0 0.0
      %427 = vmatpush1.xpose.msra.mxu0 0.0
      %428 = vmatprep.subr.mxu0 0.0
      %429 = vmatpush1.xpose.msra.mxu0 0.0
      %430 = vmatprep.subr.mxu0 0.0
      %431 = vmatpush1.xpose.msra.mxu0 0.0
      %432 = vmatprep.subr.mxu0 0.0
      %433 = vmatpush1.xpose.msra.mxu0 0.0
      %434 = vmatprep.subr.mxu0 0.0
      %435 = vmatpush1.xpose.msra.mxu0 0.0
      %436 = vmatprep.subr.mxu0 0.0
      %437 = vmatpush1.xpose.msra.mxu0 0.0
      %438 = vmatprep.subr.mxu0 0.0
      %439 = vmatpush1.xpose.msra.mxu0 0.0
      %440 = vmatprep.subr.mxu0 0.0
      %441 = vmatpush1.xpose.msra.mxu0 0.0
      %442 = vmatprep.subr.mxu0 0.0
      %443 = vmatpush1.xpose.msra.mxu0 0.0
      %444 = vmatprep.mubr.f32.mxu0 0.0
      %445 = vmatmul.mubr.f32.gmra.mrb[0].mxu0 %v372
      %v446 = vpop.f32.mrb[0].mxu0
      %v447 = vadd.f32 0.0, %v446
      %v448 = vpop.f32.mrb[0].mxu0
      %449 = vmatprep.mubr.f32.mxu0 0.0
      %450 = vmatmul.mubr.f32.gmra.mrb[0].mxu0 %v374
      %v451 = vpop.f32.mrb[0].mxu0
      %v452 = vadd.f32 0.0, %v451
      %v453 = vpop.f32.mrb[0].mxu0
      %454 = vdwg.mxu0
      %v455 = vmul.f32 %v447, 0.17677669
      %v456 = vmul.f32 %v452, 0.17677669
      %v457 = vsel %vm260, %v455, -inf
      %458 = vmax.xlane.f32.xlu0 %v457
      %v459 = vpop.xlane.xlu0 %458
      %v460 = vsel %vm260, %v456, -inf
      %461 = vmax.xlane.f32.xlu0 %v460
      %v462 = vpop.xlane.xlu0 %461
      %v463 = vsub.f32 %v455, %v459
      %v464 = vsub.f32 %v456, %v462
      %v465 = vmul.f32 %v463, 1.442695
      %v466 = vpow.pop %v465
      %v467 = vmul.f32 %v464, 1.442695
      %v468 = vpow.pop %v467
      %v469 = vsel %vm260, %v466, 0.0
      %470 = vadd.xlane.f32.xlu0 %v469
      %v471 = vpop.xlane.xlu0 %470
      %v472 = vsel %vm260, %v468, 0.0
      %473 = vadd.xlane.f32.xlu0 %v472
      %v474 = vpop.xlane.xlu0 %473
      %v475 = vrcp.pop %v471
      %v476 = vrcp.pop %v474
      %v477 = vmul.f32 %v466, %v475
      %v478 = vmul.f32 %v468, %v476
      %481 = vrot.lane.b32.xlu0 %v167, 96
      %v482 = vpop.permute.xlu0 %481
      %483 = vrot.lane.b32.xlu0 %v169, 96
      %v484 = vpop.permute.xlu0 %483
      %v488 = vsel %vm260, %v477, 0
      %v491 = vsel %vm260, %v478, 0
      %493 = vmatprep.subr.mxu0 0.0
      %494 = vmatpush1.msra.mxu0 %v482
      %495 = vmatprep.subr.mxu0 0.0
      %496 = vmatpush1.msra.mxu0 %v484
      %497 = vmatprep.subr.mxu0 0.0
      %498 = vmatpush1.msra.mxu0 0.0
      %499 = vmatprep.subr.mxu0 0.0
      %500 = vmatpush1.msra.mxu0 0.0
      %501 = vmatprep.subr.mxu0 0.0
      %502 = vmatpush1.msra.mxu0 0.0
      %503 = vmatprep.subr.mxu0 0.0
      %504 = vmatpush1.msra.mxu0 0.0
      %505 = vmatprep.subr.mxu0 0.0
      %506 = vmatpush1.msra.mxu0 0.0
      %507 = vmatprep.subr.mxu0 0.0
      %508 = vmatpush1.msra.mxu0 0.0
      %509 = vmatprep.subr.mxu0 0.0
      %510 = vmatpush1.msra.mxu0 0.0
      %511 = vmatprep.subr.mxu0 0.0
      %512 = vmatpush1.msra.mxu0 0.0
      %513 = vmatprep.subr.mxu0 0.0
      %514 = vmatpush1.msra.mxu0 0.0
      %515 = vmatprep.subr.mxu0 0.0
      %516 = vmatpush1.msra.mxu0 0.0
      %517 = vmatprep.subr.mxu0 0.0
      %518 = vmatpush1.msra.mxu0 0.0
      %519 = vmatprep.subr.mxu0 0.0
      %520 = vmatpush1.msra.mxu0 0.0
      %521 = vmatprep.subr.mxu0 0.0
      %522 = vmatpush1.msra.mxu0 0.0
      %523 = vmatprep.subr.mxu0 0.0
      %524 = vmatpush1.msra.mxu0 0.0
      %525 = vmatprep.subr.mxu0 0.0
      %526 = vmatpush1.msra.mxu0 0.0
      %527 = vmatprep.subr.mxu0 0.0
      %528 = vmatpush1.msra.mxu0 0.0
      %529 = vmatprep.subr.mxu0 0.0
      %530 = vmatpush1.msra.mxu0 0.0
      %531 = vmatprep.subr.mxu0 0.0
      %532 = vmatpush1.msra.mxu0 0.0
      %533 = vmatprep.subr.mxu0 0.0
      %534 = vmatpush1.msra.mxu0 0.0
      %535 = vmatprep.subr.mxu0 0.0
      %536 = vmatpush1.msra.mxu0 0.0
      %537 = vmatprep.subr.mxu0 0.0
      %538 = vmatpush1.msra.mxu0 0.0
      %539 = vmatprep.subr.mxu0 0.0
      %540 = vmatpush1.msra.mxu0 0.0
      %541 = vmatprep.subr.mxu0 0.0
      %542 = vmatpush1.msra.mxu0 0.0
      %543 = vmatprep.subr.mxu0 0.0
      %544 = vmatpush1.msra.mxu0 0.0
      %545 = vmatprep.subr.mxu0 0.0
      %546 = vmatpush1.msra.mxu0 0.0
      %547 = vmatprep.subr.mxu0 0.0
      %548 = vmatpush1.msra.mxu0 0.0
      %549 = vmatprep.subr.mxu0 0.0
      %550 = vmatpush1.msra.mxu0 0.0
      %551 = vmatprep.subr.mxu0 0.0
      %552 = vmatpush1.msra.mxu0 0.0
      %553 = vmatprep.subr.mxu0 0.0
      %554 = vmatpush1.msra.mxu0 0.0
      %555 = vmatprep.subr.mxu0 0.0
      %556 = vmatpush1.msra.mxu0 0.0
      %557 = vmatprep.mubr.f32.mxu0 0.0
      %558 = vmatmul.mubr.f32.gmra.mrb[0].mxu0 %v488
      %v559 = vpop.f32.mrb[0].mxu0
      %v560 = vadd.f32 0.0, %v559
      %v561 = vpop.f32.mrb[0].mxu0
      %562 = vmatprep.mubr.f32.mxu0 0.0
      %563 = vmatmul.mubr.f32.gmra.mrb[0].mxu0 %v491
      %v564 = vpop.f32.mrb[0].mxu0
      %v565 = vadd.f32 0.0, %v564
      %v566 = vpop.f32.mrb[0].mxu0
      %567 = vdwg.mxu0
      %568 = vrot.lane.b32.xlu0 %v164, 64
      %v569 = vpop.permute.xlu0 %568
      %570 = vrot.lane.b32.xlu0 %v165, 64
      %v571 = vpop.permute.xlu0 %570
      %572 = vrot.lane.b32.xlu0 %v166, 64
      %v573 = vpop.permute.xlu0 %572
      %574 = vrot.lane.b32.xlu0 %v168, 64
      %v575 = vpop.permute.xlu0 %574
      %v576 = vsel %vm170, %v569, 0
      %v578 = vsel %vm170, %v571, 0
      %v580 = vsel %vm170, %v573, 0
      %v582 = vsel %vm170, %v575, 0
      %584 = vmatprep.subr.mxu0 0.0
      %585 = vmatpush1.xpose.msra.mxu0 %v580
      %586 = vmatprep.subr.mxu0 0.0
      %587 = vmatpush1.xpose.msra.mxu0 %v582
      %588 = vmatprep.subr.mxu0 0.0
      %589 = vmatpush1.xpose.msra.mxu0 0.0
      %590 = vmatprep.subr.mxu0 0.0
      %591 = vmatpush1.xpose.msra.mxu0 0.0
      %592 = vmatprep.subr.mxu0 0.0
      %593 = vmatpush1.xpose.msra.mxu0 0.0
      %594 = vmatprep.subr.mxu0 0.0
      %595 = vmatpush1.xpose.msra.mxu0 0.0
      %596 = vmatprep.subr.mxu0 0.0
      %597 = vmatpush1.xpose.msra.mxu0 0.0
      %598 = vmatprep.subr.mxu0 0.0
      %599 = vmatpush1.xpose.msra.mxu0 0.0
      %600 = vmatprep.subr.mxu0 0.0
      %601 = vmatpush1.xpose.msra.mxu0 0.0
      %602 = vmatprep.subr.mxu0 0.0
      %603 = vmatpush1.xpose.msra.mxu0 0.0
      %604 = vmatprep.subr.mxu0 0.0
      %605 = vmatpush1.xpose.msra.mxu0 0.0
      %606 = vmatprep.subr.mxu0 0.0
      %607 = vmatpush1.xpose.msra.mxu0 0.0
      %608 = vmatprep.subr.mxu0 0.0
      %609 = vmatpush1.xpose.msra.mxu0 0.0
      %610 = vmatprep.subr.mxu0 0.0
      %611 = vmatpush1.xpose.msra.mxu0 0.0
      %612 = vmatprep.subr.mxu0 0.0
      %613 = vmatpush1.xpose.msra.mxu0 0.0
      %614 = vmatprep.subr.mxu0 0.0
      %615 = vmatpush1.xpose.msra.mxu0 0.0
      %616 = vmatprep.subr.mxu0 0.0
      %617 = vmatpush1.xpose.msra.mxu0 0.0
      %618 = vmatprep.subr.mxu0 0.0
      %619 = vmatpush1.xpose.msra.mxu0 0.0
      %620 = vmatprep.subr.mxu0 0.0
      %621 = vmatpush1.xpose.msra.mxu0 0.0
      %622 = vmatprep.subr.mxu0 0.0
      %623 = vmatpush1.xpose.msra.mxu0 0.0
      %624 = vmatprep.subr.mxu0 0.0
      %625 = vmatpush1.xpose.msra.mxu0 0.0
      %626 = vmatprep.subr.mxu0 0.0
      %627 = vmatpush1.xpose.msra.mxu0 0.0
      %628 = vmatprep.subr.mxu0 0.0
      %629 = vmatpush1.xpose.msra.mxu0 0.0
      %630 = vmatprep.subr.mxu0 0.0
      %631 = vmatpush1.xpose.msra.mxu0 0.0
      %632 = vmatprep.subr.mxu0 0.0
      %633 = vmatpush1.xpose.msra.mxu0 0.0
      %634 = vmatprep.subr.mxu0 0.0
      %635 = vmatpush1.xpose.msra.mxu0 0.0
      %636 = vmatprep.subr.mxu0 0.0
      %637 = vmatpush1.xpose.msra.mxu0 0.0
      %638 = vmatprep.subr.mxu0 0.0
      %639 = vmatpush1.xpose.msra.mxu0 0.0
      %640 = vmatprep.subr.mxu0 0.0
      %641 = vmatpush1.xpose.msra.mxu0 0.0
      %642 = vmatprep.subr.mxu0 0.0
      %643 = vmatpush1.xpose.msra.mxu0 0.0
      %644 = vmatprep.subr.mxu0 0.0
      %645 = vmatpush1.xpose.msra.mxu0 0.0
      %646 = vmatprep.subr.mxu0 0.0
      %647 = vmatpush1.xpose.msra.mxu0 0.0
      %648 = vmatprep.mubr.f32.mxu0 0.0
      %649 = vmatmul.mubr.f32.gmra.mrb[0].mxu0 %v576
      %v650 = vpop.f32.mrb[0].mxu0
      %v651 = vadd.f32 0.0, %v650
      %v652 = vpop.f32.mrb[0].mxu0
      %653 = vmatprep.mubr.f32.mxu0 0.0
      %654 = vmatmul.mubr.f32.gmra.mrb[0].mxu0 %v578
      %v655 = vpop.f32.mrb[0].mxu0
      %v656 = vadd.f32 0.0, %v655
      %v657 = vpop.f32.mrb[0].mxu0
      %658 = vdwg.mxu0
      %v659 = vmul.f32 %v651, 0.17677669
      %v660 = vmul.f32 %v656, 0.17677669
      %v661 = vsel %vm260, %v659, -inf
      %662 = vmax.xlane.f32.xlu0 %v661
      %v663 = vpop.xlane.xlu0 %662
      %v664 = vsel %vm260, %v660, -inf
      %665 = vmax.xlane.f32.xlu0 %v664
      %v666 = vpop.xlane.xlu0 %665
      %v667 = vsub.f32 %v659, %v663
      %v668 = vsub.f32 %v660, %v666
      %v669 = vmul.f32 %v667, 1.442695
      %v670 = vpow.pop %v669
      %v671 = vmul.f32 %v668, 1.442695
      %v672 = vpow.pop %v671
      %v673 = vsel %vm260, %v670, 0.0
      %674 = vadd.xlane.f32.xlu0 %v673
      %v675 = vpop.xlane.xlu0 %674
      %v676 = vsel %vm260, %v672, 0.0
      %677 = vadd.xlane.f32.xlu0 %v676
      %v678 = vpop.xlane.xlu0 %677
      %v679 = vrcp.pop %v675
      %v680 = vrcp.pop %v678
      %v681 = vmul.f32 %v670, %v679
      %v682 = vmul.f32 %v672, %v680
      %683 = vrot.lane.b32.xlu0 %v167, 64
      %v684 = vpop.permute.xlu0 %683
      %685 = vrot.lane.b32.xlu0 %v169, 64
      %v686 = vpop.permute.xlu0 %685
      %v690 = vsel %vm260, %v681, 0
      %v693 = vsel %vm260, %v682, 0
      %695 = vmatprep.subr.mxu0 0.0
      %696 = vmatpush1.msra.mxu0 %v684
      %697 = vmatprep.subr.mxu0 0.0
      %698 = vmatpush1.msra.mxu0 %v686
      %699 = vmatprep.subr.mxu0 0.0
      %700 = vmatpush1.msra.mxu0 0.0
      %701 = vmatprep.subr.mxu0 0.0
      %702 = vmatpush1.msra.mxu0 0.0
      %703 = vmatprep.subr.mxu0 0.0
      %704 = vmatpush1.msra.mxu0 0.0
      %705 = vmatprep.subr.mxu0 0.0
      %706 = vmatpush1.msra.mxu0 0.0
      %707 = vmatprep.subr.mxu0 0.0
      %708 = vmatpush1.msra.mxu0 0.0
      %709 = vmatprep.subr.mxu0 0.0
      %710 = vmatpush1.msra.mxu0 0.0
      %711 = vmatprep.subr.mxu0 0.0
      %712 = vmatpush1.msra.mxu0 0.0
      %713 = vmatprep.subr.mxu0 0.0
      %714 = vmatpush1.msra.mxu0 0.0
      %715 = vmatprep.subr.mxu0 0.0
      %716 = vmatpush1.msra.mxu0 0.0
      %717 = vmatprep.subr.mxu0 0.0
      %718 = vmatpush1.msra.mxu0 0.0
      %719 = vmatprep.subr.mxu0 0.0
      %720 = vmatpush1.msra.mxu0 0.0
      %721 = vmatprep.subr.mxu0 0.0
      %722 = vmatpush1.msra.mxu0 0.0
      %723 = vmatprep.subr.mxu0 0.0
      %724 = vmatpush1.msra.mxu0 0.0
      %725 = vmatprep.subr.mxu0 0.0
      %726 = vmatpush1.msra.mxu0 0.0
      %727 = vmatprep.subr.mxu0 0.0
      %728 = vmatpush1.msra.mxu0 0.0
      %729 = vmatprep.subr.mxu0 0.0
      %730 = vmatpush1.msra.mxu0 0.0
      %731 = vmatprep.subr.mxu0 0.0
      %732 = vmatpush1.msra.mxu0 0.0
      %733 = vmatprep.subr.mxu0 0.0
      %734 = vmatpush1.msra.mxu0 0.0
      %735 = vmatprep.subr.mxu0 0.0
      %736 = vmatpush1.msra.mxu0 0.0
      %737 = vmatprep.subr.mxu0 0.0
      %738 = vmatpush1.msra.mxu0 0.0
      %739 = vmatprep.subr.mxu0 0.0
      %740 = vmatpush1.msra.mxu0 0.0
      %741 = vmatprep.subr.mxu0 0.0
      %742 = vmatpush1.msra.mxu0 0.0
      %743 = vmatprep.subr.mxu0 0.0
      %744 = vmatpush1.msra.mxu0 0.0
      %745 = vmatprep.subr.mxu0 0.0
      %746 = vmatpush1.msra.mxu0 0.0
      %747 = vmatprep.subr.mxu0 0.0
      %748 = vmatpush1.msra.mxu0 0.0
      %749 = vmatprep.subr.mxu0 0.0
      %750 = vmatpush1.msra.mxu0 0.0
      %751 = vmatprep.subr.mxu0 0.0
      %752 = vmatpush1.msra.mxu0 0.0
      %753 = vmatprep.subr.mxu0 0.0
      %754 = vmatpush1.msra.mxu0 0.0
      %755 = vmatprep.subr.mxu0 0.0
      %756 = vmatpush1.msra.mxu0 0.0
      %757 = vmatprep.subr.mxu0 0.0
      %758 = vmatpush1.msra.mxu0 0.0
      %759 = vmatprep.mubr.f32.mxu0 0.0
      %760 = vmatmul.mubr.f32.gmra.mrb[0].mxu0 %v690
      %v761 = vpop.f32.mrb[0].mxu0
      %v762 = vadd.f32 0.0, %v761
      %v763 = vpop.f32.mrb[0].mxu0
      %764 = vmatprep.mubr.f32.mxu0 0.0
      %765 = vmatmul.mubr.f32.gmra.mrb[0].mxu0 %v693
      %v766 = vpop.f32.mrb[0].mxu0
      %v767 = vadd.f32 0.0, %v766
      %v768 = vpop.f32.mrb[0].mxu0
      %769 = vdwg.mxu0
      %770 = vrot.lane.b32.xlu0 %v164, 32
      %v771 = vpop.permute.xlu0 %770
      %772 = vrot.lane.b32.xlu0 %v165, 32
      %v773 = vpop.permute.xlu0 %772
      %774 = vrot.lane.b32.xlu0 %v166, 32
      %v775 = vpop.permute.xlu0 %774
      %776 = vrot.lane.b32.xlu0 %v168, 32
      %v777 = vpop.permute.xlu0 %776
      %v778 = vsel %vm170, %v771, 0
      %v780 = vsel %vm170, %v773, 0
      %v782 = vsel %vm170, %v775, 0
      %v784 = vsel %vm170, %v777, 0
      %786 = vmatprep.subr.mxu0 0.0
      %787 = vmatpush1.xpose.msra.mxu0 %v782
      %788 = vmatprep.subr.mxu0 0.0
      %789 = vmatpush1.xpose.msra.mxu0 %v784
      %790 = vmatprep.subr.mxu0 0.0
      %791 = vmatpush1.xpose.msra.mxu0 0.0
      %792 = vmatprep.subr.mxu0 0.0
      %793 = vmatpush1.xpose.msra.mxu0 0.0
      %794 = vmatprep.subr.mxu0 0.0
      %795 = vmatpush1.xpose.msra.mxu0 0.0
      %796 = vmatprep.subr.mxu0 0.0
      %797 = vmatpush1.xpose.msra.mxu0 0.0
      %798 = vmatprep.subr.mxu0 0.0
      %799 = vmatpush1.xpose.msra.mxu0 0.0
      %800 = vmatprep.subr.mxu0 0.0
      %801 = vmatpush1.xpose.msra.mxu0 0.0
      %802 = vmatprep.subr.mxu0 0.0
      %803 = vmatpush1.xpose.msra.mxu0 0.0
      %804 = vmatprep.subr.mxu0 0.0
      %805 = vmatpush1.xpose.msra.mxu0 0.0
      %806 = vmatprep.subr.mxu0 0.0
      %807 = vmatpush1.xpose.msra.mxu0 0.0
      %808 = vmatprep.subr.mxu0 0.0
      %809 = vmatpush1.xpose.msra.mxu0 0.0
      %810 = vmatprep.subr.mxu0 0.0
      %811 = vmatpush1.xpose.msra.mxu0 0.0
      %812 = vmatprep.subr.mxu0 0.0
      %813 = vmatpush1.xpose.msra.mxu0 0.0
      %814 = vmatprep.subr.mxu0 0.0
      %815 = vmatpush1.xpose.msra.mxu0 0.0
      %816 = vmatprep.subr.mxu0 0.0
      %817 = vmatpush1.xpose.msra.mxu0 0.0
      %818 = vmatprep.subr.mxu0 0.0
      %819 = vmatpush1.xpose.msra.mxu0 0.0
      %820 = vmatprep.subr.mxu0 0.0
      %821 = vmatpush1.xpose.msra.mxu0 0.0
      %822 = vmatprep.subr.mxu0 0.0
      %823 = vmatpush1.xpose.msra.mxu0 0.0
      %824 = vmatprep.subr.mxu0 0.0
      %825 = vmatpush1.xpose.msra.mxu0 0.0
      %826 = vmatprep.subr.mxu0 0.0
      %827 = vmatpush1.xpose.msra.mxu0 0.0
      %828 = vmatprep.subr.mxu0 0.0
      %829 = vmatpush1.xpose.msra.mxu0 0.0
      %830 = vmatprep.subr.mxu0 0.0
      %831 = vmatpush1.xpose.msra.mxu0 0.0
      %832 = vmatprep.subr.mxu0 0.0
      %833 = vmatpush1.xpose.msra.mxu0 0.0
      %834 = vmatprep.subr.mxu0 0.0
      %835 = vmatpush1.xpose.msra.mxu0 0.0
      %836 = vmatprep.subr.mxu0 0.0
      %837 = vmatpush1.xpose.msra.mxu0 0.0
      %838 = vmatprep.subr.mxu0 0.0
      %839 = vmatpush1.xpose.msra.mxu0 0.0
      %840 = vmatprep.subr.mxu0 0.0
      %841 = vmatpush1.xpose.msra.mxu0 0.0
      %842 = vmatprep.subr.mxu0 0.0
      %843 = vmatpush1.xpose.msra.mxu0 0.0
      %844 = vmatprep.subr.mxu0 0.0
      %845 = vmatpush1.xpose.msra.mxu0 0.0
      %846 = vmatprep.subr.mxu0 0.0
      %847 = vmatpush1.xpose.msra.mxu0 0.0
      %848 = vmatprep.subr.mxu0 0.0
      %849 = vmatpush1.xpose.msra.mxu0 0.0
      %850 = vmatprep.mubr.f32.mxu0 0.0
      %851 = vmatmul.mubr.f32.gmra.mrb[0].mxu0 %v778
      %v852 = vpop.f32.mrb[0].mxu0
      %v853 = vadd.f32 0.0, %v852
      %v854 = vpop.f32.mrb[0].mxu0
      %855 = vmatprep.mubr.f32.mxu0 0.0
      %856 = vmatmul.mubr.f32.gmra.mrb[0].mxu0 %v780
      %v857 = vpop.f32.mrb[0].mxu0
      %v858 = vadd.f32 0.0, %v857
      %v859 = vpop.f32.mrb[0].mxu0
      %860 = vdwg.mxu0
      %v861 = vmul.f32 %v853, 0.17677669
      %v862 = vmul.f32 %v858, 0.17677669
      %v863 = vsel %vm260, %v861, -inf
      %864 = vmax.xlane.f32.xlu0 %v863
      %v865 = vpop.xlane.xlu0 %864
      %v866 = vsel %vm260, %v862, -inf
      %867 = vmax.xlane.f32.xlu0 %v866
      %v868 = vpop.xlane.xlu0 %867
      %v869 = vsub.f32 %v861, %v865
      %v870 = vsub.f32 %v862, %v868
      %v871 = vmul.f32 %v869, 1.442695
      %v872 = vpow.pop %v871
      %v873 = vmul.f32 %v870, 1.442695
      %v874 = vpow.pop %v873
      %v875 = vsel %vm260, %v872, 0.0
      %876 = vadd.xlane.f32.xlu0 %v875
      %v877 = vpop.xlane.xlu0 %876
      %v878 = vsel %vm260, %v874, 0.0
      %879 = vadd.xlane.f32.xlu0 %v878
      %v880 = vpop.xlane.xlu0 %879
      %v881 = vrcp.pop %v877
      %v882 = vrcp.pop %v880
      %v883 = vmul.f32 %v872, %v881
      %v884 = vmul.f32 %v874, %v882
      %885 = vrot.lane.b32.xlu0 %v167, 32
      %v886 = vpop.permute.xlu0 %885
      %887 = vrot.lane.b32.xlu0 %v169, 32
      %v888 = vpop.permute.xlu0 %887
      %v892 = vsel %vm260, %v883, 0
      %v895 = vsel %vm260, %v884, 0
      %897 = vmatprep.subr.mxu0 0.0
      %898 = vmatpush1.msra.mxu0 %v886
      %899 = vmatprep.subr.mxu0 0.0
      %900 = vmatpush1.msra.mxu0 %v888
      %901 = vmatprep.subr.mxu0 0.0
      %902 = vmatpush1.msra.mxu0 0.0
      %903 = vmatprep.subr.mxu0 0.0
      %904 = vmatpush1.msra.mxu0 0.0
      %905 = vmatprep.subr.mxu0 0.0
      %906 = vmatpush1.msra.mxu0 0.0
      %907 = vmatprep.subr.mxu0 0.0
      %908 = vmatpush1.msra.mxu0 0.0
      %909 = vmatprep.subr.mxu0 0.0
      %910 = vmatpush1.msra.mxu0 0.0
      %911 = vmatprep.subr.mxu0 0.0
      %912 = vmatpush1.msra.mxu0 0.0
      %913 = vmatprep.subr.mxu0 0.0
      %914 = vmatpush1.msra.mxu0 0.0
      %915 = vmatprep.subr.mxu0 0.0
      %916 = vmatpush1.msra.mxu0 0.0
      %917 = vmatprep.subr.mxu0 0.0
      %918 = vmatpush1.msra.mxu0 0.0
      %919 = vmatprep.subr.mxu0 0.0
      %920 = vmatpush1.msra.mxu0 0.0
      %921 = vmatprep.subr.mxu0 0.0
      %922 = vmatpush1.msra.mxu0 0.0
      %923 = vmatprep.subr.mxu0 0.0
      %924 = vmatpush1.msra.mxu0 0.0
      %925 = vmatprep.subr.mxu0 0.0
      %926 = vmatpush1.msra.mxu0 0.0
      %927 = vmatprep.subr.mxu0 0.0
      %928 = vmatpush1.msra.mxu0 0.0
      %929 = vmatprep.subr.mxu0 0.0
      %930 = vmatpush1.msra.mxu0 0.0
      %931 = vmatprep.subr.mxu0 0.0
      %932 = vmatpush1.msra.mxu0 0.0
      %933 = vmatprep.subr.mxu0 0.0
      %934 = vmatpush1.msra.mxu0 0.0
      %935 = vmatprep.subr.mxu0 0.0
      %936 = vmatpush1.msra.mxu0 0.0
      %937 = vmatprep.subr.mxu0 0.0
      %938 = vmatpush1.msra.mxu0 0.0
      %939 = vmatprep.subr.mxu0 0.0
      %940 = vmatpush1.msra.mxu0 0.0
      %941 = vmatprep.subr.mxu0 0.0
      %942 = vmatpush1.msra.mxu0 0.0
      %943 = vmatprep.subr.mxu0 0.0
      %944 = vmatpush1.msra.mxu0 0.0
      %945 = vmatprep.subr.mxu0 0.0
      %946 = vmatpush1.msra.mxu0 0.0
      %947 = vmatprep.subr.mxu0 0.0
      %948 = vmatpush1.msra.mxu0 0.0
      %949 = vmatprep.subr.mxu0 0.0
      %950 = vmatpush1.msra.mxu0 0.0
      %951 = vmatprep.subr.mxu0 0.0
      %952 = vmatpush1.msra.mxu0 0.0
      %953 = vmatprep.subr.mxu0 0.0
      %954 = vmatpush1.msra.mxu0 0.0
      %955 = vmatprep.subr.mxu0 0.0
      %956 = vmatpush1.msra.mxu0 0.0
      %957 = vmatprep.subr.mxu0 0.0
      %958 = vmatpush1.msra.mxu0 0.0
      %959 = vmatprep.subr.mxu0 0.0
      %960 = vmatpush1.msra.mxu0 0.0
      %961 = vmatprep.mubr.f32.mxu0 0.0
      %962 = vmatmul.mubr.f32.gmra.mrb[0].mxu0 %v892
      %v963 = vpop.f32.mrb[0].mxu0
      %v964 = vadd.f32 0.0, %v963
      %v965 = vpop.f32.mrb[0].mxu0
      %966 = vmatprep.mubr.f32.mxu0 0.0
      %967 = vmatmul.mubr.f32.gmra.mrb[0].mxu0 %v895
      %v968 = vpop.f32.mrb[0].mxu0
      %v969 = vadd.f32 0.0, %v968
      %v970 = vpop.f32.mrb[0].mxu0
      %971 = vdwg.mxu0
      %974 = vrot.lane.b32.xlu0 %v560, 32
      %v975 = vpop.permute.xlu0 %974
      %976 = vrot.lane.b32.xlu0 %v565, 32
      %v977 = vpop.permute.xlu0 %976
      %982 = vrot.lane.b32.xlu0 %v762, 64
      %v983 = vpop.permute.xlu0 %982
      %984 = vrot.lane.b32.xlu0 %v767, 64
      %v985 = vpop.permute.xlu0 %984
      %990 = vrot.lane.b32.xlu0 %v964, 96
      %v991 = vpop.permute.xlu0 %990
      %992 = vrot.lane.b32.xlu0 %v969, 96
      %v993 = vpop.permute.xlu0 %992
      %v996 = vsel %vm170, %v356, %v975
      %v997 = vsel %vm170, %v361, %v977
      %vm998 = vcmask 523264
      %v999 = vsel %vm998, %v996, %v983
      %v1000 = vsel %vm998, %v997, %v985
      %vm1001 = vcmask 785408
      %v1002 = vsel %vm1001, %v999, %v991
      %v1003 = vsel %vm1001, %v1000, %v993
      %1004 = vst [vmem:[%s163] sm:$0xff] %v1002
      %1005 = vst [vmem:[%s163 + $0x8] sm:$0xff] %v1003
      %p1006 = scmp.lt.s32.totalorder %s13, 1
      %s1007 = scalar_select %p1006, %s13, 1
      %s1008 = smul.addr %s1007, 2
      %s1009 = smul.addr %s1008, 8
      %s1010 = scalar_lea.vmem %s2, %s1009
      // Predicated region
      $region29: #{transformer_forward.30} parent=27 // pred_check
        %p1011 = pneg %p83
      $region30: #{transformer_forward.30} parent=27 // pred_check_branch
        %1013 = sbr.rel (%p1011) target = $region32
      $region31: #{transformer_forward.30} parent=27 // pred_region
        _
      $region32: #{transformer_forward.30} parent=27 // pred_fallthru
        _
    $region28: #{transformer_forward.30} parent=5 // pred_fallthru
      _
    %p1014 = scmp.le.s32.totalorder 2, %s8
    // Predicated region
    $region33: #{transformer_forward.30} parent=5 // pred_check
      %p1015 = pneg %p1014
    $region34: #{transformer_forward.30} parent=5 // pred_check_branch
      %1017 = sbr.rel (%p1015) target = $region36
    $region35: #{transformer_forward.30} parent=5 // pred_region
      %s1018 = ssub.s32 %s8, 2
      // Predicated region
      $region37: #{transformer_forward.30} parent=35 // pred_check
        %p1019 = pneg %p89
      $region38: #{transformer_forward.30} parent=35 // pred_check_branch
        %1021 = sbr.rel (%p1019) target = $region40
      $region39: #{transformer_forward.30} parent=35 // pred_region
        %p1022 = scmp.lt.s32.totalorder %s14, 1
        %s1023 = scalar_select %p1022, %s14, 1
        %s1024 = smul.addr %s1023, 2
        %s1025 = smul.addr %s1024, 8
        %s1026 = scalar_lea.vmem %s2, %s1025
      $region40: #{transformer_forward.30} parent=35 // pred_fallthru
        _
    $region36: #{transformer_forward.30} parent=5 // pred_fallthru
      _
  $region6: #{transformer_forward.30} parent=0 // loop_footer
    %s12 = sadd.s32 1, %s8
  $region7: #{transformer_forward.30} parent=0 // loop_footer_branch
    %7 = sbr.rel target = $region3
  $region8: #{transformer_forward.30} parent=0 // loop_exit
    _

// kernel: transformer_forward.43
$region0: #{transformer_forward.43}
  #allocation0 [shape = 'u32[]', space=smem, size = 0x4, offset = 0x4, fixed_abs, tag = 'smem constant byte address 0x4 - core index']
  #allocation1 [shape = 'u32[144,128]{1,0:T(1,128)}', space=vmem, size = 0x12000, scoped, tag = 'internal scratch']
  #allocation2 [shape = 'f32[32,256]{1,0:T(8,128)}', space=vmem, size = 0x8000, scoped, tag = 'scratch operand']
  %s0 = inlined_call_operand.vmem [shape: f32[32,128], index: 0, kind: input, shape index: {}]
  %s1 = inlined_call_operand.vmem [shape: f32[128,256], index: 1, kind: input, shape index: {}]
  %s2 = inlined_call_operand.vmem [shape: f32[1,256], index: 2, kind: input, shape index: {}]
  %s3 = inlined_call_operand.vmem [shape: f32[32,256], index: 3, kind: output, shape index: {}]
  %s4 = sld [smem:[#allocation0]]
  $region30: #{transformer_forward.43} parent=0
    _
  %s6 = ssub.s32 1, %s4
  %s7 = scalar_select 0, %s6, %s4
  // Predicated region
  $region2: #{transformer_forward.43} parent=0 // pred_check
    _
  $region3: #{transformer_forward.43} parent=0 // pred_check_branch
    %9 = sbr.rel (0) target = $region5
  $region4: #{transformer_forward.43} parent=0 // pred_region
    _
  $region5: #{transformer_forward.43} parent=0 // pred_fallthru
    _
  // Predicated region
  $region6: #{transformer_forward.43} parent=0 // pred_check
    _
  $region7: #{transformer_forward.43} parent=0 // pred_check_branch
    %11 = sbr.rel (0) target = $region9
  $region8: #{transformer_forward.43} parent=0 // pred_region
    _
  $region9: #{transformer_forward.43} parent=0 // pred_fallthru
    _
  // Predicated region
  $region10: #{transformer_forward.43} parent=0 // pred_check
    _
  $region11: #{transformer_forward.43} parent=0 // pred_check_branch
    %13 = sbr.rel (0) target = $region13
  $region12: #{transformer_forward.43} parent=0 // pred_region
    _
  $region13: #{transformer_forward.43} parent=0 // pred_fallthru
    _
  %p14 = scmp.eq.s32.totalorder 0, 0
  // Predicated region
  $region14: #{transformer_forward.43} parent=0 // pred_check
    %p15 = pneg %p14
  $region15: #{transformer_forward.43} parent=0 // pred_check_branch
    %17 = sbr.rel (%p15) target = $region17
  $region16: #{transformer_forward.43} parent=0 // pred_region
    %18 = vst [vmem:[#allocation2] sm:$0xff] 0.0
    %19 = vst [vmem:[#allocation2 + $0x8] sm:$0xff] 0.0
    %20 = vst [vmem:[#allocation2 + $0x10] sm:$0xff] 0.0
    %21 = vst [vmem:[#allocation2 + $0x18] sm:$0xff] 0.0
    %22 = vst [vmem:[#allocation2 + $0x20] sm:$0xff] 0.0
    %23 = vst [vmem:[#allocation2 + $0x28] sm:$0xff] 0.0
    %24 = vst [vmem:[#allocation2 + $0x30] sm:$0xff] 0.0
    %25 = vst [vmem:[#allocation2 + $0x38] sm:$0xff] 0.0
  $region17: #{transformer_forward.43} parent=0 // pred_fallthru
    _
  %v26 = vld [vmem:[#allocation2] sm:$0xff]
  %v27 = vld [vmem:[#allocation2 + $0x8] sm:$0xff]
  %v28 = vld [vmem:[#allocation2 + $0x10] sm:$0xff]
  %v29 = vld [vmem:[#allocation2 + $0x18] sm:$0xff]
  %v30 = vld [vmem:[#allocation2 + $0x20] sm:$0xff]
  %v31 = vld [vmem:[#allocation2 + $0x28] sm:$0xff]
  %v32 = vld [vmem:[#allocation2 + $0x30] sm:$0xff]
  %v33 = vld [vmem:[#allocation2 + $0x38] sm:$0xff]
  %v34 = vld [vmem:[%s0] sm:$0xff]
  %v35 = vld [vmem:[%s0 + $0x8] sm:$0xff]
  %v36 = vld [vmem:[%s0 + $0x10] sm:$0xff]
  %v37 = vld [vmem:[%s0 + $0x18] sm:$0xff]
  %v38 = vld [vmem:[%s1] sm:$0xff]
  %v39 = vld [vmem:[%s1 + $0x8] sm:$0xff]
  %v40 = vld [vmem:[%s1 + $0x10] sm:$0xff]
  %v41 = vld [vmem:[%s1 + $0x18] sm:$0xff]
  %v42 = vld [vmem:[%s1 + $0x20] sm:$0xff]
  %v43 = vld [vmem:[%s1 + $0x28] sm:$0xff]
  %v44 = vld [vmem:[%s1 + $0x30] sm:$0xff]
  %v45 = vld [vmem:[%s1 + $0x38] sm:$0xff]
  %v46 = vld [vmem:[%s1 + $0x40] sm:$0xff]
  %v47 = vld [vmem:[%s1 + $0x48] sm:$0xff]
  %v48 = vld [vmem:[%s1 + $0x50] sm:$0xff]
  %v49 = vld [vmem:[%s1 + $0x58] sm:$0xff]
  %v50 = vld [vmem:[%s1 + $0x60] sm:$0xff]
  %v51 = vld [vmem:[%s1 + $0x68] sm:$0xff]
  %v52 = vld [vmem:[%s1 + $0x70] sm:$0xff]
  %v53 = vld [vmem:[%s1 + $0x78] sm:$0xff]
  %v54 = vld [vmem:[%s1 + $0x80] sm:$0xff]
  %v55 = vld [vmem:[%s1 + $0x88] sm:$0xff]
  %v56 = vld [vmem:[%s1 + $0x90] sm:$0xff]
  %v57 = vld [vmem:[%s1 + $0x98] sm:$0xff]
  %v58 = vld [vmem:[%s1 + $0xa0] sm:$0xff]
  %v59 = vld [vmem:[%s1 + $0xa8] sm:$0xff]
  %v60 = vld [vmem:[%s1 + $0xb0] sm:$0xff]
  %v61 = vld [vmem:[%s1 + $0xb8] sm:$0xff]
  %v62 = vld [vmem:[%s1 + $0xc0] sm:$0xff]
  %v63 = vld [vmem:[%s1 + $0xc8] sm:$0xff]
  %v64 = vld [vmem:[%s1 + $0xd0] sm:$0xff]
  %v65 = vld [vmem:[%s1 + $0xd8] sm:$0xff]
  %v66 = vld [vmem:[%s1 + $0xe0] sm:$0xff]
  %v67 = vld [vmem:[%s1 + $0xe8] sm:$0xff]
  %v68 = vld [vmem:[%s1 + $0xf0] sm:$0xff]
  %v69 = vld [vmem:[%s1 + $0xf8] sm:$0xff]
  %70 = vmatprep.subr.mxu0 %v39
  %71 = vmatpush1.msra.mxu0 %v38
  %72 = vmatprep.subr.mxu0 %v41
  %73 = vmatpush1.msra.mxu0 %v40
  %74 = vmatprep.subr.mxu0 %v43
  %75 = vmatpush1.msra.mxu0 %v42
  %76 = vmatprep.subr.mxu0 %v45
  %77 = vmatpush1.msra.mxu0 %v44
  %78 = vmatprep.subr.mxu0 %v47
  %79 = vmatpush1.msra.mxu0 %v46
  %80 = vmatprep.subr.mxu0 %v49
  %81 = vmatpush1.msra.mxu0 %v48
  %82 = vmatprep.subr.mxu0 %v51
  %83 = vmatpush1.msra.mxu0 %v50
  %84 = vmatprep.subr.mxu0 %v53
  %85 = vmatpush1.msra.mxu0 %v52
  %86 = vmatprep.subr.mxu0 %v55
  %87 = vmatpush1.msra.mxu0 %v54
  %88 = vmatprep.subr.mxu0 %v57
  %89 = vmatpush1.msra.mxu0 %v56
  %90 = vmatprep.subr.mxu0 %v59
  %91 = vmatpush1.msra.mxu0 %v58
  %92 = vmatprep.subr.mxu0 %v61
  %93 = vmatpush1.msra.mxu0 %v60
  %94 = vmatprep.subr.mxu0 %v63
  %95 = vmatpush1.msra.mxu0 %v62
  %96 = vmatprep.subr.mxu0 %v65
  %97 = vmatpush1.msra.mxu0 %v64
  %98 = vmatprep.subr.mxu0 %v67
  %99 = vmatpush1.msra.mxu0 %v66
  %100 = vmatprep.subr.mxu0 %v69
  %101 = vmatpush1.msra.mxu0 %v68
  %102 = vmatprep.subr.mxu0 0.0
  %103 = vmatpush1.msra.mxu0 0.0
  %104 = vmatprep.subr.mxu0 0.0
  %105 = vmatpush1.msra.mxu0 0.0
  %106 = vmatprep.subr.mxu0 0.0
  %107 = vmatpush1.msra.mxu0 0.0
  %108 = vmatprep.subr.mxu0 0.0
  %109 = vmatpush1.msra.mxu0 0.0
  %110 = vmatprep.subr.mxu0 0.0
  %111 = vmatpush1.msra.mxu0 0.0
  %112 = vmatprep.subr.mxu0 0.0
  %113 = vmatpush1.msra.mxu0 0.0
  %114 = vmatprep.subr.mxu0 0.0
  %115 = vmatpush1.msra.mxu0 0.0
  %116 = vmatprep.subr.mxu0 0.0
  %117 = vmatpush1.msra.mxu0 0.0
  %118 = vmatprep.subr.mxu0 0.0
  %119 = vmatpush1.msra.mxu0 0.0
  %120 = vmatprep.subr.mxu0 0.0
  %121 = vmatpush1.msra.mxu0 0.0
  %122 = vmatprep.subr.mxu0 0.0
  %123 = vmatpush1.msra.mxu0 0.0
  %124 = vmatprep.subr.mxu0 0.0
  %125 = vmatpush1.msra.mxu0 0.0
  %126 = vmatprep.subr.mxu0 0.0
  %127 = vmatpush1.msra.mxu0 0.0
  %128 = vmatprep.subr.mxu0 0.0
  %129 = vmatpush1.msra.mxu0 0.0
  %130 = vmatprep.subr.mxu0 0.0
  %131 = vmatpush1.msra.mxu0 0.0
  %132 = vmatprep.subr.mxu0 0.0
  %133 = vmatpush1.msra.mxu0 0.0
  %134 = vmatprep.mubr.f32.mxu0 0.0
  %135 = vmatmul.mubr.f32.gmra.mrb[0].mxu0 %v34
  %v136 = vpop.f32.mrb[0].mxu0
  %v137 = vadd.f32 0.0, %v136
  %v138 = vpop.f32.mrb[0].mxu0
  %v139 = vadd.f32 0.0, %v138
  %140 = vmatprep.mubr.f32.mxu0 0.0
  %141 = vmatmul.mubr.f32.gmra.mrb[0].mxu0 %v35
  %v142 = vpop.f32.mrb[0].mxu0
  %v143 = vadd.f32 0.0, %v142
  %v144 = vpop.f32.mrb[0].mxu0
  %v145 = vadd.f32 0.0, %v144
  %146 = vmatprep.mubr.f32.mxu0 0.0
  %147 = vmatmul.mubr.f32.gmra.mrb[0].mxu0 %v36
  %v148 = vpop.f32.mrb[0].mxu0
  %v149 = vadd.f32 0.0, %v148
  %v150 = vpop.f32.mrb[0].mxu0
  %v151 = vadd.f32 0.0, %v150
  %152 = vmatprep.mubr.f32.mxu0 0.0
  %153 = vmatmul.mubr.f32.gmra.mrb[0].mxu0 %v37
  %v154 = vpop.f32.mrb[0].mxu0
  %v155 = vadd.f32 0.0, %v154
  %v156 = vpop.f32.mrb[0].mxu0
  %v157 = vadd.f32 0.0, %v156
  %158 = vdwg.mxu0
  %v159 = vadd.f32 %v26, %v137
  %v160 = vadd.f32 %v27, %v139
  %v161 = vadd.f32 %v28, %v143
  %v162 = vadd.f32 %v29, %v145
  %v163 = vadd.f32 %v30, %v149
  %v164 = vadd.f32 %v31, %v151
  %v165 = vadd.f32 %v32, %v155
  %v166 = vadd.f32 %v33, %v157
  %167 = vst [vmem:[#allocation2] sm:$0xff] %v159
  %168 = vst [vmem:[#allocation2 + $0x8] sm:$0xff] %v160
  %169 = vst [vmem:[#allocation2 + $0x10] sm:$0xff] %v161
  %170 = vst [vmem:[#allocation2 + $0x18] sm:$0xff] %v162
  %171 = vst [vmem:[#allocation2 + $0x20] sm:$0xff] %v163
  %172 = vst [vmem:[#allocation2 + $0x28] sm:$0xff] %v164
  %173 = vst [vmem:[#allocation2 + $0x30] sm:$0xff] %v165
  %174 = vst [vmem:[#allocation2 + $0x38] sm:$0xff] %v166
  // Predicated region
  $region18: #{transformer_forward.43} parent=0 // pred_check
    %p175 = pneg %p14
  $region19: #{transformer_forward.43} parent=0 // pred_check_branch
    %177 = sbr.rel (%p175) target = $region21
  $region20: #{transformer_forward.43} parent=0 // pred_region
    %v178 = vld [vmem:[#allocation2] sm:$0xff]
    %v179 = vld [vmem:[#allocation2 + $0x8] sm:$0xff]
    %v180 = vld [vmem:[#allocation2 + $0x10] sm:$0xff]
    %v181 = vld [vmem:[#allocation2 + $0x18] sm:$0xff]
    %v182 = vld [vmem:[#allocation2 + $0x20] sm:$0xff]
    %v183 = vld [vmem:[#allocation2 + $0x28] sm:$0xff]
    %v184 = vld [vmem:[#allocation2 + $0x30] sm:$0xff]
    %v185 = vld [vmem:[#allocation2 + $0x38] sm:$0xff]
    %v186 = vld [vmem:[%s2] sm:$0x3]
    %v188 = vlaneseq
    %v189 = vshrl.u32 %v188, 7
    %v190 = vsub.s32 0, %v189
    %v191 = vrot.slane %v186, %v190
    %v192 = vlaneseq
    %v193 = vshrl.u32 %v192, 7
    %v194 = vsub.s32 1, %v193
    %v195 = vrot.slane %v186, %v194
    %v198 = vadd.f32 %v178, %v191
    %v199 = vadd.f32 %v179, %v195
    %v200 = vadd.f32 %v180, %v191
    %v201 = vadd.f32 %v181, %v195
    %v202 = vadd.f32 %v182, %v191
    %v203 = vadd.f32 %v183, %v195
    %v204 = vadd.f32 %v184, %v191
    %v205 = vadd.f32 %v185, %v195
    %206 = vst [vmem:[%s3] sm:$0xff] %v198
    %207 = vst [vmem:[%s3 + $0x8] sm:$0xff] %v199
    %208 = vst [vmem:[%s3 + $0x10] sm:$0xff] %v200
    %209 = vst [vmem:[%s3 + $0x18] sm:$0xff] %v201
    %210 = vst [vmem:[%s3 + $0x20] sm:$0xff] %v202
    %211 = vst [vmem:[%s3 + $0x28] sm:$0xff] %v203
    %212 = vst [vmem:[%s3 + $0x30] sm:$0xff] %v204
    %213 = vst [vmem:[%s3 + $0x38] sm:$0xff] %v205
  $region21: #{transformer_forward.43} parent=0 // pred_fallthru
    _
  // Predicated region
  $region22: #{transformer_forward.43} parent=0 // pred_check
    _
  $region23: #{transformer_forward.43} parent=0 // pred_check_branch
    %215 = sbr.rel (0) target = $region25
  $region24: #{transformer_forward.43} parent=0 // pred_region
    _
  $region25: #{transformer_forward.43} parent=0 // pred_fallthru
    _
  // Predicated region
  $region26: #{transformer_forward.43} parent=0 // pred_check
    _
  $region27: #{transformer_forward.43} parent=0 // pred_check_branch
    %217 = sbr.rel (0) target = $region29
  $region28: #{transformer_forward.43} parent=0 // pred_region
    _
  $region29: #{transformer_forward.43} parent=0 // pred_fallthru
    _

// kernel: transformer_forward.57
$region0: #{transformer_forward.57}
  #allocation0 [shape = 'u32[]', space=smem, size = 0x4, offset = 0x4, fixed_abs, tag = 'smem constant byte address 0x4 - core index']
  #allocation1 [shape = 'u32[144,128]{1,0:T(1,128)}', space=vmem, size = 0x12000, scoped, tag = 'internal scratch']
  #allocation2 [shape = 'f32[32,256]{1,0:T(8,128)}', space=vmem, size = 0x8000, scoped, tag = 'scratch operand']
  %s0 = inlined_call_operand.vmem [shape: f32[32,128], index: 0, kind: input, shape index: {}]
  %s1 = inlined_call_operand.vmem [shape: f32[128,256], index: 1, kind: input, shape index: {}]
  %s2 = inlined_call_operand.vmem [shape: f32[1,256], index: 2, kind: input, shape index: {}]
  %s3 = inlined_call_operand.hbm [shape: f32[32,256], index: 3, kind: output, shape index: {}]
  %s4 = sld [smem:[#allocation0]]
  $region30: #{transformer_forward.57} parent=0
    _
  %s6 = ssub.s32 1, %s4
  %s7 = scalar_select 0, %s6, %s4
  $region1: #{transformer_forward.57} parent=0
    #allocation3 [shape = 'u8[32768]{0}', space=vmem, size = 0x8000, scoped, tag = 'output window, operand 0, single buffered']
    #allocation4 [shape = 's32[1]{0}', space=sflag, size = 0x4, scoped, tag = 'scoped memory for transformer_forward.57']
    %8 = vsyncpa [#allocation4], 0
    // Predicated region
    $region2: #{transformer_forward.57} parent=1 // pred_check
      _
    $region3: #{transformer_forward.57} parent=1 // pred_check_branch
      %10 = sbr.rel (0) target = $region5
    $region4: #{transformer_forward.57} parent=1 // pred_region
      _
    $region5: #{transformer_forward.57} parent=1 // pred_fallthru
      _
    // Predicated region
    $region6: #{transformer_forward.57} parent=1 // pred_check
      _
    $region7: #{transformer_forward.57} parent=1 // pred_check_branch
      %12 = sbr.rel (0) target = $region9
    $region8: #{transformer_forward.57} parent=1 // pred_region
      _
    $region9: #{transformer_forward.57} parent=1 // pred_fallthru
      _
    // Predicated region
    $region10: #{transformer_forward.57} parent=1 // pred_check
      _
    $region11: #{transformer_forward.57} parent=1 // pred_check_branch
      %14 = sbr.rel (0) target = $region13
    $region12: #{transformer_forward.57} parent=1 // pred_region
      _
    $region13: #{transformer_forward.57} parent=1 // pred_fallthru
      _
    %p15 = scmp.eq.s32.totalorder 0, 0
    // Predicated region
    $region14: #{transformer_forward.57} parent=1 // pred_check
      %p16 = pneg %p15
    $region15: #{transformer_forward.57} parent=1 // pred_check_branch
      %18 = sbr.rel (%p16) target = $region17
    $region16: #{transformer_forward.57} parent=1 // pred_region
      %19 = vst [vmem:[#allocation2] sm:$0xff] 0.0
      %20 = vst [vmem:[#allocation2 + $0x8] sm:$0xff] 0.0
      %21 = vst [vmem:[#allocation2 + $0x10] sm:$0xff] 0.0
      %22 = vst [vmem:[#allocation2 + $0x18] sm:$0xff] 0.0
      %23 = vst [vmem:[#allocation2 + $0x20] sm:$0xff] 0.0
      %24 = vst [vmem:[#allocation2 + $0x28] sm:$0xff] 0.0
      %25 = vst [vmem:[#allocation2 + $0x30] sm:$0xff] 0.0
      %26 = vst [vmem:[#allocation2 + $0x38] sm:$0xff] 0.0
    $region17: #{transformer_forward.57} parent=1 // pred_fallthru
      _
    %v27 = vld [vmem:[#allocation2] sm:$0xff]
    %v28 = vld [vmem:[#allocation2 + $0x8] sm:$0xff]
    %v29 = vld [vmem:[#allocation2 + $0x10] sm:$0xff]
    %v30 = vld [vmem:[#allocation2 + $0x18] sm:$0xff]
    %v31 = vld [vmem:[#allocation2 + $0x20] sm:$0xff]
    %v32 = vld [vmem:[#allocation2 + $0x28] sm:$0xff]
    %v33 = vld [vmem:[#allocation2 + $0x30] sm:$0xff]
    %v34 = vld [vmem:[#allocation2 + $0x38] sm:$0xff]
    %v35 = vld [vmem:[%s0] sm:$0xff]
    %v36 = vld [vmem:[%s0 + $0x8] sm:$0xff]
    %v37 = vld [vmem:[%s0 + $0x10] sm:$0xff]
    %v38 = vld [vmem:[%s0 + $0x18] sm:$0xff]
    %v39 = vld [vmem:[%s1] sm:$0xff]
    %v40 = vld [vmem:[%s1 + $0x8] sm:$0xff]
    %v41 = vld [vmem:[%s1 + $0x10] sm:$0xff]
    %v42 = vld [vmem:[%s1 + $0x18] sm:$0xff]
    %v43 = vld [vmem:[%s1 + $0x20] sm:$0xff]
    %v44 = vld [vmem:[%s1 + $0x28] sm:$0xff]
    %v45 = vld [vmem:[%s1 + $0x30] sm:$0xff]
    %v46 = vld [vmem:[%s1 + $0x38] sm:$0xff]
    %v47 = vld [vmem:[%s1 + $0x40] sm:$0xff]
    %v48 = vld [vmem:[%s1 + $0x48] sm:$0xff]
    %v49 = vld [vmem:[%s1 + $0x50] sm:$0xff]
    %v50 = vld [vmem:[%s1 + $0x58] sm:$0xff]
    %v51 = vld [vmem:[%s1 + $0x60] sm:$0xff]
    %v52 = vld [vmem:[%s1 + $0x68] sm:$0xff]
    %v53 = vld [vmem:[%s1 + $0x70] sm:$0xff]
    %v54 = vld [vmem:[%s1 + $0x78] sm:$0xff]
    %v55 = vld [vmem:[%s1 + $0x80] sm:$0xff]
    %v56 = vld [vmem:[%s1 + $0x88] sm:$0xff]
    %v57 = vld [vmem:[%s1 + $0x90] sm:$0xff]
    %v58 = vld [vmem:[%s1 + $0x98] sm:$0xff]
    %v59 = vld [vmem:[%s1 + $0xa0] sm:$0xff]
    %v60 = vld [vmem:[%s1 + $0xa8] sm:$0xff]
    %v61 = vld [vmem:[%s1 + $0xb0] sm:$0xff]
    %v62 = vld [vmem:[%s1 + $0xb8] sm:$0xff]
    %v63 = vld [vmem:[%s1 + $0xc0] sm:$0xff]
    %v64 = vld [vmem:[%s1 + $0xc8] sm:$0xff]
    %v65 = vld [vmem:[%s1 + $0xd0] sm:$0xff]
    %v66 = vld [vmem:[%s1 + $0xd8] sm:$0xff]
    %v67 = vld [vmem:[%s1 + $0xe0] sm:$0xff]
    %v68 = vld [vmem:[%s1 + $0xe8] sm:$0xff]
    %v69 = vld [vmem:[%s1 + $0xf0] sm:$0xff]
    %v70 = vld [vmem:[%s1 + $0xf8] sm:$0xff]
    %71 = vmatprep.subr.mxu0 %v40
    %72 = vmatpush1.msra.mxu0 %v39
    %73 = vmatprep.subr.mxu0 %v42
    %74 = vmatpush1.msra.mxu0 %v41
    %75 = vmatprep.subr.mxu0 %v44
    %76 = vmatpush1.msra.mxu0 %v43
    %77 = vmatprep.subr.mxu0 %v46
    %78 = vmatpush1.msra.mxu0 %v45
    %79 = vmatprep.subr.mxu0 %v48
    %80 = vmatpush1.msra.mxu0 %v47
    %81 = vmatprep.subr.mxu0 %v50
    %82 = vmatpush1.msra.mxu0 %v49
    %83 = vmatprep.subr.mxu0 %v52
    %84 = vmatpush1.msra.mxu0 %v51
    %85 = vmatprep.subr.mxu0 %v54
    %86 = vmatpush1.msra.mxu0 %v53
    %87 = vmatprep.subr.mxu0 %v56
    %88 = vmatpush1.msra.mxu0 %v55
    %89 = vmatprep.subr.mxu0 %v58
    %90 = vmatpush1.msra.mxu0 %v57
    %91 = vmatprep.subr.mxu0 %v60
    %92 = vmatpush1.msra.mxu0 %v59
    %93 = vmatprep.subr.mxu0 %v62
    %94 = vmatpush1.msra.mxu0 %v61
    %95 = vmatprep.subr.mxu0 %v64
    %96 = vmatpush1.msra.mxu0 %v63
    %97 = vmatprep.subr.mxu0 %v66
    %98 = vmatpush1.msra.mxu0 %v65
    %99 = vmatprep.subr.mxu0 %v68
    %100 = vmatpush1.msra.mxu0 %v67
    %101 = vmatprep.subr.mxu0 %v70
    %102 = vmatpush1.msra.mxu0 %v69
    %103 = vmatprep.subr.mxu0 0.0
    %104 = vmatpush1.msra.mxu0 0.0
    %105 = vmatprep.subr.mxu0 0.0
    %106 = vmatpush1.msra.mxu0 0.0
    %107 = vmatprep.subr.mxu0 0.0
    %108 = vmatpush1.msra.mxu0 0.0
    %109 = vmatprep.subr.mxu0 0.0
    %110 = vmatpush1.msra.mxu0 0.0
    %111 = vmatprep.subr.mxu0 0.0
    %112 = vmatpush1.msra.mxu0 0.0
    %113 = vmatprep.subr.mxu0 0.0
    %114 = vmatpush1.msra.mxu0 0.0
    %115 = vmatprep.subr.mxu0 0.0
    %116 = vmatpush1.msra.mxu0 0.0
    %117 = vmatprep.subr.mxu0 0.0
    %118 = vmatpush1.msra.mxu0 0.0
    %119 = vmatprep.subr.mxu0 0.0
    %120 = vmatpush1.msra.mxu0 0.0
    %121 = vmatprep.subr.mxu0 0.0
    %122 = vmatpush1.msra.mxu0 0.0
    %123 = vmatprep.subr.mxu0 0.0
    %124 = vmatpush1.msra.mxu0 0.0
    %125 = vmatprep.subr.mxu0 0.0
    %126 = vmatpush1.msra.mxu0 0.0
    %127 = vmatprep.subr.mxu0 0.0
    %128 = vmatpush1.msra.mxu0 0.0
    %129 = vmatprep.subr.mxu0 0.0
    %130 = vmatpush1.msra.mxu0 0.0
    %131 = vmatprep.subr.mxu0 0.0
    %132 = vmatpush1.msra.mxu0 0.0
    %133 = vmatprep.subr.mxu0 0.0
    %134 = vmatpush1.msra.mxu0 0.0
    %135 = vmatprep.mubr.f32.mxu0 0.0
    %136 = vmatmul.mubr.f32.gmra.mrb[0].mxu0 %v35
    %v137 = vpop.f32.mrb[0].mxu0
    %v138 = vadd.f32 0.0, %v137
    %v139 = vpop.f32.mrb[0].mxu0
    %v140 = vadd.f32 0.0, %v139
    %141 = vmatprep.mubr.f32.mxu0 0.0
    %142 = vmatmul.mubr.f32.gmra.mrb[0].mxu0 %v36
    %v143 = vpop.f32.mrb[0].mxu0
    %v144 = vadd.f32 0.0, %v143
    %v145 = vpop.f32.mrb[0].mxu0
    %v146 = vadd.f32 0.0, %v145
    %147 = vmatprep.mubr.f32.mxu0 0.0
    %148 = vmatmul.mubr.f32.gmra.mrb[0].mxu0 %v37
    %v149 = vpop.f32.mrb[0].mxu0
    %v150 = vadd.f32 0.0, %v149
    %v151 = vpop.f32.mrb[0].mxu0
    %v152 = vadd.f32 0.0, %v151
    %153 = vmatprep.mubr.f32.mxu0 0.0
    %154 = vmatmul.mubr.f32.gmra.mrb[0].mxu0 %v38
    %v155 = vpop.f32.mrb[0].mxu0
    %v156 = vadd.f32 0.0, %v155
    %v157 = vpop.f32.mrb[0].mxu0
    %v158 = vadd.f32 0.0, %v157
    %159 = vdwg.mxu0
    %v160 = vadd.f32 %v27, %v138
    %v161 = vadd.f32 %v28, %v140
    %v162 = vadd.f32 %v29, %v144
    %v163 = vadd.f32 %v30, %v146
    %v164 = vadd.f32 %v31, %v150
    %v165 = vadd.f32 %v32, %v152
    %v166 = vadd.f32 %v33, %v156
    %v167 = vadd.f32 %v34, %v158
    %168 = vst [vmem:[#allocation2] sm:$0xff] %v160
    %169 = vst [vmem:[#allocation2 + $0x8] sm:$0xff] %v161
    %170 = vst [vmem:[#allocation2 + $0x10] sm:$0xff] %v162
    %171 = vst [vmem:[#allocation2 + $0x18] sm:$0xff] %v163
    %172 = vst [vmem:[#allocation2 + $0x20] sm:$0xff] %v164
    %173 = vst [vmem:[#allocation2 + $0x28] sm:$0xff] %v165
    %174 = vst [vmem:[#allocation2 + $0x30] sm:$0xff] %v166
    %175 = vst [vmem:[#allocation2 + $0x38] sm:$0xff] %v167
    // Predicated region
    $region18: #{transformer_forward.57} parent=1 // pred_check
      %p176 = pneg %p15
    $region19: #{transformer_forward.57} parent=1 // pred_check_branch
      %178 = sbr.rel (%p176) target = $region21
    $region20: #{transformer_forward.57} parent=1 // pred_region
      %v179 = vld [vmem:[#allocation2] sm:$0xff]
      %v180 = vld [vmem:[#allocation2 + $0x8] sm:$0xff]
      %v181 = vld [vmem:[#allocation2 + $0x10] sm:$0xff]
      %v182 = vld [vmem:[#allocation2 + $0x18] sm:$0xff]
      %v183 = vld [vmem:[#allocation2 + $0x20] sm:$0xff]
      %v184 = vld [vmem:[#allocation2 + $0x28] sm:$0xff]
      %v185 = vld [vmem:[#allocation2 + $0x30] sm:$0xff]
      %v186 = vld [vmem:[#allocation2 + $0x38] sm:$0xff]
      %v187 = vld [vmem:[%s2] sm:$0x3]
      %v189 = vlaneseq
      %v190 = vshrl.u32 %v189, 7
      %v191 = vsub.s32 0, %v190
      %v192 = vrot.slane %v187, %v191
      %v193 = vlaneseq
      %v194 = vshrl.u32 %v193, 7
      %v195 = vsub.s32 1, %v194
      %v196 = vrot.slane %v187, %v195
      %v199 = vadd.f32 %v179, %v192
      %v200 = vadd.f32 %v180, %v196
      %v201 = vadd.f32 %v181, %v192
      %v202 = vadd.f32 %v182, %v196
      %v203 = vadd.f32 %v183, %v192
      %v204 = vadd.f32 %v184, %v196
      %v205 = vadd.f32 %v185, %v192
      %v206 = vadd.f32 %v186, %v196
      %v207 = vmax.f32 %v199, %v200
      %208 = vmax.xlane.f32.xlu0 %v207
      %v209 = vpop.xlane.xlu0 %208
      %v210 = vmax.f32 %v201, %v202
      %211 = vmax.xlane.f32.xlu0 %v210
      %v212 = vpop.xlane.xlu0 %211
      %v213 = vmax.f32 %v203, %v204
      %214 = vmax.xlane.f32.xlu0 %v213
      %v215 = vpop.xlane.xlu0 %214
      %v216 = vmax.f32 %v205, %v206
      %217 = vmax.xlane.f32.xlu0 %v216
      %v218 = vpop.xlane.xlu0 %217
      %v219 = vsub.f32 %v199, %v209
      %v220 = vsub.f32 %v200, %v209
      %v221 = vsub.f32 %v201, %v212
      %v222 = vsub.f32 %v202, %v212
      %v223 = vsub.f32 %v203, %v215
      %v224 = vsub.f32 %v204, %v215
      %v225 = vsub.f32 %v205, %v218
      %v226 = vsub.f32 %v206, %v218
      %v227 = vmul.f32 %v219, 1.442695
      %v228 = vpow.pop %v227
      %v229 = vmul.f32 %v220, 1.442695
      %v230 = vpow.pop %v229
      %v231 = vmul.f32 %v221, 1.442695
      %v232 = vpow.pop %v231
      %v233 = vmul.f32 %v222, 1.442695
      %v234 = vpow.pop %v233
      %v235 = vmul.f32 %v223, 1.442695
      %v236 = vpow.pop %v235
      %v237 = vmul.f32 %v224, 1.442695
      %v238 = vpow.pop %v237
      %v239 = vmul.f32 %v225, 1.442695
      %v240 = vpow.pop %v239
      %v241 = vmul.f32 %v226, 1.442695
      %v242 = vpow.pop %v241
      %v243 = vadd.f32 %v228, %v230
      %244 = vadd.xlane.f32.xlu0 %v243
      %v245 = vpop.xlane.xlu0 %244
      %v246 = vadd.f32 %v232, %v234
      %247 = vadd.xlane.f32.xlu0 %v246
      %v248 = vpop.xlane.xlu0 %247
      %v249 = vadd.f32 %v236, %v238
      %250 = vadd.xlane.f32.xlu0 %v249
      %v251 = vpop.xlane.xlu0 %250
      %v252 = vadd.f32 %v240, %v242
      %253 = vadd.xlane.f32.xlu0 %v252
      %v254 = vpop.xlane.xlu0 %253
      %v255 = vrcp.pop %v245
      %v256 = vmul.f32 %v228, %v255
      %v257 = vmul.f32 %v230, %v255
      %v258 = vrcp.pop %v248
      %v259 = vmul.f32 %v232, %v258
      %v260 = vmul.f32 %v234, %v258
      %v261 = vrcp.pop %v251
      %v262 = vmul.f32 %v236, %v261
      %v263 = vmul.f32 %v238, %v261
      %v264 = vrcp.pop %v254
      %v265 = vmul.f32 %v240, %v264
      %v266 = vmul.f32 %v242, %v264
      %267 = vst [vmem:[#allocation3] sm:$0xff] %v256
      %268 = vst [vmem:[#allocation3 + $0x8] sm:$0xff] %v257
      %269 = vst [vmem:[#allocation3 + $0x10] sm:$0xff] %v259
      %270 = vst [vmem:[#allocation3 + $0x18] sm:$0xff] %v260
      %271 = vst [vmem:[#allocation3 + $0x20] sm:$0xff] %v262
      %272 = vst [vmem:[#allocation3 + $0x28] sm:$0xff] %v263
      %273 = vst [vmem:[#allocation3 + $0x30] sm:$0xff] %v265
      %274 = vst [vmem:[#allocation3 + $0x38] sm:$0xff] %v266
    $region21: #{transformer_forward.57} parent=1 // pred_fallthru
      _
    // Predicated region
    $region22: #{transformer_forward.57} parent=1 // pred_check
      _
    $region23: #{transformer_forward.57} parent=1 // pred_check_branch
      %276 = sbr.rel (0) target = $region25
    $region24: #{transformer_forward.57} parent=1 // pred_region
      %s278 = ssub.s32 1024, 1024
      %279 = vsyncadd [#allocation4], %s278
      %s280 = sshll.u32 [#allocation3], 4
      %s281 = int_to_ptr.vmem [resolvable:$true] %s280
      %286 = dma.vmem_to_hbm [thread:$0]  %s281, 1024, %s3, [#allocation4], 256, 256, 16
    $region25: #{transformer_forward.57} parent=1 // pred_fallthru
      _
    // Predicated region
    $region26: #{transformer_forward.57} parent=1 // pred_check
      _
    $region27: #{transformer_forward.57} parent=1 // pred_check_branch
      %288 = sbr.rel (0) target = $region29
    $region28: #{transformer_forward.57} parent=1 // pred_region
      %289 = dma.done [#allocation4], 1024
    $region29: #{transformer_forward.57} parent=1 // pred_fallthru
      _
    %290 = vsyncpa [#allocation4], 1

</llo_original>
